<compile_context>
chip_gen: v5e
topology: v5e:2x2
jax: 0.10.0
libtpu: 0.0.40
codegen_flags: <defaults>
</compile_context>

<pallas_src>
import math

import jax
import jax.numpy as jnp
from jax import lax
from jax.experimental import pallas as pl
from jax.experimental.pallas import tpu as pltpu

# ----------------------------- config (small) ------------------------------
B = 2          # batch
S = 8          # sequence length
H = 32         # hidden size (stands in for BERT_OUTPUT_SIZE=768)
NH = 4         # attention heads
DH = H // NH   # head dim
FF = 64        # feed-forward size
NLAYERS = 2    # encoder layers (stands in for 12)
VOCAB = 100
NTYPES = 2
LN_EPS = 1e-12
M = B * S
ATTN_SCALE = 1.0 / math.sqrt(DH)


# ------------------------------ helpers ------------------------------------
def _layer_norm(x, gamma, beta, eps=LN_EPS):
    """LayerNorm over last axis, all in f32. gamma/beta: [1, H]."""
    mu = jnp.mean(x, axis=-1, keepdims=True)
    var = jnp.mean((x - mu) ** 2, axis=-1, keepdims=True)
    return (x - mu) * lax.rsqrt(var + eps) * gamma + beta


# ------------------------------ Pallas kernels -----------------------------
def embed_layernorm_kernel(x_ref, g_ref, b_ref, o_ref):
    """Embedding LayerNorm: o = LN(x) * g + b.  x: [M, H]."""
    x = x_ref[...].astype(jnp.float32)
    o_ref[...] = _layer_norm(x, g_ref[...], b_ref[...]).astype(o_ref.dtype)


def encoder_layer_kernel(h_ref, bias_ref, wqkv_ref, bqkv_ref, wo_ref, bo_ref,
                         ln1_g_ref, ln1_b_ref, wi_ref, bi_ref, wo2_ref, bo2_ref,
                         ln2_g_ref, ln2_b_ref, o_ref):
    """One full BERT encoder layer, fused. h: [M, H]; bias (attn mask): [B, 1, S]."""
    h = h_ref[...].astype(jnp.float32)                                   # [M, H]

    # ---- fused QKV projection: one [M,H] x [H,3H] MXU matmul ----
    qkv = jnp.dot(h.astype(jnp.bfloat16), wqkv_ref[...],
                  preferred_element_type=jnp.float32) + bqkv_ref[...]    # [M, 3H]
    q = qkv[:, 0:H].reshape(B, S, H)
    k = qkv[:, H:2 * H].reshape(B, S, H)
    v = qkv[:, 2 * H:3 * H].reshape(B, S, H)
    bias = bias_ref[...]                                                 # [B, 1, S]

    # ---- multi-head self-attention (batched over batch, static unroll on heads) ----
    ctx_heads = []
    for n in range(NH):
        lo, hi = n * DH, (n + 1) * DH
        qn, kn, vn = q[:, :, lo:hi], k[:, :, lo:hi], v[:, :, lo:hi]      # [B, S, DH]
        s = jnp.einsum('bqd,bkd->bqk', qn, kn,
                       preferred_element_type=jnp.float32) * ATTN_SCALE  # [B, S, S]
        s = s + bias                                                     # mask keys
        m = jnp.max(s, axis=-1, keepdims=True)
        p = jnp.exp(s - m)
        p = p * pl.reciprocal(jnp.sum(p, axis=-1, keepdims=True), approx=True)
        ctx_heads.append(jnp.einsum('bqk,bkd->bqd', p, vn,
                                    preferred_element_type=jnp.float32))
    ctx = jnp.concatenate(ctx_heads, axis=-1).reshape(M, H)              # [M, H]

    # ---- attention output projection + Add&Norm ----
    attn = jnp.dot(ctx.astype(jnp.bfloat16), wo_ref[...],
                   preferred_element_type=jnp.float32) + bo_ref[...]
    h1 = _layer_norm(attn + h, ln1_g_ref[...], ln1_b_ref[...])

    # ---- feed-forward + Add&Norm ----
    # TODO(synk): HF BERT uses erf-GELU; tanh approximation used for safe lowering.
    ff = jax.nn.gelu(jnp.dot(h1.astype(jnp.bfloat16), wi_ref[...],
                             preferred_element_type=jnp.float32) + bi_ref[...],
                     approximate=True)
    ff2 = jnp.dot(ff.astype(jnp.bfloat16), wo2_ref[...],
                  preferred_element_type=jnp.float32) + bo2_ref[...]
    h2 = _layer_norm(ff2 + h1, ln2_g_ref[...], ln2_b_ref[...])
    o_ref[...] = h2.astype(o_ref.dtype)


def lstm_qa_kernel(x_ref, wih_ref, whh_ref, b_ref, wst_ref, wen_ref,
                   logits_ref, xg_i, xg_f, xg_g, xg_o, y_scr):
    """Unidirectional LSTM over full-length sequences + both QA heads, fused.

    x: [B*S, H] bert_outputs (batch-major rows).  Gate order i, f, g, o; weights
    are per-gate [H, H] (transposed for x @ W), b_ih + b_hh folded into b.
    Output: logits [B*S, 2] with col 0 = start (from x), col 1 = end (from LSTM h).
    """
    x_bf = x_ref[...].astype(jnp.bfloat16)                               # [M, H]

    # ---- time-parallel: precompute x @ W_ih per gate (lane-aligned [M, H] tiles) ----
    xg_refs = (xg_i, xg_f, xg_g, xg_o)
    for g_idx, ref in enumerate(xg_refs):
        ref[...] = jnp.dot(x_bf, wih_ref[g_idx],
                           preferred_element_type=jnp.float32) + b_ref[g_idx]

    whh = [whh_ref[g_idx] for g_idx in range(4)]                         # bf16 [H, H]

    # ---- sequential recurrence: only h @ W_hh on the critical path ----
    # TODO(synk): static unrolled time loop (S=8); use lax.fori_loop at real seq lengths.
    h = jnp.zeros((B, H), jnp.float32)
    c = jnp.zeros((B, H), jnp.float32)
    for t in range(S):
        hb = h.astype(jnp.bfloat16)
        gates = []
        for g_idx, ref in enumerate(xg_refs):
            rows = [ref[b * S + t:b * S + t + 1, :] for b in range(B)]   # [1, H] each
            xg_t = jnp.concatenate(rows, axis=0) if B > 1 else rows[0]   # [B, H]
            gates.append(xg_t + jnp.dot(hb, whh[g_idx],
                                        preferred_element_type=jnp.float32))
        i_g = jax.nn.sigmoid(gates[0])
        f_g = jax.nn.sigmoid(gates[1])
        g_g = jnp.tanh(gates[2])
        o_g = jax.nn.sigmoid(gates[3])
        c = f_g * c + i_g * g_g
        h = o_g * jnp.tanh(c)
        for b in range(B):
            y_scr[b * S + t:b * S + t + 1, :] = h[b:b + 1, :]

    # ---- fused QA classifiers (bias-free Linear(H, 1) each), as MXU matvecs ----
    start = jnp.dot(x_bf, wst_ref[...], preferred_element_type=jnp.float32)        # [M, 1]
    end = jnp.dot(y_scr[...].astype(jnp.bfloat16), wen_ref[...],
                  preferred_element_type=jnp.float32)                               # [M, 1]
    logits_ref[...] = jnp.concatenate([start, end], axis=-1).astype(logits_ref.dtype)


# ------------------------------- wrappers -----------------------------------
def pallas_embed_layernorm(emb, gamma, beta):
    return pl.pallas_call(
        embed_layernorm_kernel,
        out_shape=jax.ShapeDtypeStruct((M, H), jnp.float32),
    )(emb, gamma, beta)


def pallas_encoder_layer(h, bias, lyr):
    return pl.pallas_call(
        encoder_layer_kernel,
        out_shape=jax.ShapeDtypeStruct((M, H), jnp.float32),
    )(h, bias, lyr["wqkv"], lyr["bqkv"], lyr["wo"], lyr["bo"],
      lyr["ln1_g"], lyr["ln1_b"], lyr["wi"], lyr["bi"],
      lyr["wo2"], lyr["bo2"], lyr["ln2_g"], lyr["ln2_b"])


def pallas_lstm_qa(h2d, wih, whh, bias, w_start, w_end):
    return pl.pallas_call(
        lstm_qa_kernel,
        out_shape=jax.ShapeDtypeStruct((M, 2), jnp.float32),
        scratch_shapes=[pltpu.VMEM((M, H), jnp.float32) for _ in range(5)],
    )(h2d, wih, whh, bias, w_start, w_end)


# --------------------------- parameter construction -------------------------
def init_params(key):
    def nrm(k, shape, scale=0.02, dtype=jnp.float32):
        return (scale * jax.random.normal(k, shape, dtype=jnp.float32)).astype(dtype)

    bf = jnp.bfloat16
    keys = iter(jax.random.split(key, 64))
    p = {
        "word_emb": nrm(next(keys), (VOCAB, H)),
        "pos_emb": nrm(next(keys), (S, H)),
        "type_emb": nrm(next(keys), (NTYPES, H)),
        "emb_ln_g": jnp.ones((1, H), jnp.float32),
        "emb_ln_b": jnp.zeros((1, H), jnp.float32),
        "layers": [],
        # QAOutput: Linear(H, 1, bias=False) classifiers (stored transposed [H, 1])
        "w_start": nrm(next(keys), (H, 1), dtype=bf),
        "w_end": nrm(next(keys), (H, 1), dtype=bf),
        # out_lstm: per-gate (i, f, g, o) weights, transposed for x @ W; b_ih+b_hh folded
        "lstm_w_ih": nrm(next(keys), (4, H, H), dtype=bf),
        "lstm_w_hh": nrm(next(keys), (4, H, H), dtype=bf),
        "lstm_b": jnp.zeros((4, 1, H), jnp.float32),
    }
    for _ in range(NLAYERS):
        lyr = {
            # wq|wk|wv concatenated into one [H, 3H] matmul weight
            "wqkv": nrm(next(keys), (H, 3 * H), dtype=bf),
            "bqkv": jnp.zeros((1, 3 * H), jnp.float32),
            "wo": nrm(next(keys), (H, H), dtype=bf),
            "bo": jnp.zeros((1, H), jnp.float32),
            "ln1_g": jnp.ones((1, H), jnp.float32),
            "ln1_b": jnp.zeros((1, H), jnp.float32),
            "wi": nrm(next(keys), (H, FF), dtype=bf),
            "bi": jnp.zeros((1, FF), jnp.float32),
            "wo2": nrm(next(keys), (FF, H), dtype=bf),
            "bo2": jnp.zeros((1, H), jnp.float32),
            "ln2_g": jnp.ones((1, H), jnp.float32),
            "ln2_b": jnp.zeros((1, H), jnp.float32),
        }
        p["layers"].append(lyr)
    return p


# ------------------------------- full forward --------------------------------
def qabert_forward(params, input_ids, token_type_ids, attention_mask):
    # ---- BERT embeddings (gathers are XLA glue; LN is a Pallas kernel) ----
    we = jnp.take(params["word_emb"], input_ids, axis=0)            # [B, S, H]
    pe = params["pos_emb"][None, :, :]                              # [1, S, H]
    te = jnp.take(params["type_emb"], token_type_ids, axis=0)       # [B, S, H]
    emb = (we + pe + te).reshape(M, H)
    h = pallas_embed_layernorm(emb, params["emb_ln_g"], params["emb_ln_b"])

    # extended attention mask: (1 - mask) * -1e9, kept f32, shaped [B, 1, S]
    bias = ((1.0 - attention_mask.astype(jnp.float32)) * -1e9).reshape(B, 1, S)

    # ---- fused encoder layers (one pallas_call each) ----
    for lyr in params["layers"]:
        h = pallas_encoder_layer(h, bias, lyr)

    # ---- fused LSTM + QA heads (one pallas_call) ----
    # TODO(synk): QAOutput internals not given; implemented as start/end Linear(H,1,bias=False).
    logits = pallas_lstm_qa(h, params["lstm_w_ih"], params["lstm_w_hh"],
                            params["lstm_b"], params["w_start"], params["w_end"])
    start_logits = logits[:, 0].reshape(B, S)
    end_logits = logits[:, 1].reshape(B, S)
    return start_logits, end_logits


# ---------------------------------- main --------------------------------------
if __name__ == "__main__":
    key = jax.random.PRNGKey(0)
    k_param, k_ids, k_types = jax.random.split(key, 3)

    params = init_params(k_param)
    input_ids = jax.random.randint(k_ids, (B, S), 0, VOCAB, dtype=jnp.int32)
    token_type_ids = jax.random.randint(k_types, (B, S), 0, NTYPES, dtype=jnp.int32)
    # second example has two padding positions masked out
    attention_mask = jnp.array([[1] * S, [1] * (S - 2) + [0, 0]], dtype=jnp.int32)

    fwd = jax.jit(qabert_forward)
    start_logits, end_logits = fwd(params, input_ids, token_type_ids, attention_mask)
    jax.block_until_ready((start_logits, end_logits))
    assert start_logits.shape == (B, S) and end_logits.shape == (B, S)
    assert bool(jnp.all(jnp.isfinite(start_logits))) and bool(jnp.all(jnp.isfinite(end_logits)))
    print("KERNEL_OK")
</pallas_src>

<mosaic_0001>
module attributes {stable_mosaic.version = 11 : i64} {
  func.func @embed_layernorm_kernel(%arg0: memref<16x32xf32, #tpu.memory_space<vmem>>, %arg1: memref<1x32xf32, #tpu.memory_space<vmem>>, %arg2: memref<1x32xf32, #tpu.memory_space<vmem>>, %arg3: memref<16x32xf32, #tpu.memory_space<vmem>>) attributes {dimension_semantics = [], scalar_prefetch = 0 : i64, scratch_operands = 0 : i64, tpu.core_type = #tpu.core_type<tc>} {
    %c0 = arith.constant 0 : index
    %c0_0 = arith.constant 0 : index
    %0 = vector.load %arg0[%c0, %c0_0] : memref<16x32xf32, #tpu.memory_space<vmem>>, vector<16x32xf32>
    %c0_1 = arith.constant 0 : index
    %c0_2 = arith.constant 0 : index
    %1 = vector.load %arg1[%c0_1, %c0_2] : memref<1x32xf32, #tpu.memory_space<vmem>>, vector<1x32xf32>
    %c0_3 = arith.constant 0 : index
    %c0_4 = arith.constant 0 : index
    %2 = vector.load %arg2[%c0_3, %c0_4] : memref<1x32xf32, #tpu.memory_space<vmem>>, vector<1x32xf32>
    %cst = arith.constant dense<0.000000e+00> : vector<16xf32>
    %3 = vector.multi_reduction <add>, %0, %cst [1] : vector<16x32xf32> to vector<16xf32>
    %4 = vector.shape_cast %3 : vector<16xf32> to vector<16x1xf32>
    %cst_5 = arith.constant 3.200000e+01 : f32
    %5 = vector.broadcast %cst_5 : f32 to vector<16x1xf32>
    %6 = arith.divf %4, %5 : vector<16x1xf32>
    %7 = vector.broadcast %6 : vector<16x1xf32> to vector<16x32xf32>
    %8 = arith.subf %0, %7 : vector<16x32xf32>
    %9 = arith.mulf %8, %8 : vector<16x32xf32>
    %cst_6 = arith.constant dense<0.000000e+00> : vector<16xf32>
    %10 = vector.multi_reduction <add>, %9, %cst_6 [1] : vector<16x32xf32> to vector<16xf32>
    %11 = vector.shape_cast %10 : vector<16xf32> to vector<16x1xf32>
    %cst_7 = arith.constant 3.200000e+01 : f32
    %12 = vector.broadcast %cst_7 : f32 to vector<16x1xf32>
    %13 = arith.divf %11, %12 : vector<16x1xf32>
    %14 = vector.broadcast %6 : vector<16x1xf32> to vector<16x32xf32>
    %15 = arith.subf %0, %14 : vector<16x32xf32>
    %cst_8 = arith.constant 9.99999996E-13 : f32
    %16 = vector.broadcast %cst_8 : f32 to vector<16x1xf32>
    %17 = arith.addf %13, %16 : vector<16x1xf32>
    %18 = math.rsqrt %17 : vector<16x1xf32>
    %19 = vector.broadcast %18 : vector<16x1xf32> to vector<16x32xf32>
    %20 = arith.mulf %15, %19 : vector<16x32xf32>
    %21 = vector.broadcast %1 : vector<1x32xf32> to vector<16x32xf32>
    %22 = arith.mulf %20, %21 : vector<16x32xf32>
    %23 = vector.broadcast %2 : vector<1x32xf32> to vector<16x32xf32>
    %24 = arith.addf %22, %23 : vector<16x32xf32>
    %c0_9 = arith.constant 0 : index
    %c0_10 = arith.constant 0 : index
    %25 = vector.load %arg3[%c0_9, %c0_10] : memref<16x32xf32, #tpu.memory_space<vmem>>, vector<16x32xf32>
    tpu.vector_store %arg3[%c0_9, %c0_10], %24 {strides = array<i32>} : memref<16x32xf32, #tpu.memory_space<vmem>>, vector<16x32xf32>,
    return
  }
}

module attributes {stable_mosaic.version = 11 : i64} {
  func.func @encoder_layer_kernel(%arg0: memref<16x32xf32, #tpu.memory_space<vmem>>, %arg1: memref<2x1x8xf32, #tpu.memory_space<vmem>>, %arg2: memref<32x96xbf16, #tpu.memory_space<vmem>>, %arg3: memref<1x96xf32, #tpu.memory_space<vmem>>, %arg4: memref<32x32xbf16, #tpu.memory_space<vmem>>, %arg5: memref<1x32xf32, #tpu.memory_space<vmem>>, %arg6: memref<1x32xf32, #tpu.memory_space<vmem>>, %arg7: memref<1x32xf32, #tpu.memory_space<vmem>>, %arg8: memref<32x64xbf16, #tpu.memory_space<vmem>>, %arg9: memref<1x64xf32, #tpu.memory_space<vmem>>, %arg10: memref<64x32xbf16, #tpu.memory_space<vmem>>, %arg11: memref<1x32xf32, #tpu.memory_space<vmem>>, %arg12: memref<1x32xf32, #tpu.memory_space<vmem>>, %arg13: memref<1x32xf32, #tpu.memory_space<vmem>>, %arg14: memref<16x32xf32, #tpu.memory_space<vmem>>) attributes {dimension_semantics = [], scalar_prefetch = 0 : i64, scratch_operands = 0 : i64, tpu.core_type = #tpu.core_type<tc>} {
    %c0 = arith.constant 0 : index
    %c0_0 = arith.constant 0 : index
    %0 = vector.load %arg0[%c0, %c0_0] : memref<16x32xf32, #tpu.memory_space<vmem>>, vector<16x32xf32>
    %1 = arith.truncf %0 : vector<16x32xf32> to vector<16x32xbf16>
    %c0_1 = arith.constant 0 : index
    %c0_2 = arith.constant 0 : index
    %2 = vector.load %arg2[%c0_1, %c0_2] : memref<32x96xbf16, #tpu.memory_space<vmem>>, vector<32x96xbf16>
    %cst = arith.constant dense<0.000000e+00> : vector<16x96xf32>
    %3 = tpu.matmul %1, %2, %cst {dimension_numbers = #tpu.dot_dimension_numbers<[1], [0], [0], [1], [0, 0, 1, 1], [], []>} : vector<16x32xbf16>, vector<32x96xbf16>, vector<16x96xf32> -> vector<16x96xf32>
    %c0_3 = arith.constant 0 : index
    %c0_4 = arith.constant 0 : index
    %4 = vector.load %arg3[%c0_3, %c0_4] : memref<1x96xf32, #tpu.memory_space<vmem>>, vector<1x96xf32>
    %5 = vector.broadcast %4 : vector<1x96xf32> to vector<16x96xf32>
    %6 = arith.addf %3, %5 : vector<16x96xf32>
    %7 = vector.extract_strided_slice %6 {offsets = [0, 0], sizes = [16, 32], strides = [1, 1]} : vector<16x96xf32> to vector<16x32xf32>
    %8 = vector.shape_cast %7 : vector<16x32xf32> to vector<2x8x32xf32>
    %9 = vector.extract_strided_slice %6 {offsets = [0, 32], sizes = [16, 32], strides = [1, 1]} : vector<16x96xf32> to vector<16x32xf32>
    %10 = vector.shape_cast %9 : vector<16x32xf32> to vector<2x8x32xf32>
    %11 = vector.extract_strided_slice %6 {offsets = [0, 64], sizes = [16, 32], strides = [1, 1]} : vector<16x96xf32> to vector<16x32xf32>
    %12 = vector.shape_cast %11 : vector<16x32xf32> to vector<2x8x32xf32>
    %c0_5 = arith.constant 0 : index
    %c0_6 = arith.constant 0 : index
    %c0_7 = arith.constant 0 : index
    %13 = vector.load %arg1[%c0_5, %c0_6, %c0_7] : memref<2x1x8xf32, #tpu.memory_space<vmem>>, vector<2x1x8xf32>
    %14 = vector.extract_strided_slice %8 {offsets = [0, 0, 0], sizes = [2, 8, 8], strides = [1, 1, 1]} : vector<2x8x32xf32> to vector<2x8x8xf32>
    %15 = vector.extract_strided_slice %10 {offsets = [0, 0, 0], sizes = [2, 8, 8], strides = [1, 1, 1]} : vector<2x8x32xf32> to vector<2x8x8xf32>
    %16 = vector.extract_strided_slice %12 {offsets = [0, 0, 0], sizes = [2, 8, 8], strides = [1, 1, 1]} : vector<2x8x32xf32> to vector<2x8x8xf32>
    "tpu.trace_start"() <{level = 10 : i32, message = "bqd,bkd->bqk"}> : () -> ()
    %cst_8 = arith.constant dense<0.000000e+00> : vector<2x8x8xf32>
    %17 = tpu.matmul %14, %15, %cst_8 {dimension_numbers = #tpu.dot_dimension_numbers<[2], [2], [1], [1], [0, 0, 0, 1, 1, 1], [0], [0]>} : vector<2x8x8xf32>, vector<2x8x8xf32>, vector<2x8x8xf32> -> vector<2x8x8xf32>
    "tpu.trace_stop"() : () -> ()
    %cst_9 = arith.constant 0.353553385 : f32
    %18 = vector.broadcast %cst_9 : f32 to vector<2x8x8xf32>
    %19 = arith.mulf %17, %18 : vector<2x8x8xf32>
    %20 = vector.broadcast %13 : vector<2x1x8xf32> to vector<2x8x8xf32>
    %21 = arith.addf %19, %20 : vector<2x8x8xf32>
    %cst_10 = arith.constant dense<0xFF800000> : vector<2x8xf32>
    %22 = vector.multi_reduction <maximumf>, %21, %cst_10 [2] : vector<2x8x8xf32> to vector<2x8xf32>
    %23 = vector.shape_cast %22 : vector<2x8xf32> to vector<2x8x1xf32>
    %24 = vector.broadcast %23 : vector<2x8x1xf32> to vector<2x8x8xf32>
    %25 = arith.subf %21, %24 : vector<2x8x8xf32>
    %26 = math.exp %25 : vector<2x8x8xf32>
    %cst_11 = arith.constant dense<0.000000e+00> : vector<2x8xf32>
    %27 = vector.multi_reduction <add>, %26, %cst_11 [2] : vector<2x8x8xf32> to vector<2x8xf32>
    %28 = vector.shape_cast %27 : vector<2x8xf32> to vector<2x8x1xf32>
    %29 = tpu.reciprocal %28 {approx = true} : vector<2x8x1xf32> -> vector<2x8x1xf32>
    %30 = vector.broadcast %29 : vector<2x8x1xf32> to vector<2x8x8xf32>
    %31 = arith.mulf %26, %30 : vector<2x8x8xf32>
    "tpu.trace_start"() <{level = 10 : i32, message = "bqk,bkd->bqd"}> : () -> ()
    %cst_12 = arith.constant dense<0.000000e+00> : vector<2x8x8xf32>
    %32 = tpu.matmul %31, %16, %cst_12 {dimension_numbers = #tpu.dot_dimension_numbers<[2], [1], [1], [2], [0, 0, 0, 1, 1, 2], [0], [0]>} : vector<2x8x8xf32>, vector<2x8x8xf32>, vector<2x8x8xf32> -> vector<2x8x8xf32>
    "tpu.trace_stop"() : () -> ()
    %33 = vector.extract_strided_slice %8 {offsets = [0, 0, 8], sizes = [2, 8, 8], strides = [1, 1, 1]} : vector<2x8x32xf32> to vector<2x8x8xf32>
    %34 = vector.extract_strided_slice %10 {offsets = [0, 0, 8], sizes = [2, 8, 8], strides = [1, 1, 1]} : vector<2x8x32xf32> to vector<2x8x8xf32>
    %35 = vector.extract_strided_slice %12 {offsets = [0, 0, 8], sizes = [2, 8, 8], strides = [1, 1, 1]} : vector<2x8x32xf32> to vector<2x8x8xf32>
    "tpu.trace_start"() <{level = 10 : i32, message = "bqd,bkd->bqk"}> : () -> ()
    %cst_13 = arith.constant dense<0.000000e+00> : vector<2x8x8xf32>
    %36 = tpu.matmul %33, %34, %cst_13 {dimension_numbers = #tpu.dot_dimension_numbers<[2], [2], [1], [1], [0, 0, 0, 1, 1, 1], [0], [0]>} : vector<2x8x8xf32>, vector<2x8x8xf32>, vector<2x8x8xf32> -> vector<2x8x8xf32>
    "tpu.trace_stop"() : () -> ()
    %cst_14 = arith.constant 0.353553385 : f32
    %37 = vector.broadcast %cst_14 : f32 to vector<2x8x8xf32>
    %38 = arith.mulf %36, %37 : vector<2x8x8xf32>
    %39 = vector.broadcast %13 : vector<2x1x8xf32> to vector<2x8x8xf32>
    %40 = arith.addf %38, %39 : vector<2x8x8xf32>
    %cst_15 = arith.constant dense<0xFF800000> : vector<2x8xf32>
    %41 = vector.multi_reduction <maximumf>, %40, %cst_15 [2] : vector<2x8x8xf32> to vector<2x8xf32>
    %42 = vector.shape_cast %41 : vector<2x8xf32> to vector<2x8x1xf32>
    %43 = vector.broadcast %42 : vector<2x8x1xf32> to vector<2x8x8xf32>
    %44 = arith.subf %40, %43 : vector<2x8x8xf32>
    %45 = math.exp %44 : vector<2x8x8xf32>
    %cst_16 = arith.constant dense<0.000000e+00> : vector<2x8xf32>
    %46 = vector.multi_reduction <add>, %45, %cst_16 [2] : vector<2x8x8xf32> to vector<2x8xf32>
    %47 = vector.shape_cast %46 : vector<2x8xf32> to vector<2x8x1xf32>
    %48 = tpu.reciprocal %47 {approx = true} : vector<2x8x1xf32> -> vector<2x8x1xf32>
    %49 = vector.broadcast %48 : vector<2x8x1xf32> to vector<2x8x8xf32>
    %50 = arith.mulf %45, %49 : vector<2x8x8xf32>
    "tpu.trace_start"() <{level = 10 : i32, message = "bqk,bkd->bqd"}> : () -> ()
    %cst_17 = arith.constant dense<0.000000e+00> : vector<2x8x8xf32>
    %51 = tpu.matmul %50, %35, %cst_17 {dimension_numbers = #tpu.dot_dimension_numbers<[2], [1], [1], [2], [0, 0, 0, 1, 1, 2], [0], [0]>} : vector<2x8x8xf32>, vector<2x8x8xf32>, vector<2x8x8xf32> -> vector<2x8x8xf32>
    "tpu.trace_stop"() : () -> ()
    %52 = vector.extract_strided_slice %8 {offsets = [0, 0, 16], sizes = [2, 8, 8], strides = [1, 1, 1]} : vector<2x8x32xf32> to vector<2x8x8xf32>
    %53 = vector.extract_strided_slice %10 {offsets = [0, 0, 16], sizes = [2, 8, 8], strides = [1, 1, 1]} : vector<2x8x32xf32> to vector<2x8x8xf32>
    %54 = vector.extract_strided_slice %12 {offsets = [0, 0, 16], sizes = [2, 8, 8], strides = [1, 1, 1]} : vector<2x8x32xf32> to vector<2x8x8xf32>
    "tpu.trace_start"() <{level = 10 : i32, message = "bqd,bkd->bqk"}> : () -> ()
    %cst_18 = arith.constant dense<0.000000e+00> : vector<2x8x8xf32>
    %55 = tpu.matmul %52, %53, %cst_18 {dimension_numbers = #tpu.dot_dimension_numbers<[2], [2], [1], [1], [0, 0, 0, 1, 1, 1], [0], [0]>} : vector<2x8x8xf32>, vector<2x8x8xf32>, vector<2x8x8xf32> -> vector<2x8x8xf32>
    "tpu.trace_stop"() : () -> ()
    %cst_19 = arith.constant 0.353553385 : f32
    %56 = vector.broadcast %cst_19 : f32 to vector<2x8x8xf32>
    %57 = arith.mulf %55, %56 : vector<2x8x8xf32>
    %58 = vector.broadcast %13 : vector<2x1x8xf32> to vector<2x8x8xf32>
    %59 = arith.addf %57, %58 : vector<2x8x8xf32>
    %cst_20 = arith.constant dense<0xFF800000> : vector<2x8xf32>
    %60 = vector.multi_reduction <maximumf>, %59, %cst_20 [2] : vector<2x8x8xf32> to vector<2x8xf32>
    %61 = vector.shape_cast %60 : vector<2x8xf32> to vector<2x8x1xf32>
    %62 = vector.broadcast %61 : vector<2x8x1xf32> to vector<2x8x8xf32>
    %63 = arith.subf %59, %62 : vector<2x8x8xf32>
    %64 = math.exp %63 : vector<2x8x8xf32>
    %cst_21 = arith.constant dense<0.000000e+00> : vector<2x8xf32>
    %65 = vector.multi_reduction <add>, %64, %cst_21 [2] : vector<2x8x8xf32> to vector<2x8xf32>
    %66 = vector.shape_cast %65 : vector<2x8xf32> to vector<2x8x1xf32>
    %67 = tpu.reciprocal %66 {approx = true} : vector<2x8x1xf32> -> vector<2x8x1xf32>
    %68 = vector.broadcast %67 : vector<2x8x1xf32> to vector<2x8x8xf32>
    %69 = arith.mulf %64, %68 : vector<2x8x8xf32>
    "tpu.trace_start"() <{level = 10 : i32, message = "bqk,bkd->bqd"}> : () -> ()
    %cst_22 = arith.constant dense<0.000000e+00> : vector<2x8x8xf32>
    %70 = tpu.matmul %69, %54, %cst_22 {dimension_numbers = #tpu.dot_dimension_numbers<[2], [1], [1], [2], [0, 0, 0, 1, 1, 2], [0], [0]>} : vector<2x8x8xf32>, vector<2x8x8xf32>, vector<2x8x8xf32> -> vector<2x8x8xf32>
    "tpu.trace_stop"() : () -> ()
    %71 = vector.extract_strided_slice %8 {offsets = [0, 0, 24], sizes = [2, 8, 8], strides = [1, 1, 1]} : vector<2x8x32xf32> to vector<2x8x8xf32>
    %72 = vector.extract_strided_slice %10 {offsets = [0, 0, 24], sizes = [2, 8, 8], strides = [1, 1, 1]} : vector<2x8x32xf32> to vector<2x8x8xf32>
    %73 = vector.extract_strided_slice %12 {offsets = [0, 0, 24], sizes = [2, 8, 8], strides = [1, 1, 1]} : vector<2x8x32xf32> to vector<2x8x8xf32>
    "tpu.trace_start"() <{level = 10 : i32, message = "bqd,bkd->bqk"}> : () -> ()
    %cst_23 = arith.constant dense<0.000000e+00> : vector<2x8x8xf32>
    %74 = tpu.matmul %71, %72, %cst_23 {dimension_numbers = #tpu.dot_dimension_numbers<[2], [2], [1], [1], [0, 0, 0, 1, 1, 1], [0], [0]>} : vector<2x8x8xf32>, vector<2x8x8xf32>, vector<2x8x8xf32> -> vector<2x8x8xf32>
    "tpu.trace_stop"() : () -> ()
    %cst_24 = arith.constant 0.353553385 : f32
    %75 = vector.broadcast %cst_24 : f32 to vector<2x8x8xf32>
    %76 = arith.mulf %74, %75 : vector<2x8x8xf32>
    %77 = vector.broadcast %13 : vector<2x1x8xf32> to vector<2x8x8xf32>
    %78 = arith.addf %76, %77 : vector<2x8x8xf32>
    %cst_25 = arith.constant dense<0xFF800000> : vector<2x8xf32>
    %79 = vector.multi_reduction <maximumf>, %78, %cst_25 [2] : vector<2x8x8xf32> to vector<2x8xf32>
    %80 = vector.shape_cast %79 : vector<2x8xf32> to vector<2x8x1xf32>
    %81 = vector.broadcast %80 : vector<2x8x1xf32> to vector<2x8x8xf32>
    %82 = arith.subf %78, %81 : vector<2x8x8xf32>
    %83 = math.exp %82 : vector<2x8x8xf32>
    %cst_26 = arith.constant dense<0.000000e+00> : vector<2x8xf32>
    %84 = vector.multi_reduction <add>, %83, %cst_26 [2] : vector<2x8x8xf32> to vector<2x8xf32>
    %85 = vector.shape_cast %84 : vector<2x8xf32> to vector<2x8x1xf32>
    %86 = tpu.reciprocal %85 {approx = true} : vector<2x8x1xf32> -> vector<2x8x1xf32>
    %87 = vector.broadcast %86 : vector<2x8x1xf32> to vector<2x8x8xf32>
    %88 = arith.mulf %83, %87 : vector<2x8x8xf32>
    "tpu.trace_start"() <{level = 10 : i32, message = "bqk,bkd->bqd"}> : () -> ()
    %cst_27 = arith.constant dense<0.000000e+00> : vector<2x8x8xf32>
    %89 = tpu.matmul %88, %73, %cst_27 {dimension_numbers = #tpu.dot_dimension_numbers<[2], [1], [1], [2], [0, 0, 0, 1, 1, 2], [0], [0]>} : vector<2x8x8xf32>, vector<2x8x8xf32>, vector<2x8x8xf32> -> vector<2x8x8xf32>
    "tpu.trace_stop"() : () -> ()
    %90 = tpu.concatenate %32, %51, %70, %89 in 2 : vector<2x8x8xf32>, vector<2x8x8xf32>, vector<2x8x8xf32>, vector<2x8x8xf32> -> vector<2x8x32xf32>
    %91 = vector.shape_cast %90 : vector<2x8x32xf32> to vector<16x32xf32>
    %92 = arith.truncf %91 : vector<16x32xf32> to vector<16x32xbf16>
    %c0_28 = arith.constant 0 : index
    %c0_29 = arith.constant 0 : index
    %93 = vector.load %arg4[%c0_28, %c0_29] : memref<32x32xbf16, #tpu.memory_space<vmem>>, vector<32x32xbf16>
    %cst_30 = arith.constant dense<0.000000e+00> : vector<16x32xf32>
    %94 = tpu.matmul %92, %93, %cst_30 {dimension_numbers = #tpu.dot_dimension_numbers<[1], [0], [0], [1], [0, 0, 1, 1], [], []>} : vector<16x32xbf16>, vector<32x32xbf16>, vector<16x32xf32> -> vector<16x32xf32>
    %c0_31 = arith.constant 0 : index
    %c0_32 = arith.constant 0 : index
    %95 = vector.load %arg5[%c0_31, %c0_32] : memref<1x32xf32, #tpu.memory_space<vmem>>, vector<1x32xf32>
    %96 = vector.broadcast %95 : vector<1x32xf32> to vector<16x32xf32>
    %97 = arith.addf %94, %96 : vector<16x32xf32>
    %98 = arith.addf %97, %0 : vector<16x32xf32>
    %c0_33 = arith.constant 0 : index
    %c0_34 = arith.constant 0 : index
    %99 = vector.load %arg6[%c0_33, %c0_34] : memref<1x32xf32, #tpu.memory_space<vmem>>, vector<1x32xf32>
    %c0_35 = arith.constant 0 : index
    %c0_36 = arith.constant 0 : index
    %100 = vector.load %arg7[%c0_35, %c0_36] : memref<1x32xf32, #tpu.memory_space<vmem>>, vector<1x32xf32>
    %cst_37 = arith.constant dense<0.000000e+00> : vector<16xf32>
    %101 = vector.multi_reduction <add>, %98, %cst_37 [1] : vector<16x32xf32> to vector<16xf32>
    %102 = vector.shape_cast %101 : vector<16xf32> to vector<16x1xf32>
    %cst_38 = arith.constant 3.200000e+01 : f32
    %103 = vector.broadcast %cst_38 : f32 to vector<16x1xf32>
    %104 = arith.divf %102, %103 : vector<16x1xf32>
    %105 = vector.broadcast %104 : vector<16x1xf32> to vector<16x32xf32>
    %106 = arith.subf %98, %105 : vector<16x32xf32>
    %107 = arith.mulf %106, %106 : vector<16x32xf32>
    %cst_39 = arith.constant dense<0.000000e+00> : vector<16xf32>
    %108 = vector.multi_reduction <add>, %107, %cst_39 [1] : vector<16x32xf32> to vector<16xf32>
    %109 = vector.shape_cast %108 : vector<16xf32> to vector<16x1xf32>
    %cst_40 = arith.constant 3.200000e+01 : f32
    %110 = vector.broadcast %cst_40 : f32 to vector<16x1xf32>
    %111 = arith.divf %109, %110 : vector<16x1xf32>
    %112 = vector.broadcast %104 : vector<16x1xf32> to vector<16x32xf32>
    %113 = arith.subf %98, %112 : vector<16x32xf32>
    %cst_41 = arith.constant 9.99999996E-13 : f32
    %114 = vector.broadcast %cst_41 : f32 to vector<16x1xf32>
    %115 = arith.addf %111, %114 : vector<16x1xf32>
    %116 = math.rsqrt %115 : vector<16x1xf32>
    %117 = vector.broadcast %116 : vector<16x1xf32> to vector<16x32xf32>
    %118 = arith.mulf %113, %117 : vector<16x32xf32>
    %119 = vector.broadcast %99 : vector<1x32xf32> to vector<16x32xf32>
    %120 = arith.mulf %118, %119 : vector<16x32xf32>
    %121 = vector.broadcast %100 : vector<1x32xf32> to vector<16x32xf32>
    %122 = arith.addf %120, %121 : vector<16x32xf32>
    %123 = arith.truncf %122 : vector<16x32xf32> to vector<16x32xbf16>
    %c0_42 = arith.constant 0 : index
    %c0_43 = arith.constant 0 : index
    %124 = vector.load %arg8[%c0_42, %c0_43] : memref<32x64xbf16, #tpu.memory_space<vmem>>, vector<32x64xbf16>
    %cst_44 = arith.constant dense<0.000000e+00> : vector<16x64xf32>
    %125 = tpu.matmul %123, %124, %cst_44 {dimension_numbers = #tpu.dot_dimension_numbers<[1], [0], [0], [1], [0, 0, 1, 1], [], []>} : vector<16x32xbf16>, vector<32x64xbf16>, vector<16x64xf32> -> vector<16x64xf32>
    %c0_45 = arith.constant 0 : index
    %c0_46 = arith.constant 0 : index
    %126 = vector.load %arg9[%c0_45, %c0_46] : memref<1x64xf32, #tpu.memory_space<vmem>>, vector<1x64xf32>
    %127 = vector.broadcast %126 : vector<1x64xf32> to vector<16x64xf32>
    %128 = arith.addf %125, %127 : vector<16x64xf32>
    %129 = arith.mulf %128, %128 : vector<16x64xf32>
    %130 = arith.mulf %128, %129 : vector<16x64xf32>
    %cst_47 = arith.constant 4.471500e-02 : f32
    %131 = vector.broadcast %cst_47 : f32 to vector<16x64xf32>
    %132 = arith.mulf %131, %130 : vector<16x64xf32>
    %133 = arith.addf %128, %132 : vector<16x64xf32>
    %cst_48 = arith.constant 0.797884583 : f32
    %134 = vector.broadcast %cst_48 : f32 to vector<16x64xf32>
    %135 = arith.mulf %134, %133 : vector<16x64xf32>
    %136 = math.tanh %135 : vector<16x64xf32>
    %cst_49 = arith.constant 1.000000e+00 : f32
    %137 = vector.broadcast %cst_49 : f32 to vector<16x64xf32>
    %138 = arith.addf %137, %136 : vector<16x64xf32>
    %cst_50 = arith.constant 5.000000e-01 : f32
    %139 = vector.broadcast %cst_50 : f32 to vector<16x64xf32>
    %140 = arith.mulf %139, %138 : vector<16x64xf32>
    %141 = arith.mulf %128, %140 : vector<16x64xf32>
    %142 = arith.truncf %141 : vector<16x64xf32> to vector<16x64xbf16>
    %c0_51 = arith.constant 0 : index
    %c0_52 = arith.constant 0 : index
    %143 = vector.load %arg10[%c0_51, %c0_52] : memref<64x32xbf16, #tpu.memory_space<vmem>>, vector<64x32xbf16>
    %cst_53 = arith.constant dense<0.000000e+00> : vector<16x32xf32>
    %144 = tpu.matmul %142, %143, %cst_53 {dimension_numbers = #tpu.dot_dimension_numbers<[1], [0], [0], [1], [0, 0, 1, 1], [], []>} : vector<16x64xbf16>, vector<64x32xbf16>, vector<16x32xf32> -> vector<16x32xf32>
    %c0_54 = arith.constant 0 : index
    %c0_55 = arith.constant 0 : index
    %145 = vector.load %arg11[%c0_54, %c0_55] : memref<1x32xf32, #tpu.memory_space<vmem>>, vector<1x32xf32>
    %146 = vector.broadcast %145 : vector<1x32xf32> to vector<16x32xf32>
    %147 = arith.addf %144, %146 : vector<16x32xf32>
    %148 = arith.addf %147, %122 : vector<16x32xf32>
    %c0_56 = arith.constant 0 : index
    %c0_57 = arith.constant 0 : index
    %149 = vector.load %arg12[%c0_56, %c0_57] : memref<1x32xf32, #tpu.memory_space<vmem>>, vector<1x32xf32>
    %c0_58 = arith.constant 0 : index
    %c0_59 = arith.constant 0 : index
    %150 = vector.load %arg13[%c0_58, %c0_59] : memref<1x32xf32, #tpu.memory_space<vmem>>, vector<1x32xf32>
    %cst_60 = arith.constant dense<0.000000e+00> : vector<16xf32>
    %151 = vector.multi_reduction <add>, %148, %cst_60 [1] : vector<16x32xf32> to vector<16xf32>
    %152 = vector.shape_cast %151 : vector<16xf32> to vector<16x1xf32>
    %cst_61 = arith.constant 3.200000e+01 : f32
    %153 = vector.broadcast %cst_61 : f32 to vector<16x1xf32>
    %154 = arith.divf %152, %153 : vector<16x1xf32>
    %155 = vector.broadcast %154 : vector<16x1xf32> to vector<16x32xf32>
    %156 = arith.subf %148, %155 : vector<16x32xf32>
    %157 = arith.mulf %156, %156 : vector<16x32xf32>
    %cst_62 = arith.constant dense<0.000000e+00> : vector<16xf32>
    %158 = vector.multi_reduction <add>, %157, %cst_62 [1] : vector<16x32xf32> to vector<16xf32>
    %159 = vector.shape_cast %158 : vector<16xf32> to vector<16x1xf32>
    %cst_63 = arith.constant 3.200000e+01 : f32
    %160 = vector.broadcast %cst_63 : f32 to vector<16x1xf32>
    %161 = arith.divf %159, %160 : vector<16x1xf32>
    %162 = vector.broadcast %154 : vector<16x1xf32> to vector<16x32xf32>
    %163 = arith.subf %148, %162 : vector<16x32xf32>
    %cst_64 = arith.constant 9.99999996E-13 : f32
    %164 = vector.broadcast %cst_64 : f32 to vector<16x1xf32>
    %165 = arith.addf %161, %164 : vector<16x1xf32>
    %166 = math.rsqrt %165 : vector<16x1xf32>
    %167 = vector.broadcast %166 : vector<16x1xf32> to vector<16x32xf32>
    %168 = arith.mulf %163, %167 : vector<16x32xf32>
    %169 = vector.broadcast %149 : vector<1x32xf32> to vector<16x32xf32>
    %170 = arith.mulf %168, %169 : vector<16x32xf32>
    %171 = vector.broadcast %150 : vector<1x32xf32> to vector<16x32xf32>
    %172 = arith.addf %170, %171 : vector<16x32xf32>
    %c0_65 = arith.constant 0 : index
    %c0_66 = arith.constant 0 : index
    %173 = vector.load %arg14[%c0_65, %c0_66] : memref<16x32xf32, #tpu.memory_space<vmem>>, vector<16x32xf32>
    tpu.vector_store %arg14[%c0_65, %c0_66], %172 {strides = array<i32>} : memref<16x32xf32, #tpu.memory_space<vmem>>, vector<16x32xf32>,
    return
  }
}

module attributes {stable_mosaic.version = 11 : i64} {
  func.func @lstm_qa_kernel(%arg0: memref<16x32xf32, #tpu.memory_space<vmem>>, %arg1: memref<4x32x32xbf16, #tpu.memory_space<vmem>>, %arg2: memref<4x32x32xbf16, #tpu.memory_space<vmem>>, %arg3: memref<4x1x32xf32, #tpu.memory_space<vmem>>, %arg4: memref<32x1xbf16, #tpu.memory_space<vmem>>, %arg5: memref<32x1xbf16, #tpu.memory_space<vmem>>, %arg6: memref<16x2xf32, #tpu.memory_space<vmem>>, %arg7: memref<16x32xf32, #tpu.memory_space<vmem>>, %arg8: memref<16x32xf32, #tpu.memory_space<vmem>>, %arg9: memref<16x32xf32, #tpu.memory_space<vmem>>, %arg10: memref<16x32xf32, #tpu.memory_space<vmem>>, %arg11: memref<16x32xf32, #tpu.memory_space<vmem>>) attributes {dimension_semantics = [], scalar_prefetch = 0 : i64, scratch_operands = 5 : i64, tpu.core_type = #tpu.core_type<tc>} {
    %c0 = arith.constant 0 : index
    %c0_0 = arith.constant 0 : index
    %0 = vector.load %arg0[%c0, %c0_0] : memref<16x32xf32, #tpu.memory_space<vmem>>, vector<16x32xf32>
    %1 = arith.truncf %0 : vector<16x32xf32> to vector<16x32xbf16>
    %c0_1 = arith.constant 0 : index
    %c0_2 = arith.constant 0 : index
    %c0_3 = arith.constant 0 : index
    %2 = vector.load %arg1[%c0_1, %c0_2, %c0_3] : memref<4x32x32xbf16, #tpu.memory_space<vmem>>, vector<1x32x32xbf16>
    %3 = vector.shape_cast %2 : vector<1x32x32xbf16> to vector<32x32xbf16>
    %cst = arith.constant dense<0.000000e+00> : vector<16x32xf32>
    %4 = tpu.matmul %1, %3, %cst {dimension_numbers = #tpu.dot_dimension_numbers<[1], [0], [0], [1], [0, 0, 1, 1], [], []>} : vector<16x32xbf16>, vector<32x32xbf16>, vector<16x32xf32> -> vector<16x32xf32>
    %c0_4 = arith.constant 0 : index
    %c0_5 = arith.constant 0 : index
    %c0_6 = arith.constant 0 : index
    %5 = vector.load %arg3[%c0_4, %c0_5, %c0_6] : memref<4x1x32xf32, #tpu.memory_space<vmem>>, vector<1x1x32xf32>
    %6 = vector.shape_cast %5 : vector<1x1x32xf32> to vector<1x32xf32>
    %7 = vector.broadcast %6 : vector<1x32xf32> to vector<16x32xf32>
    %8 = arith.addf %4, %7 : vector<16x32xf32>
    %c0_7 = arith.constant 0 : index
    %c0_8 = arith.constant 0 : index
    %9 = vector.load %arg7[%c0_7, %c0_8] : memref<16x32xf32, #tpu.memory_space<vmem>>, vector<16x32xf32>
    tpu.vector_store %arg7[%c0_7, %c0_8], %8 {strides = array<i32>} : memref<16x32xf32, #tpu.memory_space<vmem>>, vector<16x32xf32>,
    %c1 = arith.constant 1 : index
    %c0_9 = arith.constant 0 : index
    %c0_10 = arith.constant 0 : index
    %10 = vector.load %arg1[%c1, %c0_9, %c0_10] : memref<4x32x32xbf16, #tpu.memory_space<vmem>>, vector<1x32x32xbf16>
    %11 = vector.shape_cast %10 : vector<1x32x32xbf16> to vector<32x32xbf16>
    %cst_11 = arith.constant dense<0.000000e+00> : vector<16x32xf32>
    %12 = tpu.matmul %1, %11, %cst_11 {dimension_numbers = #tpu.dot_dimension_numbers<[1], [0], [0], [1], [0, 0, 1, 1], [], []>} : vector<16x32xbf16>, vector<32x32xbf16>, vector<16x32xf32> -> vector<16x32xf32>
    %c1_12 = arith.constant 1 : index
    %c0_13 = arith.constant 0 : index
    %c0_14 = arith.constant 0 : index
    %13 = vector.load %arg3[%c1_12, %c0_13, %c0_14] : memref<4x1x32xf32, #tpu.memory_space<vmem>>, vector<1x1x32xf32>
    %14 = vector.shape_cast %13 : vector<1x1x32xf32> to vector<1x32xf32>
    %15 = vector.broadcast %14 : vector<1x32xf32> to vector<16x32xf32>
    %16 = arith.addf %12, %15 : vector<16x32xf32>
    %c0_15 = arith.constant 0 : index
    %c0_16 = arith.constant 0 : index
    %17 = vector.load %arg8[%c0_15, %c0_16] : memref<16x32xf32, #tpu.memory_space<vmem>>, vector<16x32xf32>
    tpu.vector_store %arg8[%c0_15, %c0_16], %16 {strides = array<i32>} : memref<16x32xf32, #tpu.memory_space<vmem>>, vector<16x32xf32>,
    %c2 = arith.constant 2 : index
    %c0_17 = arith.constant 0 : index
    %c0_18 = arith.constant 0 : index
    %18 = vector.load %arg1[%c2, %c0_17, %c0_18] : memref<4x32x32xbf16, #tpu.memory_space<vmem>>, vector<1x32x32xbf16>
    %19 = vector.shape_cast %18 : vector<1x32x32xbf16> to vector<32x32xbf16>
    %cst_19 = arith.constant dense<0.000000e+00> : vector<16x32xf32>
    %20 = tpu.matmul %1, %19, %cst_19 {dimension_numbers = #tpu.dot_dimension_numbers<[1], [0], [0], [1], [0, 0, 1, 1], [], []>} : vector<16x32xbf16>, vector<32x32xbf16>, vector<16x32xf32> -> vector<16x32xf32>
    %c2_20 = arith.constant 2 : index
    %c0_21 = arith.constant 0 : index
    %c0_22 = arith.constant 0 : index
    %21 = vector.load %arg3[%c2_20, %c0_21, %c0_22] : memref<4x1x32xf32, #tpu.memory_space<vmem>>, vector<1x1x32xf32>
    %22 = vector.shape_cast %21 : vector<1x1x32xf32> to vector<1x32xf32>
    %23 = vector.broadcast %22 : vector<1x32xf32> to vector<16x32xf32>
    %24 = arith.addf %20, %23 : vector<16x32xf32>
    %c0_23 = arith.constant 0 : index
    %c0_24 = arith.constant 0 : index
    %25 = vector.load %arg9[%c0_23, %c0_24] : memref<16x32xf32, #tpu.memory_space<vmem>>, vector<16x32xf32>
    tpu.vector_store %arg9[%c0_23, %c0_24], %24 {strides = array<i32>} : memref<16x32xf32, #tpu.memory_space<vmem>>, vector<16x32xf32>,
    %c3 = arith.constant 3 : index
    %c0_25 = arith.constant 0 : index
    %c0_26 = arith.constant 0 : index
    %26 = vector.load %arg1[%c3, %c0_25, %c0_26] : memref<4x32x32xbf16, #tpu.memory_space<vmem>>, vector<1x32x32xbf16>
    %27 = vector.shape_cast %26 : vector<1x32x32xbf16> to vector<32x32xbf16>
    %cst_27 = arith.constant dense<0.000000e+00> : vector<16x32xf32>
    %28 = tpu.matmul %1, %27, %cst_27 {dimension_numbers = #tpu.dot_dimension_numbers<[1], [0], [0], [1], [0, 0, 1, 1], [], []>} : vector<16x32xbf16>, vector<32x32xbf16>, vector<16x32xf32> -> vector<16x32xf32>
    %c3_28 = arith.constant 3 : index
    %c0_29 = arith.constant 0 : index
    %c0_30 = arith.constant 0 : index
    %29 = vector.load %arg3[%c3_28, %c0_29, %c0_30] : memref<4x1x32xf32, #tpu.memory_space<vmem>>, vector<1x1x32xf32>
    %30 = vector.shape_cast %29 : vector<1x1x32xf32> to vector<1x32xf32>
    %31 = vector.broadcast %30 : vector<1x32xf32> to vector<16x32xf32>
    %32 = arith.addf %28, %31 : vector<16x32xf32>
    %c0_31 = arith.constant 0 : index
    %c0_32 = arith.constant 0 : index
    %33 = vector.load %arg10[%c0_31, %c0_32] : memref<16x32xf32, #tpu.memory_space<vmem>>, vector<16x32xf32>
    tpu.vector_store %arg10[%c0_31, %c0_32], %32 {strides = array<i32>} : memref<16x32xf32, #tpu.memory_space<vmem>>, vector<16x32xf32>,
    %c0_33 = arith.constant 0 : index
    %c0_34 = arith.constant 0 : index
    %c0_35 = arith.constant 0 : index
    %34 = vector.load %arg2[%c0_33, %c0_34, %c0_35] : memref<4x32x32xbf16, #tpu.memory_space<vmem>>, vector<1x32x32xbf16>
    %35 = vector.shape_cast %34 : vector<1x32x32xbf16> to vector<32x32xbf16>
    %c1_36 = arith.constant 1 : index
    %c0_37 = arith.constant 0 : index
    %c0_38 = arith.constant 0 : index
    %36 = vector.load %arg2[%c1_36, %c0_37, %c0_38] : memref<4x32x32xbf16, #tpu.memory_space<vmem>>, vector<1x32x32xbf16>
    %37 = vector.shape_cast %36 : vector<1x32x32xbf16> to vector<32x32xbf16>
    %c2_39 = arith.constant 2 : index
    %c0_40 = arith.constant 0 : index
    %c0_41 = arith.constant 0 : index
    %38 = vector.load %arg2[%c2_39, %c0_40, %c0_41] : memref<4x32x32xbf16, #tpu.memory_space<vmem>>, vector<1x32x32xbf16>
    %39 = vector.shape_cast %38 : vector<1x32x32xbf16> to vector<32x32xbf16>
    %c3_42 = arith.constant 3 : index
    %c0_43 = arith.constant 0 : index
    %c0_44 = arith.constant 0 : index
    %40 = vector.load %arg2[%c3_42, %c0_43, %c0_44] : memref<4x32x32xbf16, #tpu.memory_space<vmem>>, vector<1x32x32xbf16>
    %41 = vector.shape_cast %40 : vector<1x32x32xbf16> to vector<32x32xbf16>
    %cst_45 = arith.constant 0.000000e+00 : f32
    %42 = vector.broadcast %cst_45 : f32 to vector<2x32xf32>
    %cst_46 = arith.constant 0.000000e+00 : f32
    %43 = vector.broadcast %cst_46 : f32 to vector<2x32xf32>
    %44 = arith.truncf %42 : vector<2x32xf32> to vector<2x32xbf16>
    %c0_47 = arith.constant 0 : index
    %c0_48 = arith.constant 0 : index
    %45 = vector.load %arg7[%c0_47, %c0_48] : memref<16x32xf32, #tpu.memory_space<vmem>>, vector<1x32xf32>
    %c8 = arith.constant 8 : index
    %c0_49 = arith.constant 0 : index
    %46 = vector.load %arg7[%c8, %c0_49] : memref<16x32xf32, #tpu.memory_space<vmem>>, vector<1x32xf32>
    %47 = tpu.concatenate %45, %46 in 0 : vector<1x32xf32>, vector<1x32xf32> -> vector<2x32xf32>
    %cst_50 = arith.constant dense<0.000000e+00> : vector<2x32xf32>
    %48 = tpu.matmul %44, %35, %cst_50 {dimension_numbers = #tpu.dot_dimension_numbers<[1], [0], [0], [1], [0, 0, 1, 1], [], []>} : vector<2x32xbf16>, vector<32x32xbf16>, vector<2x32xf32> -> vector<2x32xf32>
    %49 = arith.addf %47, %48 : vector<2x32xf32>
    %c0_51 = arith.constant 0 : index
    %c0_52 = arith.constant 0 : index
    %50 = vector.load %arg8[%c0_51, %c0_52] : memref<16x32xf32, #tpu.memory_space<vmem>>, vector<1x32xf32>
    %c8_53 = arith.constant 8 : index
    %c0_54 = arith.constant 0 : index
    %51 = vector.load %arg8[%c8_53, %c0_54] : memref<16x32xf32, #tpu.memory_space<vmem>>, vector<1x32xf32>
    %52 = tpu.concatenate %50, %51 in 0 : vector<1x32xf32>, vector<1x32xf32> -> vector<2x32xf32>
    %cst_55 = arith.constant dense<0.000000e+00> : vector<2x32xf32>
    %53 = tpu.matmul %44, %37, %cst_55 {dimension_numbers = #tpu.dot_dimension_numbers<[1], [0], [0], [1], [0, 0, 1, 1], [], []>} : vector<2x32xbf16>, vector<32x32xbf16>, vector<2x32xf32> -> vector<2x32xf32>
    %54 = arith.addf %52, %53 : vector<2x32xf32>
    %c0_56 = arith.constant 0 : index
    %c0_57 = arith.constant 0 : index
    %55 = vector.load %arg9[%c0_56, %c0_57] : memref<16x32xf32, #tpu.memory_space<vmem>>, vector<1x32xf32>
    %c8_58 = arith.constant 8 : index
    %c0_59 = arith.constant 0 : index
    %56 = vector.load %arg9[%c8_58, %c0_59] : memref<16x32xf32, #tpu.memory_space<vmem>>, vector<1x32xf32>
    %57 = tpu.concatenate %55, %56 in 0 : vector<1x32xf32>, vector<1x32xf32> -> vector<2x32xf32>
    %cst_60 = arith.constant dense<0.000000e+00> : vector<2x32xf32>
    %58 = tpu.matmul %44, %39, %cst_60 {dimension_numbers = #tpu.dot_dimension_numbers<[1], [0], [0], [1], [0, 0, 1, 1], [], []>} : vector<2x32xbf16>, vector<32x32xbf16>, vector<2x32xf32> -> vector<2x32xf32>
    %59 = arith.addf %57, %58 : vector<2x32xf32>
    %c0_61 = arith.constant 0 : index
    %c0_62 = arith.constant 0 : index
    %60 = vector.load %arg10[%c0_61, %c0_62] : memref<16x32xf32, #tpu.memory_space<vmem>>, vector<1x32xf32>
    %c8_63 = arith.constant 8 : index
    %c0_64 = arith.constant 0 : index
    %61 = vector.load %arg10[%c8_63, %c0_64] : memref<16x32xf32, #tpu.memory_space<vmem>>, vector<1x32xf32>
    %62 = tpu.concatenate %60, %61 in 0 : vector<1x32xf32>, vector<1x32xf32> -> vector<2x32xf32>
    %cst_65 = arith.constant dense<0.000000e+00> : vector<2x32xf32>
    %63 = tpu.matmul %44, %41, %cst_65 {dimension_numbers = #tpu.dot_dimension_numbers<[1], [0], [0], [1], [0, 0, 1, 1], [], []>} : vector<2x32xbf16>, vector<32x32xbf16>, vector<2x32xf32> -> vector<2x32xf32>
    %64 = arith.addf %62, %63 : vector<2x32xf32>
    %65 = arith.negf %49 : vector<2x32xf32>
    %66 = math.exp %65 : vector<2x32xf32>
    %cst_66 = arith.constant 1.000000e+00 : f32
    %67 = vector.broadcast %cst_66 : f32 to vector<2x32xf32>
    %68 = arith.addf %67, %66 : vector<2x32xf32>
    %69 = arith.divf %67, %68 : vector<2x32xf32>
    %70 = arith.negf %54 : vector<2x32xf32>
    %71 = math.exp %70 : vector<2x32xf32>
    %cst_67 = arith.constant 1.000000e+00 : f32
    %72 = vector.broadcast %cst_67 : f32 to vector<2x32xf32>
    %73 = arith.addf %72, %71 : vector<2x32xf32>
    %74 = arith.divf %72, %73 : vector<2x32xf32>
    %75 = math.tanh %59 : vector<2x32xf32>
    %76 = arith.negf %64 : vector<2x32xf32>
    %77 = math.exp %76 : vector<2x32xf32>
    %cst_68 = arith.constant 1.000000e+00 : f32
    %78 = vector.broadcast %cst_68 : f32 to vector<2x32xf32>
    %79 = arith.addf %78, %77 : vector<2x32xf32>
    %80 = arith.divf %78, %79 : vector<2x32xf32>
    %81 = arith.mulf %74, %43 : vector<2x32xf32>
    %82 = arith.mulf %69, %75 : vector<2x32xf32>
    %83 = arith.addf %81, %82 : vector<2x32xf32>
    %84 = math.tanh %83 : vector<2x32xf32>
    %85 = arith.mulf %80, %84 : vector<2x32xf32>
    %86 = vector.extract_strided_slice %85 {offsets = [0, 0], sizes = [1, 32], strides = [1, 1]} : vector<2x32xf32> to vector<1x32xf32>
    %c0_69 = arith.constant 0 : index
    %c0_70 = arith.constant 0 : index
    %87 = vector.load %arg11[%c0_69, %c0_70] : memref<16x32xf32, #tpu.memory_space<vmem>>, vector<1x32xf32>
    tpu.vector_store %arg11[%c0_69, %c0_70], %86 {strides = array<i32>} : memref<16x32xf32, #tpu.memory_space<vmem>>, vector<1x32xf32>,
    %88 = vector.extract_strided_slice %85 {offsets = [1, 0], sizes = [1, 32], strides = [1, 1]} : vector<2x32xf32> to vector<1x32xf32>
    %c8_71 = arith.constant 8 : index
    %c0_72 = arith.constant 0 : index
    %89 = vector.load %arg11[%c8_71, %c0_72] : memref<16x32xf32, #tpu.memory_space<vmem>>, vector<1x32xf32>
    tpu.vector_store %arg11[%c8_71, %c0_72], %88 {strides = array<i32>} : memref<16x32xf32, #tpu.memory_space<vmem>>, vector<1x32xf32>,
    %90 = arith.truncf %85 : vector<2x32xf32> to vector<2x32xbf16>
    %c1_73 = arith.constant 1 : index
    %c0_74 = arith.constant 0 : index
    %91 = vector.load %arg7[%c1_73, %c0_74] : memref<16x32xf32, #tpu.memory_space<vmem>>, vector<1x32xf32>
    %c9 = arith.constant 9 : index
    %c0_75 = arith.constant 0 : index
    %92 = vector.load %arg7[%c9, %c0_75] : memref<16x32xf32, #tpu.memory_space<vmem>>, vector<1x32xf32>
    %93 = tpu.concatenate %91, %92 in 0 : vector<1x32xf32>, vector<1x32xf32> -> vector<2x32xf32>
    %cst_76 = arith.constant dense<0.000000e+00> : vector<2x32xf32>
    %94 = tpu.matmul %90, %35, %cst_76 {dimension_numbers = #tpu.dot_dimension_numbers<[1], [0], [0], [1], [0, 0, 1, 1], [], []>} : vector<2x32xbf16>, vector<32x32xbf16>, vector<2x32xf32> -> vector<2x32xf32>
    %95 = arith.addf %93, %94 : vector<2x32xf32>
    %c1_77 = arith.constant 1 : index
    %c0_78 = arith.constant 0 : index
    %96 = vector.load %arg8[%c1_77, %c0_78] : memref<16x32xf32, #tpu.memory_space<vmem>>, vector<1x32xf32>
    %c9_79 = arith.constant 9 : index
    %c0_80 = arith.constant 0 : index
    %97 = vector.load %arg8[%c9_79, %c0_80] : memref<16x32xf32, #tpu.memory_space<vmem>>, vector<1x32xf32>
    %98 = tpu.concatenate %96, %97 in 0 : vector<1x32xf32>, vector<1x32xf32> -> vector<2x32xf32>
    %cst_81 = arith.constant dense<0.000000e+00> : vector<2x32xf32>
    %99 = tpu.matmul %90, %37, %cst_81 {dimension_numbers = #tpu.dot_dimension_numbers<[1], [0], [0], [1], [0, 0, 1, 1], [], []>} : vector<2x32xbf16>, vector<32x32xbf16>, vector<2x32xf32> -> vector<2x32xf32>
    %100 = arith.addf %98, %99 : vector<2x32xf32>
    %c1_82 = arith.constant 1 : index
    %c0_83 = arith.constant 0 : index
    %101 = vector.load %arg9[%c1_82, %c0_83] : memref<16x32xf32, #tpu.memory_space<vmem>>, vector<1x32xf32>
    %c9_84 = arith.constant 9 : index
    %c0_85 = arith.constant 0 : index
    %102 = vector.load %arg9[%c9_84, %c0_85] : memref<16x32xf32, #tpu.memory_space<vmem>>, vector<1x32xf32>
    %103 = tpu.concatenate %101, %102 in 0 : vector<1x32xf32>, vector<1x32xf32> -> vector<2x32xf32>
    %cst_86 = arith.constant dense<0.000000e+00> : vector<2x32xf32>
    %104 = tpu.matmul %90, %39, %cst_86 {dimension_numbers = #tpu.dot_dimension_numbers<[1], [0], [0], [1], [0, 0, 1, 1], [], []>} : vector<2x32xbf16>, vector<32x32xbf16>, vector<2x32xf32> -> vector<2x32xf32>
    %105 = arith.addf %103, %104 : vector<2x32xf32>
    %c1_87 = arith.constant 1 : index
    %c0_88 = arith.constant 0 : index
    %106 = vector.load %arg10[%c1_87, %c0_88] : memref<16x32xf32, #tpu.memory_space<vmem>>, vector<1x32xf32>
    %c9_89 = arith.constant 9 : index
    %c0_90 = arith.constant 0 : index
    %107 = vector.load %arg10[%c9_89, %c0_90] : memref<16x32xf32, #tpu.memory_space<vmem>>, vector<1x32xf32>
    %108 = tpu.concatenate %106, %107 in 0 : vector<1x32xf32>, vector<1x32xf32> -> vector<2x32xf32>
    %cst_91 = arith.constant dense<0.000000e+00> : vector<2x32xf32>
    %109 = tpu.matmul %90, %41, %cst_91 {dimension_numbers = #tpu.dot_dimension_numbers<[1], [0], [0], [1], [0, 0, 1, 1], [], []>} : vector<2x32xbf16>, vector<32x32xbf16>, vector<2x32xf32> -> vector<2x32xf32>
    %110 = arith.addf %108, %109 : vector<2x32xf32>
    %111 = arith.negf %95 : vector<2x32xf32>
    %112 = math.exp %111 : vector<2x32xf32>
    %cst_92 = arith.constant 1.000000e+00 : f32
    %113 = vector.broadcast %cst_92 : f32 to vector<2x32xf32>
    %114 = arith.addf %113, %112 : vector<2x32xf32>
    %115 = arith.divf %113, %114 : vector<2x32xf32>
    %116 = arith.negf %100 : vector<2x32xf32>
    %117 = math.exp %116 : vector<2x32xf32>
    %cst_93 = arith.constant 1.000000e+00 : f32
    %118 = vector.broadcast %cst_93 : f32 to vector<2x32xf32>
    %119 = arith.addf %118, %117 : vector<2x32xf32>
    %120 = arith.divf %118, %119 : vector<2x32xf32>
    %121 = math.tanh %105 : vector<2x32xf32>
    %122 = arith.negf %110 : vector<2x32xf32>
    %123 = math.exp %122 : vector<2x32xf32>
    %cst_94 = arith.constant 1.000000e+00 : f32
    %124 = vector.broadcast %cst_94 : f32 to vector<2x32xf32>
    %125 = arith.addf %124, %123 : vector<2x32xf32>
    %126 = arith.divf %124, %125 : vector<2x32xf32>
    %127 = arith.mulf %120, %83 : vector<2x32xf32>
    %128 = arith.mulf %115, %121 : vector<2x32xf32>
    %129 = arith.addf %127, %128 : vector<2x32xf32>
    %130 = math.tanh %129 : vector<2x32xf32>
    %131 = arith.mulf %126, %130 : vector<2x32xf32>
    %132 = vector.extract_strided_slice %131 {offsets = [0, 0], sizes = [1, 32], strides = [1, 1]} : vector<2x32xf32> to vector<1x32xf32>
    %c1_95 = arith.constant 1 : index
    %c0_96 = arith.constant 0 : index
    %133 = vector.load %arg11[%c1_95, %c0_96] : memref<16x32xf32, #tpu.memory_space<vmem>>, vector<1x32xf32>
    tpu.vector_store %arg11[%c1_95, %c0_96], %132 {strides = array<i32>} : memref<16x32xf32, #tpu.memory_space<vmem>>, vector<1x32xf32>,
    %134 = vector.extract_strided_slice %131 {offsets = [1, 0], sizes = [1, 32], strides = [1, 1]} : vector<2x32xf32> to vector<1x32xf32>
    %c9_97 = arith.constant 9 : index
    %c0_98 = arith.constant 0 : index
    %135 = vector.load %arg11[%c9_97, %c0_98] : memref<16x32xf32, #tpu.memory_space<vmem>>, vector<1x32xf32>
    tpu.vector_store %arg11[%c9_97, %c0_98], %134 {strides = array<i32>} : memref<16x32xf32, #tpu.memory_space<vmem>>, vector<1x32xf32>,
    %136 = arith.truncf %131 : vector<2x32xf32> to vector<2x32xbf16>
    %c2_99 = arith.constant 2 : index
    %c0_100 = arith.constant 0 : index
    %137 = vector.load %arg7[%c2_99, %c0_100] : memref<16x32xf32, #tpu.memory_space<vmem>>, vector<1x32xf32>
    %c10 = arith.constant 10 : index
    %c0_101 = arith.constant 0 : index
    %138 = vector.load %arg7[%c10, %c0_101] : memref<16x32xf32, #tpu.memory_space<vmem>>, vector<1x32xf32>
    %139 = tpu.concatenate %137, %138 in 0 : vector<1x32xf32>, vector<1x32xf32> -> vector<2x32xf32>
    %cst_102 = arith.constant dense<0.000000e+00> : vector<2x32xf32>
    %140 = tpu.matmul %136, %35, %cst_102 {dimension_numbers = #tpu.dot_dimension_numbers<[1], [0], [0], [1], [0, 0, 1, 1], [], []>} : vector<2x32xbf16>, vector<32x32xbf16>, vector<2x32xf32> -> vector<2x32xf32>
    %141 = arith.addf %139, %140 : vector<2x32xf32>
    %c2_103 = arith.constant 2 : index
    %c0_104 = arith.constant 0 : index
    %142 = vector.load %arg8[%c2_103, %c0_104] : memref<16x32xf32, #tpu.memory_space<vmem>>, vector<1x32xf32>
    %c10_105 = arith.constant 10 : index
    %c0_106 = arith.constant 0 : index
    %143 = vector.load %arg8[%c10_105, %c0_106] : memref<16x32xf32, #tpu.memory_space<vmem>>, vector<1x32xf32>
    %144 = tpu.concatenate %142, %143 in 0 : vector<1x32xf32>, vector<1x32xf32> -> vector<2x32xf32>
    %cst_107 = arith.constant dense<0.000000e+00> : vector<2x32xf32>
    %145 = tpu.matmul %136, %37, %cst_107 {dimension_numbers = #tpu.dot_dimension_numbers<[1], [0], [0], [1], [0, 0, 1, 1], [], []>} : vector<2x32xbf16>, vector<32x32xbf16>, vector<2x32xf32> -> vector<2x32xf32>
    %146 = arith.addf %144, %145 : vector<2x32xf32>
    %c2_108 = arith.constant 2 : index
    %c0_109 = arith.constant 0 : index
    %147 = vector.load %arg9[%c2_108, %c0_109] : memref<16x32xf32, #tpu.memory_space<vmem>>, vector<1x32xf32>
    %c10_110 = arith.constant 10 : index
    %c0_111 = arith.constant 0 : index
    %148 = vector.load %arg9[%c10_110, %c0_111] : memref<16x32xf32, #tpu.memory_space<vmem>>, vector<1x32xf32>
    %149 = tpu.concatenate %147, %148 in 0 : vector<1x32xf32>, vector<1x32xf32> -> vector<2x32xf32>
    %cst_112 = arith.constant dense<0.000000e+00> : vector<2x32xf32>
    %150 = tpu.matmul %136, %39, %cst_112 {dimension_numbers = #tpu.dot_dimension_numbers<[1], [0], [0], [1], [0, 0, 1, 1], [], []>} : vector<2x32xbf16>, vector<32x32xbf16>, vector<2x32xf32> -> vector<2x32xf32>
    %151 = arith.addf %149, %150 : vector<2x32xf32>
    %c2_113 = arith.constant 2 : index
    %c0_114 = arith.constant 0 : index
    %152 = vector.load %arg10[%c2_113, %c0_114] : memref<16x32xf32, #tpu.memory_space<vmem>>, vector<1x32xf32>
    %c10_115 = arith.constant 10 : index
    %c0_116 = arith.constant 0 : index
    %153 = vector.load %arg10[%c10_115, %c0_116] : memref<16x32xf32, #tpu.memory_space<vmem>>, vector<1x32xf32>
    %154 = tpu.concatenate %152, %153 in 0 : vector<1x32xf32>, vector<1x32xf32> -> vector<2x32xf32>
    %cst_117 = arith.constant dense<0.000000e+00> : vector<2x32xf32>
    %155 = tpu.matmul %136, %41, %cst_117 {dimension_numbers = #tpu.dot_dimension_numbers<[1], [0], [0], [1], [0, 0, 1, 1], [], []>} : vector<2x32xbf16>, vector<32x32xbf16>, vector<2x32xf32> -> vector<2x32xf32>
    %156 = arith.addf %154, %155 : vector<2x32xf32>
    %157 = arith.negf %141 : vector<2x32xf32>
    %158 = math.exp %157 : vector<2x32xf32>
    %cst_118 = arith.constant 1.000000e+00 : f32
    %159 = vector.broadcast %cst_118 : f32 to vector<2x32xf32>
    %160 = arith.addf %159, %158 : vector<2x32xf32>
    %161 = arith.divf %159, %160 : vector<2x32xf32>
    %162 = arith.negf %146 : vector<2x32xf32>
    %163 = math.exp %162 : vector<2x32xf32>
    %cst_119 = arith.constant 1.000000e+00 : f32
    %164 = vector.broadcast %cst_119 : f32 to vector<2x32xf32>
    %165 = arith.addf %164, %163 : vector<2x32xf32>
    %166 = arith.divf %164, %165 : vector<2x32xf32>
    %167 = math.tanh %151 : vector<2x32xf32>
    %168 = arith.negf %156 : vector<2x32xf32>
    %169 = math.exp %168 : vector<2x32xf32>
    %cst_120 = arith.constant 1.000000e+00 : f32
    %170 = vector.broadcast %cst_120 : f32 to vector<2x32xf32>
    %171 = arith.addf %170, %169 : vector<2x32xf32>
    %172 = arith.divf %170, %171 : vector<2x32xf32>
    %173 = arith.mulf %166, %129 : vector<2x32xf32>
    %174 = arith.mulf %161, %167 : vector<2x32xf32>
    %175 = arith.addf %173, %174 : vector<2x32xf32>
    %176 = math.tanh %175 : vector<2x32xf32>
    %177 = arith.mulf %172, %176 : vector<2x32xf32>
    %178 = vector.extract_strided_slice %177 {offsets = [0, 0], sizes = [1, 32], strides = [1, 1]} : vector<2x32xf32> to vector<1x32xf32>
    %c2_121 = arith.constant 2 : index
    %c0_122 = arith.constant 0 : index
    %179 = vector.load %arg11[%c2_121, %c0_122] : memref<16x32xf32, #tpu.memory_space<vmem>>, vector<1x32xf32>
    tpu.vector_store %arg11[%c2_121, %c0_122], %178 {strides = array<i32>} : memref<16x32xf32, #tpu.memory_space<vmem>>, vector<1x32xf32>,
    %180 = vector.extract_strided_slice %177 {offsets = [1, 0], sizes = [1, 32], strides = [1, 1]} : vector<2x32xf32> to vector<1x32xf32>
    %c10_123 = arith.constant 10 : index
    %c0_124 = arith.constant 0 : index
    %181 = vector.load %arg11[%c10_123, %c0_124] : memref<16x32xf32, #tpu.memory_space<vmem>>, vector<1x32xf32>
    tpu.vector_store %arg11[%c10_123, %c0_124], %180 {strides = array<i32>} : memref<16x32xf32, #tpu.memory_space<vmem>>, vector<1x32xf32>,
    %182 = arith.truncf %177 : vector<2x32xf32> to vector<2x32xbf16>
    %c3_125 = arith.constant 3 : index
    %c0_126 = arith.constant 0 : index
    %183 = vector.load %arg7[%c3_125, %c0_126] : memref<16x32xf32, #tpu.memory_space<vmem>>, vector<1x32xf32>
    %c11 = arith.constant 11 : index
    %c0_127 = arith.constant 0 : index
    %184 = vector.load %arg7[%c11, %c0_127] : memref<16x32xf32, #tpu.memory_space<vmem>>, vector<1x32xf32>
    %185 = tpu.concatenate %183, %184 in 0 : vector<1x32xf32>, vector<1x32xf32> -> vector<2x32xf32>
    %cst_128 = arith.constant dense<0.000000e+00> : vector<2x32xf32>
    %186 = tpu.matmul %182, %35, %cst_128 {dimension_numbers = #tpu.dot_dimension_numbers<[1], [0], [0], [1], [0, 0, 1, 1], [], []>} : vector<2x32xbf16>, vector<32x32xbf16>, vector<2x32xf32> -> vector<2x32xf32>
    %187 = arith.addf %185, %186 : vector<2x32xf32>
    %c3_129 = arith.constant 3 : index
    %c0_130 = arith.constant 0 : index
    %188 = vector.load %arg8[%c3_129, %c0_130] : memref<16x32xf32, #tpu.memory_space<vmem>>, vector<1x32xf32>
    %c11_131 = arith.constant 11 : index
    %c0_132 = arith.constant 0 : index
    %189 = vector.load %arg8[%c11_131, %c0_132] : memref<16x32xf32, #tpu.memory_space<vmem>>, vector<1x32xf32>
    %190 = tpu.concatenate %188, %189 in 0 : vector<1x32xf32>, vector<1x32xf32> -> vector<2x32xf32>
    %cst_133 = arith.constant dense<0.000000e+00> : vector<2x32xf32>
    %191 = tpu.matmul %182, %37, %cst_133 {dimension_numbers = #tpu.dot_dimension_numbers<[1], [0], [0], [1], [0, 0, 1, 1], [], []>} : vector<2x32xbf16>, vector<32x32xbf16>, vector<2x32xf32> -> vector<2x32xf32>
    %192 = arith.addf %190, %191 : vector<2x32xf32>
    %c3_134 = arith.constant 3 : index
    %c0_135 = arith.constant 0 : index
    %193 = vector.load %arg9[%c3_134, %c0_135] : memref<16x32xf32, #tpu.memory_space<vmem>>, vector<1x32xf32>
    %c11_136 = arith.constant 11 : index
    %c0_137 = arith.constant 0 : index
    %194 = vector.load %arg9[%c11_136, %c0_137] : memref<16x32xf32, #tpu.memory_space<vmem>>, vector<1x32xf32>
    %195 = tpu.concatenate %193, %194 in 0 : vector<1x32xf32>, vector<1x32xf32> -> vector<2x32xf32>
    %cst_138 = arith.constant dense<0.000000e+00> : vector<2x32xf32>
    %196 = tpu.matmul %182, %39, %cst_138 {dimension_numbers = #tpu.dot_dimension_numbers<[1], [0], [0], [1], [0, 0, 1, 1], [], []>} : vector<2x32xbf16>, vector<32x32xbf16>, vector<2x32xf32> -> vector<2x32xf32>
    %197 = arith.addf %195, %196 : vector<2x32xf32>
    %c3_139 = arith.constant 3 : index
    %c0_140 = arith.constant 0 : index
    %198 = vector.load %arg10[%c3_139, %c0_140] : memref<16x32xf32, #tpu.memory_space<vmem>>, vector<1x32xf32>
    %c11_141 = arith.constant 11 : index
    %c0_142 = arith.constant 0 : index
    %199 = vector.load %arg10[%c11_141, %c0_142] : memref<16x32xf32, #tpu.memory_space<vmem>>, vector<1x32xf32>
    %200 = tpu.concatenate %198, %199 in 0 : vector<1x32xf32>, vector<1x32xf32> -> vector<2x32xf32>
    %cst_143 = arith.constant dense<0.000000e+00> : vector<2x32xf32>
    %201 = tpu.matmul %182, %41, %cst_143 {dimension_numbers = #tpu.dot_dimension_numbers<[1], [0], [0], [1], [0, 0, 1, 1], [], []>} : vector<2x32xbf16>, vector<32x32xbf16>, vector<2x32xf32> -> vector<2x32xf32>
    %202 = arith.addf %200, %201 : vector<2x32xf32>
    %203 = arith.negf %187 : vector<2x32xf32>
    %204 = math.exp %203 : vector<2x32xf32>
    %cst_144 = arith.constant 1.000000e+00 : f32
    %205 = vector.broadcast %cst_144 : f32 to vector<2x32xf32>
    %206 = arith.addf %205, %204 : vector<2x32xf32>
    %207 = arith.divf %205, %206 : vector<2x32xf32>
    %208 = arith.negf %192 : vector<2x32xf32>
    %209 = math.exp %208 : vector<2x32xf32>
    %cst_145 = arith.constant 1.000000e+00 : f32
    %210 = vector.broadcast %cst_145 : f32 to vector<2x32xf32>
    %211 = arith.addf %210, %209 : vector<2x32xf32>
    %212 = arith.divf %210, %211 : vector<2x32xf32>
    %213 = math.tanh %197 : vector<2x32xf32>
    %214 = arith.negf %202 : vector<2x32xf32>
    %215 = math.exp %214 : vector<2x32xf32>
    %cst_146 = arith.constant 1.000000e+00 : f32
    %216 = vector.broadcast %cst_146 : f32 to vector<2x32xf32>
    %217 = arith.addf %216, %215 : vector<2x32xf32>
    %218 = arith.divf %216, %217 : vector<2x32xf32>
    %219 = arith.mulf %212, %175 : vector<2x32xf32>
    %220 = arith.mulf %207, %213 : vector<2x32xf32>
    %221 = arith.addf %219, %220 : vector<2x32xf32>
    %222 = math.tanh %221 : vector<2x32xf32>
    %223 = arith.mulf %218, %222 : vector<2x32xf32>
    %224 = vector.extract_strided_slice %223 {offsets = [0, 0], sizes = [1, 32], strides = [1, 1]} : vector<2x32xf32> to vector<1x32xf32>
    %c3_147 = arith.constant 3 : index
    %c0_148 = arith.constant 0 : index
    %225 = vector.load %arg11[%c3_147, %c0_148] : memref<16x32xf32, #tpu.memory_space<vmem>>, vector<1x32xf32>
    tpu.vector_store %arg11[%c3_147, %c0_148], %224 {strides = array<i32>} : memref<16x32xf32, #tpu.memory_space<vmem>>, vector<1x32xf32>,
    %226 = vector.extract_strided_slice %223 {offsets = [1, 0], sizes = [1, 32], strides = [1, 1]} : vector<2x32xf32> to vector<1x32xf32>
    %c11_149 = arith.constant 11 : index
    %c0_150 = arith.constant 0 : index
    %227 = vector.load %arg11[%c11_149, %c0_150] : memref<16x32xf32, #tpu.memory_space<vmem>>, vector<1x32xf32>
    tpu.vector_store %arg11[%c11_149, %c0_150], %226 {strides = array<i32>} : memref<16x32xf32, #tpu.memory_space<vmem>>, vector<1x32xf32>,
    %228 = arith.truncf %223 : vector<2x32xf32> to vector<2x32xbf16>
    %c4 = arith.constant 4 : index
    %c0_151 = arith.constant 0 : index
    %229 = vector.load %arg7[%c4, %c0_151] : memref<16x32xf32, #tpu.memory_space<vmem>>, vector<1x32xf32>
    %c12 = arith.constant 12 : index
    %c0_152 = arith.constant 0 : index
    %230 = vector.load %arg7[%c12, %c0_152] : memref<16x32xf32, #tpu.memory_space<vmem>>, vector<1x32xf32>
    %231 = tpu.concatenate %229, %230 in 0 : vector<1x32xf32>, vector<1x32xf32> -> vector<2x32xf32>
    %cst_153 = arith.constant dense<0.000000e+00> : vector<2x32xf32>
    %232 = tpu.matmul %228, %35, %cst_153 {dimension_numbers = #tpu.dot_dimension_numbers<[1], [0], [0], [1], [0, 0, 1, 1], [], []>} : vector<2x32xbf16>, vector<32x32xbf16>, vector<2x32xf32> -> vector<2x32xf32>
    %233 = arith.addf %231, %232 : vector<2x32xf32>
    %c4_154 = arith.constant 4 : index
    %c0_155 = arith.constant 0 : index
    %234 = vector.load %arg8[%c4_154, %c0_155] : memref<16x32xf32, #tpu.memory_space<vmem>>, vector<1x32xf32>
    %c12_156 = arith.constant 12 : index
    %c0_157 = arith.constant 0 : index
    %235 = vector.load %arg8[%c12_156, %c0_157] : memref<16x32xf32, #tpu.memory_space<vmem>>, vector<1x32xf32>
    %236 = tpu.concatenate %234, %235 in 0 : vector<1x32xf32>, vector<1x32xf32> -> vector<2x32xf32>
    %cst_158 = arith.constant dense<0.000000e+00> : vector<2x32xf32>
    %237 = tpu.matmul %228, %37, %cst_158 {dimension_numbers = #tpu.dot_dimension_numbers<[1], [0], [0], [1], [0, 0, 1, 1], [], []>} : vector<2x32xbf16>, vector<32x32xbf16>, vector<2x32xf32> -> vector<2x32xf32>
    %238 = arith.addf %236, %237 : vector<2x32xf32>
    %c4_159 = arith.constant 4 : index
    %c0_160 = arith.constant 0 : index
    %239 = vector.load %arg9[%c4_159, %c0_160] : memref<16x32xf32, #tpu.memory_space<vmem>>, vector<1x32xf32>
    %c12_161 = arith.constant 12 : index
    %c0_162 = arith.constant 0 : index
    %240 = vector.load %arg9[%c12_161, %c0_162] : memref<16x32xf32, #tpu.memory_space<vmem>>, vector<1x32xf32>
    %241 = tpu.concatenate %239, %240 in 0 : vector<1x32xf32>, vector<1x32xf32> -> vector<2x32xf32>
    %cst_163 = arith.constant dense<0.000000e+00> : vector<2x32xf32>
    %242 = tpu.matmul %228, %39, %cst_163 {dimension_numbers = #tpu.dot_dimension_numbers<[1], [0], [0], [1], [0, 0, 1, 1], [], []>} : vector<2x32xbf16>, vector<32x32xbf16>, vector<2x32xf32> -> vector<2x32xf32>
    %243 = arith.addf %241, %242 : vector<2x32xf32>
    %c4_164 = arith.constant 4 : index
    %c0_165 = arith.constant 0 : index
    %244 = vector.load %arg10[%c4_164, %c0_165] : memref<16x32xf32, #tpu.memory_space<vmem>>, vector<1x32xf32>
    %c12_166 = arith.constant 12 : index
    %c0_167 = arith.constant 0 : index
    %245 = vector.load %arg10[%c12_166, %c0_167] : memref<16x32xf32, #tpu.memory_space<vmem>>, vector<1x32xf32>
    %246 = tpu.concatenate %244, %245 in 0 : vector<1x32xf32>, vector<1x32xf32> -> vector<2x32xf32>
    %cst_168 = arith.constant dense<0.000000e+00> : vector<2x32xf32>
    %247 = tpu.matmul %228, %41, %cst_168 {dimension_numbers = #tpu.dot_dimension_numbers<[1], [0], [0], [1], [0, 0, 1, 1], [], []>} : vector<2x32xbf16>, vector<32x32xbf16>, vector<2x32xf32> -> vector<2x32xf32>
    %248 = arith.addf %246, %247 : vector<2x32xf32>
    %249 = arith.negf %233 : vector<2x32xf32>
    %250 = math.exp %249 : vector<2x32xf32>
    %cst_169 = arith.constant 1.000000e+00 : f32
    %251 = vector.broadcast %cst_169 : f32 to vector<2x32xf32>
    %252 = arith.addf %251, %250 : vector<2x32xf32>
    %253 = arith.divf %251, %252 : vector<2x32xf32>
    %254 = arith.negf %238 : vector<2x32xf32>
    %255 = math.exp %254 : vector<2x32xf32>
    %cst_170 = arith.constant 1.000000e+00 : f32
    %256 = vector.broadcast %cst_170 : f32 to vector<2x32xf32>
    %257 = arith.addf %256, %255 : vector<2x32xf32>
    %258 = arith.divf %256, %257 : vector<2x32xf32>
    %259 = math.tanh %243 : vector<2x32xf32>
    %260 = arith.negf %248 : vector<2x32xf32>
    %261 = math.exp %260 : vector<2x32xf32>
    %cst_171 = arith.constant 1.000000e+00 : f32
    %262 = vector.broadcast %cst_171 : f32 to vector<2x32xf32>
    %263 = arith.addf %262, %261 : vector<2x32xf32>
    %264 = arith.divf %262, %263 : vector<2x32xf32>
    %265 = arith.mulf %258, %221 : vector<2x32xf32>
    %266 = arith.mulf %253, %259 : vector<2x32xf32>
    %267 = arith.addf %265, %266 : vector<2x32xf32>
    %268 = math.tanh %267 : vector<2x32xf32>
    %269 = arith.mulf %264, %268 : vector<2x32xf32>
    %270 = vector.extract_strided_slice %269 {offsets = [0, 0], sizes = [1, 32], strides = [1, 1]} : vector<2x32xf32> to vector<1x32xf32>
    %c4_172 = arith.constant 4 : index
    %c0_173 = arith.constant 0 : index
    %271 = vector.load %arg11[%c4_172, %c0_173] : memref<16x32xf32, #tpu.memory_space<vmem>>, vector<1x32xf32>
    tpu.vector_store %arg11[%c4_172, %c0_173], %270 {strides = array<i32>} : memref<16x32xf32, #tpu.memory_space<vmem>>, vector<1x32xf32>,
    %272 = vector.extract_strided_slice %269 {offsets = [1, 0], sizes = [1, 32], strides = [1, 1]} : vector<2x32xf32> to vector<1x32xf32>
    %c12_174 = arith.constant 12 : index
    %c0_175 = arith.constant 0 : index
    %273 = vector.load %arg11[%c12_174, %c0_175] : memref<16x32xf32, #tpu.memory_space<vmem>>, vector<1x32xf32>
    tpu.vector_store %arg11[%c12_174, %c0_175], %272 {strides = array<i32>} : memref<16x32xf32, #tpu.memory_space<vmem>>, vector<1x32xf32>,
    %274 = arith.truncf %269 : vector<2x32xf32> to vector<2x32xbf16>
    %c5 = arith.constant 5 : index
    %c0_176 = arith.constant 0 : index
    %275 = vector.load %arg7[%c5, %c0_176] : memref<16x32xf32, #tpu.memory_space<vmem>>, vector<1x32xf32>
    %c13 = arith.constant 13 : index
    %c0_177 = arith.constant 0 : index
    %276 = vector.load %arg7[%c13, %c0_177] : memref<16x32xf32, #tpu.memory_space<vmem>>, vector<1x32xf32>
    %277 = tpu.concatenate %275, %276 in 0 : vector<1x32xf32>, vector<1x32xf32> -> vector<2x32xf32>
    %cst_178 = arith.constant dense<0.000000e+00> : vector<2x32xf32>
    %278 = tpu.matmul %274, %35, %cst_178 {dimension_numbers = #tpu.dot_dimension_numbers<[1], [0], [0], [1], [0, 0, 1, 1], [], []>} : vector<2x32xbf16>, vector<32x32xbf16>, vector<2x32xf32> -> vector<2x32xf32>
    %279 = arith.addf %277, %278 : vector<2x32xf32>
    %c5_179 = arith.constant 5 : index
    %c0_180 = arith.constant 0 : index
    %280 = vector.load %arg8[%c5_179, %c0_180] : memref<16x32xf32, #tpu.memory_space<vmem>>, vector<1x32xf32>
    %c13_181 = arith.constant 13 : index
    %c0_182 = arith.constant 0 : index
    %281 = vector.load %arg8[%c13_181, %c0_182] : memref<16x32xf32, #tpu.memory_space<vmem>>, vector<1x32xf32>
    %282 = tpu.concatenate %280, %281 in 0 : vector<1x32xf32>, vector<1x32xf32> -> vector<2x32xf32>
    %cst_183 = arith.constant dense<0.000000e+00> : vector<2x32xf32>
    %283 = tpu.matmul %274, %37, %cst_183 {dimension_numbers = #tpu.dot_dimension_numbers<[1], [0], [0], [1], [0, 0, 1, 1], [], []>} : vector<2x32xbf16>, vector<32x32xbf16>, vector<2x32xf32> -> vector<2x32xf32>
    %284 = arith.addf %282, %283 : vector<2x32xf32>
    %c5_184 = arith.constant 5 : index
    %c0_185 = arith.constant 0 : index
    %285 = vector.load %arg9[%c5_184, %c0_185] : memref<16x32xf32, #tpu.memory_space<vmem>>, vector<1x32xf32>
    %c13_186 = arith.constant 13 : index
    %c0_187 = arith.constant 0 : index
    %286 = vector.load %arg9[%c13_186, %c0_187] : memref<16x32xf32, #tpu.memory_space<vmem>>, vector<1x32xf32>
    %287 = tpu.concatenate %285, %286 in 0 : vector<1x32xf32>, vector<1x32xf32> -> vector<2x32xf32>
    %cst_188 = arith.constant dense<0.000000e+00> : vector<2x32xf32>
    %288 = tpu.matmul %274, %39, %cst_188 {dimension_numbers = #tpu.dot_dimension_numbers<[1], [0], [0], [1], [0, 0, 1, 1], [], []>} : vector<2x32xbf16>, vector<32x32xbf16>, vector<2x32xf32> -> vector<2x32xf32>
    %289 = arith.addf %287, %288 : vector<2x32xf32>
    %c5_189 = arith.constant 5 : index
    %c0_190 = arith.constant 0 : index
    %290 = vector.load %arg10[%c5_189, %c0_190] : memref<16x32xf32, #tpu.memory_space<vmem>>, vector<1x32xf32>
    %c13_191 = arith.constant 13 : index
    %c0_192 = arith.constant 0 : index
    %291 = vector.load %arg10[%c13_191, %c0_192] : memref<16x32xf32, #tpu.memory_space<vmem>>, vector<1x32xf32>
    %292 = tpu.concatenate %290, %291 in 0 : vector<1x32xf32>, vector<1x32xf32> -> vector<2x32xf32>
    %cst_193 = arith.constant dense<0.000000e+00> : vector<2x32xf32>
    %293 = tpu.matmul %274, %41, %cst_193 {dimension_numbers = #tpu.dot_dimension_numbers<[1], [0], [0], [1], [0, 0, 1, 1], [], []>} : vector<2x32xbf16>, vector<32x32xbf16>, vector<2x32xf32> -> vector<2x32xf32>
    %294 = arith.addf %292, %293 : vector<2x32xf32>
    %295 = arith.negf %279 : vector<2x32xf32>
    %296 = math.exp %295 : vector<2x32xf32>
    %cst_194 = arith.constant 1.000000e+00 : f32
    %297 = vector.broadcast %cst_194 : f32 to vector<2x32xf32>
    %298 = arith.addf %297, %296 : vector<2x32xf32>
    %299 = arith.divf %297, %298 : vector<2x32xf32>
    %300 = arith.negf %284 : vector<2x32xf32>
    %301 = math.exp %300 : vector<2x32xf32>
    %cst_195 = arith.constant 1.000000e+00 : f32
    %302 = vector.broadcast %cst_195 : f32 to vector<2x32xf32>
    %303 = arith.addf %302, %301 : vector<2x32xf32>
    %304 = arith.divf %302, %303 : vector<2x32xf32>
    %305 = math.tanh %289 : vector<2x32xf32>
    %306 = arith.negf %294 : vector<2x32xf32>
    %307 = math.exp %306 : vector<2x32xf32>
    %cst_196 = arith.constant 1.000000e+00 : f32
    %308 = vector.broadcast %cst_196 : f32 to vector<2x32xf32>
    %309 = arith.addf %308, %307 : vector<2x32xf32>
    %310 = arith.divf %308, %309 : vector<2x32xf32>
    %311 = arith.mulf %304, %267 : vector<2x32xf32>
    %312 = arith.mulf %299, %305 : vector<2x32xf32>
    %313 = arith.addf %311, %312 : vector<2x32xf32>
    %314 = math.tanh %313 : vector<2x32xf32>
    %315 = arith.mulf %310, %314 : vector<2x32xf32>
    %316 = vector.extract_strided_slice %315 {offsets = [0, 0], sizes = [1, 32], strides = [1, 1]} : vector<2x32xf32> to vector<1x32xf32>
    %c5_197 = arith.constant 5 : index
    %c0_198 = arith.constant 0 : index
    %317 = vector.load %arg11[%c5_197, %c0_198] : memref<16x32xf32, #tpu.memory_space<vmem>>, vector<1x32xf32>
    tpu.vector_store %arg11[%c5_197, %c0_198], %316 {strides = array<i32>} : memref<16x32xf32, #tpu.memory_space<vmem>>, vector<1x32xf32>,
    %318 = vector.extract_strided_slice %315 {offsets = [1, 0], sizes = [1, 32], strides = [1, 1]} : vector<2x32xf32> to vector<1x32xf32>
    %c13_199 = arith.constant 13 : index
    %c0_200 = arith.constant 0 : index
    %319 = vector.load %arg11[%c13_199, %c0_200] : memref<16x32xf32, #tpu.memory_space<vmem>>, vector<1x32xf32>
    tpu.vector_store %arg11[%c13_199, %c0_200], %318 {strides = array<i32>} : memref<16x32xf32, #tpu.memory_space<vmem>>, vector<1x32xf32>,
    %320 = arith.truncf %315 : vector<2x32xf32> to vector<2x32xbf16>
    %c6 = arith.constant 6 : index
    %c0_201 = arith.constant 0 : index
    %321 = vector.load %arg7[%c6, %c0_201] : memref<16x32xf32, #tpu.memory_space<vmem>>, vector<1x32xf32>
    %c14 = arith.constant 14 : index
    %c0_202 = arith.constant 0 : index
    %322 = vector.load %arg7[%c14, %c0_202] : memref<16x32xf32, #tpu.memory_space<vmem>>, vector<1x32xf32>
    %323 = tpu.concatenate %321, %322 in 0 : vector<1x32xf32>, vector<1x32xf32> -> vector<2x32xf32>
    %cst_203 = arith.constant dense<0.000000e+00> : vector<2x32xf32>
    %324 = tpu.matmul %320, %35, %cst_203 {dimension_numbers = #tpu.dot_dimension_numbers<[1], [0], [0], [1], [0, 0, 1, 1], [], []>} : vector<2x32xbf16>, vector<32x32xbf16>, vector<2x32xf32> -> vector<2x32xf32>
    %325 = arith.addf %323, %324 : vector<2x32xf32>
    %c6_204 = arith.constant 6 : index
    %c0_205 = arith.constant 0 : index
    %326 = vector.load %arg8[%c6_204, %c0_205] : memref<16x32xf32, #tpu.memory_space<vmem>>, vector<1x32xf32>
    %c14_206 = arith.constant 14 : index
    %c0_207 = arith.constant 0 : index
    %327 = vector.load %arg8[%c14_206, %c0_207] : memref<16x32xf32, #tpu.memory_space<vmem>>, vector<1x32xf32>
    %328 = tpu.concatenate %326, %327 in 0 : vector<1x32xf32>, vector<1x32xf32> -> vector<2x32xf32>
    %cst_208 = arith.constant dense<0.000000e+00> : vector<2x32xf32>
    %329 = tpu.matmul %320, %37, %cst_208 {dimension_numbers = #tpu.dot_dimension_numbers<[1], [0], [0], [1], [0, 0, 1, 1], [], []>} : vector<2x32xbf16>, vector<32x32xbf16>, vector<2x32xf32> -> vector<2x32xf32>
    %330 = arith.addf %328, %329 : vector<2x32xf32>
    %c6_209 = arith.constant 6 : index
    %c0_210 = arith.constant 0 : index
    %331 = vector.load %arg9[%c6_209, %c0_210] : memref<16x32xf32, #tpu.memory_space<vmem>>, vector<1x32xf32>
    %c14_211 = arith.constant 14 : index
    %c0_212 = arith.constant 0 : index
    %332 = vector.load %arg9[%c14_211, %c0_212] : memref<16x32xf32, #tpu.memory_space<vmem>>, vector<1x32xf32>
    %333 = tpu.concatenate %331, %332 in 0 : vector<1x32xf32>, vector<1x32xf32> -> vector<2x32xf32>
    %cst_213 = arith.constant dense<0.000000e+00> : vector<2x32xf32>
    %334 = tpu.matmul %320, %39, %cst_213 {dimension_numbers = #tpu.dot_dimension_numbers<[1], [0], [0], [1], [0, 0, 1, 1], [], []>} : vector<2x32xbf16>, vector<32x32xbf16>, vector<2x32xf32> -> vector<2x32xf32>
    %335 = arith.addf %333, %334 : vector<2x32xf32>
    %c6_214 = arith.constant 6 : index
    %c0_215 = arith.constant 0 : index
    %336 = vector.load %arg10[%c6_214, %c0_215] : memref<16x32xf32, #tpu.memory_space<vmem>>, vector<1x32xf32>
    %c14_216 = arith.constant 14 : index
    %c0_217 = arith.constant 0 : index
    %337 = vector.load %arg10[%c14_216, %c0_217] : memref<16x32xf32, #tpu.memory_space<vmem>>, vector<1x32xf32>
    %338 = tpu.concatenate %336, %337 in 0 : vector<1x32xf32>, vector<1x32xf32> -> vector<2x32xf32>
    %cst_218 = arith.constant dense<0.000000e+00> : vector<2x32xf32>
    %339 = tpu.matmul %320, %41, %cst_218 {dimension_numbers = #tpu.dot_dimension_numbers<[1], [0], [0], [1], [0, 0, 1, 1], [], []>} : vector<2x32xbf16>, vector<32x32xbf16>, vector<2x32xf32> -> vector<2x32xf32>
    %340 = arith.addf %338, %339 : vector<2x32xf32>
    %341 = arith.negf %325 : vector<2x32xf32>
    %342 = math.exp %341 : vector<2x32xf32>
    %cst_219 = arith.constant 1.000000e+00 : f32
    %343 = vector.broadcast %cst_219 : f32 to vector<2x32xf32>
    %344 = arith.addf %343, %342 : vector<2x32xf32>
    %345 = arith.divf %343, %344 : vector<2x32xf32>
    %346 = arith.negf %330 : vector<2x32xf32>
    %347 = math.exp %346 : vector<2x32xf32>
    %cst_220 = arith.constant 1.000000e+00 : f32
    %348 = vector.broadcast %cst_220 : f32 to vector<2x32xf32>
    %349 = arith.addf %348, %347 : vector<2x32xf32>
    %350 = arith.divf %348, %349 : vector<2x32xf32>
    %351 = math.tanh %335 : vector<2x32xf32>
    %352 = arith.negf %340 : vector<2x32xf32>
    %353 = math.exp %352 : vector<2x32xf32>
    %cst_221 = arith.constant 1.000000e+00 : f32
    %354 = vector.broadcast %cst_221 : f32 to vector<2x32xf32>
    %355 = arith.addf %354, %353 : vector<2x32xf32>
    %356 = arith.divf %354, %355 : vector<2x32xf32>
    %357 = arith.mulf %350, %313 : vector<2x32xf32>
    %358 = arith.mulf %345, %351 : vector<2x32xf32>
    %359 = arith.addf %357, %358 : vector<2x32xf32>
    %360 = math.tanh %359 : vector<2x32xf32>
    %361 = arith.mulf %356, %360 : vector<2x32xf32>
    %362 = vector.extract_strided_slice %361 {offsets = [0, 0], sizes = [1, 32], strides = [1, 1]} : vector<2x32xf32> to vector<1x32xf32>
    %c6_222 = arith.constant 6 : index
    %c0_223 = arith.constant 0 : index
    %363 = vector.load %arg11[%c6_222, %c0_223] : memref<16x32xf32, #tpu.memory_space<vmem>>, vector<1x32xf32>
    tpu.vector_store %arg11[%c6_222, %c0_223], %362 {strides = array<i32>} : memref<16x32xf32, #tpu.memory_space<vmem>>, vector<1x32xf32>,
    %364 = vector.extract_strided_slice %361 {offsets = [1, 0], sizes = [1, 32], strides = [1, 1]} : vector<2x32xf32> to vector<1x32xf32>
    %c14_224 = arith.constant 14 : index
    %c0_225 = arith.constant 0 : index
    %365 = vector.load %arg11[%c14_224, %c0_225] : memref<16x32xf32, #tpu.memory_space<vmem>>, vector<1x32xf32>
    tpu.vector_store %arg11[%c14_224, %c0_225], %364 {strides = array<i32>} : memref<16x32xf32, #tpu.memory_space<vmem>>, vector<1x32xf32>,
    %366 = arith.truncf %361 : vector<2x32xf32> to vector<2x32xbf16>
    %c7 = arith.constant 7 : index
    %c0_226 = arith.constant 0 : index
    %367 = vector.load %arg7[%c7, %c0_226] : memref<16x32xf32, #tpu.memory_space<vmem>>, vector<1x32xf32>
    %c15 = arith.constant 15 : index
    %c0_227 = arith.constant 0 : index
    %368 = vector.load %arg7[%c15, %c0_227] : memref<16x32xf32, #tpu.memory_space<vmem>>, vector<1x32xf32>
    %369 = tpu.concatenate %367, %368 in 0 : vector<1x32xf32>, vector<1x32xf32> -> vector<2x32xf32>
    %cst_228 = arith.constant dense<0.000000e+00> : vector<2x32xf32>
    %370 = tpu.matmul %366, %35, %cst_228 {dimension_numbers = #tpu.dot_dimension_numbers<[1], [0], [0], [1], [0, 0, 1, 1], [], []>} : vector<2x32xbf16>, vector<32x32xbf16>, vector<2x32xf32> -> vector<2x32xf32>
    %371 = arith.addf %369, %370 : vector<2x32xf32>
    %c7_229 = arith.constant 7 : index
    %c0_230 = arith.constant 0 : index
    %372 = vector.load %arg8[%c7_229, %c0_230] : memref<16x32xf32, #tpu.memory_space<vmem>>, vector<1x32xf32>
    %c15_231 = arith.constant 15 : index
    %c0_232 = arith.constant 0 : index
    %373 = vector.load %arg8[%c15_231, %c0_232] : memref<16x32xf32, #tpu.memory_space<vmem>>, vector<1x32xf32>
    %374 = tpu.concatenate %372, %373 in 0 : vector<1x32xf32>, vector<1x32xf32> -> vector<2x32xf32>
    %cst_233 = arith.constant dense<0.000000e+00> : vector<2x32xf32>
    %375 = tpu.matmul %366, %37, %cst_233 {dimension_numbers = #tpu.dot_dimension_numbers<[1], [0], [0], [1], [0, 0, 1, 1], [], []>} : vector<2x32xbf16>, vector<32x32xbf16>, vector<2x32xf32> -> vector<2x32xf32>
    %376 = arith.addf %374, %375 : vector<2x32xf32>
    %c7_234 = arith.constant 7 : index
    %c0_235 = arith.constant 0 : index
    %377 = vector.load %arg9[%c7_234, %c0_235] : memref<16x32xf32, #tpu.memory_space<vmem>>, vector<1x32xf32>
    %c15_236 = arith.constant 15 : index
    %c0_237 = arith.constant 0 : index
    %378 = vector.load %arg9[%c15_236, %c0_237] : memref<16x32xf32, #tpu.memory_space<vmem>>, vector<1x32xf32>
    %379 = tpu.concatenate %377, %378 in 0 : vector<1x32xf32>, vector<1x32xf32> -> vector<2x32xf32>
    %cst_238 = arith.constant dense<0.000000e+00> : vector<2x32xf32>
    %380 = tpu.matmul %366, %39, %cst_238 {dimension_numbers = #tpu.dot_dimension_numbers<[1], [0], [0], [1], [0, 0, 1, 1], [], []>} : vector<2x32xbf16>, vector<32x32xbf16>, vector<2x32xf32> -> vector<2x32xf32>
    %381 = arith.addf %379, %380 : vector<2x32xf32>
    %c7_239 = arith.constant 7 : index
    %c0_240 = arith.constant 0 : index
    %382 = vector.load %arg10[%c7_239, %c0_240] : memref<16x32xf32, #tpu.memory_space<vmem>>, vector<1x32xf32>
    %c15_241 = arith.constant 15 : index
    %c0_242 = arith.constant 0 : index
    %383 = vector.load %arg10[%c15_241, %c0_242] : memref<16x32xf32, #tpu.memory_space<vmem>>, vector<1x32xf32>
    %384 = tpu.concatenate %382, %383 in 0 : vector<1x32xf32>, vector<1x32xf32> -> vector<2x32xf32>
    %cst_243 = arith.constant dense<0.000000e+00> : vector<2x32xf32>
    %385 = tpu.matmul %366, %41, %cst_243 {dimension_numbers = #tpu.dot_dimension_numbers<[1], [0], [0], [1], [0, 0, 1, 1], [], []>} : vector<2x32xbf16>, vector<32x32xbf16>, vector<2x32xf32> -> vector<2x32xf32>
    %386 = arith.addf %384, %385 : vector<2x32xf32>
    %387 = arith.negf %371 : vector<2x32xf32>
    %388 = math.exp %387 : vector<2x32xf32>
    %cst_244 = arith.constant 1.000000e+00 : f32
    %389 = vector.broadcast %cst_244 : f32 to vector<2x32xf32>
    %390 = arith.addf %389, %388 : vector<2x32xf32>
    %391 = arith.divf %389, %390 : vector<2x32xf32>
    %392 = arith.negf %376 : vector<2x32xf32>
    %393 = math.exp %392 : vector<2x32xf32>
    %cst_245 = arith.constant 1.000000e+00 : f32
    %394 = vector.broadcast %cst_245 : f32 to vector<2x32xf32>
    %395 = arith.addf %394, %393 : vector<2x32xf32>
    %396 = arith.divf %394, %395 : vector<2x32xf32>
    %397 = math.tanh %381 : vector<2x32xf32>
    %398 = arith.negf %386 : vector<2x32xf32>
    %399 = math.exp %398 : vector<2x32xf32>
    %cst_246 = arith.constant 1.000000e+00 : f32
    %400 = vector.broadcast %cst_246 : f32 to vector<2x32xf32>
    %401 = arith.addf %400, %399 : vector<2x32xf32>
    %402 = arith.divf %400, %401 : vector<2x32xf32>
    %403 = arith.mulf %396, %359 : vector<2x32xf32>
    %404 = arith.mulf %391, %397 : vector<2x32xf32>
    %405 = arith.addf %403, %404 : vector<2x32xf32>
    %406 = math.tanh %405 : vector<2x32xf32>
    %407 = arith.mulf %402, %406 : vector<2x32xf32>
    %408 = vector.extract_strided_slice %407 {offsets = [0, 0], sizes = [1, 32], strides = [1, 1]} : vector<2x32xf32> to vector<1x32xf32>
    %c7_247 = arith.constant 7 : index
    %c0_248 = arith.constant 0 : index
    %409 = vector.load %arg11[%c7_247, %c0_248] : memref<16x32xf32, #tpu.memory_space<vmem>>, vector<1x32xf32>
    tpu.vector_store %arg11[%c7_247, %c0_248], %408 {strides = array<i32>} : memref<16x32xf32, #tpu.memory_space<vmem>>, vector<1x32xf32>,
    %410 = vector.extract_strided_slice %407 {offsets = [1, 0], sizes = [1, 32], strides = [1, 1]} : vector<2x32xf32> to vector<1x32xf32>
    %c15_249 = arith.constant 15 : index
    %c0_250 = arith.constant 0 : index
    %411 = vector.load %arg11[%c15_249, %c0_250] : memref<16x32xf32, #tpu.memory_space<vmem>>, vector<1x32xf32>
    tpu.vector_store %arg11[%c15_249, %c0_250], %410 {strides = array<i32>} : memref<16x32xf32, #tpu.memory_space<vmem>>, vector<1x32xf32>,
    %c0_251 = arith.constant 0 : index
    %c0_252 = arith.constant 0 : index
    %412 = vector.load %arg4[%c0_251, %c0_252] : memref<32x1xbf16, #tpu.memory_space<vmem>>, vector<32x1xbf16>
    %cst_253 = arith.constant dense<0.000000e+00> : vector<16x1xf32>
    %413 = tpu.matmul %1, %412, %cst_253 {dimension_numbers = #tpu.dot_dimension_numbers<[1], [0], [0], [1], [0, 0, 1, 1], [], []>} : vector<16x32xbf16>, vector<32x1xbf16>, vector<16x1xf32> -> vector<16x1xf32>
    %c0_254 = arith.constant 0 : index
    %c0_255 = arith.constant 0 : index
    %414 = vector.load %arg11[%c0_254, %c0_255] : memref<16x32xf32, #tpu.memory_space<vmem>>, vector<16x32xf32>
    %415 = arith.truncf %414 : vector<16x32xf32> to vector<16x32xbf16>
    %c0_256 = arith.constant 0 : index
    %c0_257 = arith.constant 0 : index
    %416 = vector.load %arg5[%c0_256, %c0_257] : memref<32x1xbf16, #tpu.memory_space<vmem>>, vector<32x1xbf16>
    %cst_258 = arith.constant dense<0.000000e+00> : vector<16x1xf32>
    %417 = tpu.matmul %415, %416, %cst_258 {dimension_numbers = #tpu.dot_dimension_numbers<[1], [0], [0], [1], [0, 0, 1, 1], [], []>} : vector<16x32xbf16>, vector<32x1xbf16>, vector<16x1xf32> -> vector<16x1xf32>
    %418 = tpu.concatenate %413, %417 in 1 : vector<16x1xf32>, vector<16x1xf32> -> vector<16x2xf32>
    %c0_259 = arith.constant 0 : index
    %c0_260 = arith.constant 0 : index
    %419 = vector.load %arg6[%c0_259, %c0_260] : memref<16x2xf32, #tpu.memory_space<vmem>>, vector<16x2xf32>
    tpu.vector_store %arg6[%c0_259, %c0_260], %418 {strides = array<i32>} : memref<16x2xf32, #tpu.memory_space<vmem>>, vector<16x2xf32>,
    return
  }
}

</mosaic_0001>

<llo_original>
// kernel: squeeze.2
$region0: #{squeeze.2}
  %s0 = inlined_call_operand.vmem [shape: f32[16], index: 0, kind: input, shape index: {}]
  %s1 = inlined_call_operand.hbm [shape: f32[2,8], index: 1, kind: output, shape index: {}]
  $region1: #{squeeze.2} parent=0
    #allocation0 [shape = 'u8[1024]{0}', space=vmem, size = 0x400, scoped, tag = 'operand span for operand 1']
    #allocation1 [shape = 's32[1]{0}', space=sflag, size = 0x4, scoped, tag = 'scoped memory for squeeze.2']
    #allocation2 [shape = 'u8[4096]{0}', space=vmem, size = 0x1000, scoped, tag = 'scoped mem for output reshape']
    #allocation3 [shape = 'u8[4096]{0}', space=vmem, size = 0x1000, scoped, tag = 'scoped mem for input reshape']
    %2 = vsyncpa [#allocation1], 0
    %s4 = ssub.s32 2, 1
    %v5 = vld [vmem:[%s0] sm:%s4]
    %6 = vst [vmem:[#allocation3] sm:%s4] %v5
    %v7 = vld [vmem:[#allocation3] sm:$0x1]
    %vm8 = vcmask 64512
    %9 = vst.msk [vmem:[#allocation2] sm:$0x1] %vm8, %v7
    %v10 = vld [vmem:[#allocation3] sm:$0x1]
    %11 = vrot.lane.b32.xlu0 %v10, 120
    %v12 = vpop.permute.xlu0 %11
    %vm13 = vcmask 64512
    %s14 = scalar_lea.vmem [#allocation2], 1
    %15 = vst.msk [vmem:[%s14] sm:$0x1] %vm13, %v12
    %s17 = ssub.s32 4, 1
    %v18 = vld [vmem:[#allocation2] sm:%s17]
    %s20 = ssub.s32 4, 1
    %21 = vst [vmem:[#allocation0] sm:%s20] %v18
    %23 = vsyncadd [#allocation1], 0
    %s25 = sshll.u32 [#allocation0], 4
    %s26 = int_to_ptr.vmem [resolvable:$true] %s25
    %s27 = sshll.u32 %s1, 4
    %s28 = int_to_ptr.hbm [resolvable:$true] %s27
    %30 = dma.vmem_to_hbm [thread:$0]  %s26, 32, %s28, [#allocation1]
    %32 = dma.done [#allocation1], 32
    %33 = vsyncpa [#allocation1], 1

// kernel: qabert_forward.4
$region0: #{qabert_forward.4}
  #allocation0 [shape = 'u32[]', space=smem, size = 0x4, offset = 0x4, fixed_abs, tag = 'smem constant byte address 0x4 - core index']
  #allocation1 [shape = 'u32[72,128]{1,0:T(1,128)}', space=vmem, size = 0x9000, scoped, tag = 'internal scratch']
  %s0 = inlined_call_operand.vmem [shape: f32[16,32], index: 0, kind: input, shape index: {}]
  %s1 = inlined_call_operand.vmem [shape: f32[1,32], index: 1, kind: input, shape index: {}]
  %s2 = inlined_call_operand.vmem [shape: f32[1,32], index: 2, kind: input, shape index: {}]
  %s3 = inlined_call_operand.vmem [shape: f32[16,32], index: 3, kind: output, shape index: {}]
  %s4 = sld [smem:[#allocation0]]
  $region22: #{qabert_forward.4} parent=0
    _
  %s6 = ssub.s32 1, %s4
  %s7 = scalar_select 0, %s6, %s4
  // Predicated region
  $region2: #{qabert_forward.4} parent=0 // pred_check
    _
  $region3: #{qabert_forward.4} parent=0 // pred_check_branch
    %9 = sbr.rel (0) target = $region5
  $region4: #{qabert_forward.4} parent=0 // pred_region
    _
  $region5: #{qabert_forward.4} parent=0 // pred_fallthru
    _
  // Predicated region
  $region6: #{qabert_forward.4} parent=0 // pred_check
    _
  $region7: #{qabert_forward.4} parent=0 // pred_check_branch
    %11 = sbr.rel (0) target = $region9
  $region8: #{qabert_forward.4} parent=0 // pred_region
    _
  $region9: #{qabert_forward.4} parent=0 // pred_fallthru
    _
  // Predicated region
  $region10: #{qabert_forward.4} parent=0 // pred_check
    _
  $region11: #{qabert_forward.4} parent=0 // pred_check_branch
    %13 = sbr.rel (0) target = $region13
  $region12: #{qabert_forward.4} parent=0 // pred_region
    _
  $region13: #{qabert_forward.4} parent=0 // pred_fallthru
    _
  %v14 = vld [vmem:[%s0] sm:$0xff]
  %v15 = vld [vmem:[%s0 + $0x8] sm:$0xff]
  %v16 = vld [vmem:[%s1] sm:$0x1]
  %v17 = vld [vmem:[%s2] sm:$0x1]
  %vm18 = vcmask 261120
  %v19 = vsel %vm18, %v14, 0.0
  %20 = vadd.xlane.f32.xlu0 %v19
  %v21 = vpop.xlane.xlu0 %20
  %v22 = vsel %vm18, %v15, 0.0
  %23 = vadd.xlane.f32.xlu0 %v22
  %v24 = vpop.xlane.xlu0 %23
  %v25 = vrcp.pop 32.0
  %v26 = vmul.f32 32.0, %v25
  %v27 = vsub.f32 1.0, %v26
  %v28 = vmul.f32 %v25, %v27
  %v29 = vadd.f32 %v25, %v28
  %vm30 = vweird.f32 %v25
  %v31 = vsel %vm30, %v25, %v29
  %v32 = vmul.f32 %v21, %v31
  %v33 = vmul.f32 %v24, %v31
  %v34 = vsub.f32 %v14, %v32
  %v35 = vsub.f32 %v15, %v33
  %v36 = vmul.f32 %v34, %v34
  %v37 = vmul.f32 %v35, %v35
  %v38 = vsel %vm18, %v36, 0.0
  %39 = vadd.xlane.f32.xlu0 %v38
  %v40 = vpop.xlane.xlu0 %39
  %v41 = vsel %vm18, %v37, 0.0
  %42 = vadd.xlane.f32.xlu0 %v41
  %v43 = vpop.xlane.xlu0 %42
  %v44 = vmul.f32 %v40, %v31
  %v45 = vmul.f32 %v43, %v31
  %v46 = vadd.f32 %v44, 1e-12
  %v47 = vadd.f32 %v45, 1e-12
  %v48 = vrsqrt.pop %v46
  %v49 = vmul.f32 %v48, %v46
  %v50 = vmul.f32 %v49, %v48
  %v51 = vmul.f32 0.5, %v50
  %v52 = vsub.f32 1.5, %v51
  %v53 = vmul.f32 %v48, %v52
  %vm54 = vweird.f32 %v46
  %vm55 = vweird.f32 %v48
  %vm56 = vmor %vm54, %vm55
  %v57 = vsel %vm56, %v48, %v53
  %v58 = vrsqrt.pop %v47
  %v59 = vmul.f32 %v58, %v47
  %v60 = vmul.f32 %v59, %v58
  %v61 = vmul.f32 0.5, %v60
  %v62 = vsub.f32 1.5, %v61
  %v63 = vmul.f32 %v58, %v62
  %vm64 = vweird.f32 %v47
  %vm65 = vweird.f32 %v58
  %vm66 = vmor %vm64, %vm65
  %v67 = vsel %vm66, %v58, %v63
  %v68 = vmul.f32 %v34, %v57
  %v69 = vmul.f32 %v35, %v67
  %v71 = vperm.slane %v16, 0
  %v73 = vmul.f32 %v68, %v71
  %v74 = vmul.f32 %v69, %v71
  %v76 = vperm.slane %v17, 0
  %v78 = vadd.f32 %v73, %v76
  %v79 = vadd.f32 %v74, %v76
  %80 = vst.msk [vmem:[%s3] sm:$0xff] %vm18, %v78
  %81 = vst.msk [vmem:[%s3 + $0x8] sm:$0xff] %vm18, %v79
  // Predicated region
  $region14: #{qabert_forward.4} parent=0 // pred_check
    _
  $region15: #{qabert_forward.4} parent=0 // pred_check_branch
    %83 = sbr.rel (0) target = $region17
  $region16: #{qabert_forward.4} parent=0 // pred_region
    _
  $region17: #{qabert_forward.4} parent=0 // pred_fallthru
    _
  // Predicated region
  $region18: #{qabert_forward.4} parent=0 // pred_check
    _
  $region19: #{qabert_forward.4} parent=0 // pred_check_branch
    %85 = sbr.rel (0) target = $region21
  $region20: #{qabert_forward.4} parent=0 // pred_region
    _
  $region21: #{qabert_forward.4} parent=0 // pred_fallthru
    _

// kernel: qabert_forward.5
$region0: #{qabert_forward.5}
  #allocation0 [shape = 'u32[]', space=smem, size = 0x4, offset = 0x4, fixed_abs, tag = 'smem constant byte address 0x4 - core index']
  #allocation1 [shape = 'u32[72,128]{1,0:T(1,128)}', space=vmem, size = 0x9000, scoped, tag = 'internal scratch']
  %s0 = inlined_call_operand.vmem [shape: f32[16,32], index: 0, kind: input, shape index: {}]
  %s1 = inlined_call_operand.vmem [shape: f32[2,1,8], index: 1, kind: input, shape index: {}]
  %s2 = inlined_call_operand.vmem [shape: bf16[32,96], index: 2, kind: input, shape index: {}]
  %s3 = inlined_call_operand.vmem [shape: f32[1,96], index: 3, kind: input, shape index: {}]
  %s4 = inlined_call_operand.vmem [shape: bf16[32,32], index: 4, kind: input, shape index: {}]
  %s5 = inlined_call_operand.vmem [shape: f32[1,32], index: 5, kind: input, shape index: {}]
  %s6 = inlined_call_operand.vmem [shape: f32[1,32], index: 6, kind: input, shape index: {}]
  %s7 = inlined_call_operand.vmem [shape: f32[1,32], index: 7, kind: input, shape index: {}]
  %s8 = inlined_call_operand.vmem [shape: bf16[32,64], index: 8, kind: input, shape index: {}]
  %s9 = inlined_call_operand.vmem [shape: f32[1,64], index: 9, kind: input, shape index: {}]
  %s10 = inlined_call_operand.vmem [shape: bf16[64,32], index: 10, kind: input, shape index: {}]
  %s11 = inlined_call_operand.vmem [shape: f32[1,32], index: 11, kind: input, shape index: {}]
  %s12 = inlined_call_operand.vmem [shape: f32[1,32], index: 12, kind: input, shape index: {}]
  %s13 = inlined_call_operand.vmem [shape: f32[1,32], index: 13, kind: input, shape index: {}]
  %s14 = inlined_call_operand.vmem [shape: f32[16,32], index: 14, kind: output, shape index: {}]
  %s15 = sld [smem:[#allocation0]]
  $region66: #{qabert_forward.5} parent=0
    _
  %s17 = ssub.s32 1, %s15
  %s18 = scalar_select 0, %s17, %s15
  // Predicated region
  $region2: #{qabert_forward.5} parent=0 // pred_check
    _
  $region3: #{qabert_forward.5} parent=0 // pred_check_branch
    %20 = sbr.rel (0) target = $region5
  $region4: #{qabert_forward.5} parent=0 // pred_region
    _
  $region5: #{qabert_forward.5} parent=0 // pred_fallthru
    _
  // Predicated region
  $region6: #{qabert_forward.5} parent=0 // pred_check
    _
  $region7: #{qabert_forward.5} parent=0 // pred_check_branch
    %22 = sbr.rel (0) target = $region9
  $region8: #{qabert_forward.5} parent=0 // pred_region
    _
  $region9: #{qabert_forward.5} parent=0 // pred_fallthru
    _
  // Predicated region
  $region10: #{qabert_forward.5} parent=0 // pred_check
    _
  $region11: #{qabert_forward.5} parent=0 // pred_check_branch
    %24 = sbr.rel (0) target = $region13
  $region12: #{qabert_forward.5} parent=0 // pred_region
    _
  $region13: #{qabert_forward.5} parent=0 // pred_fallthru
    _
  // Predicated region
  $region14: #{qabert_forward.5} parent=0 // pred_check
    _
  $region15: #{qabert_forward.5} parent=0 // pred_check_branch
    %26 = sbr.rel (0) target = $region17
  $region16: #{qabert_forward.5} parent=0 // pred_region
    _
  $region17: #{qabert_forward.5} parent=0 // pred_fallthru
    _
  // Predicated region
  $region18: #{qabert_forward.5} parent=0 // pred_check
    _
  $region19: #{qabert_forward.5} parent=0 // pred_check_branch
    %28 = sbr.rel (0) target = $region21
  $region20: #{qabert_forward.5} parent=0 // pred_region
    _
  $region21: #{qabert_forward.5} parent=0 // pred_fallthru
    _
  // Predicated region
  $region22: #{qabert_forward.5} parent=0 // pred_check
    _
  $region23: #{qabert_forward.5} parent=0 // pred_check_branch
    %30 = sbr.rel (0) target = $region25
  $region24: #{qabert_forward.5} parent=0 // pred_region
    _
  $region25: #{qabert_forward.5} parent=0 // pred_fallthru
    _
  // Predicated region
  $region26: #{qabert_forward.5} parent=0 // pred_check
    _
  $region27: #{qabert_forward.5} parent=0 // pred_check_branch
    %32 = sbr.rel (0) target = $region29
  $region28: #{qabert_forward.5} parent=0 // pred_region
    _
  $region29: #{qabert_forward.5} parent=0 // pred_fallthru
    _
  // Predicated region
  $region30: #{qabert_forward.5} parent=0 // pred_check
    _
  $region31: #{qabert_forward.5} parent=0 // pred_check_branch
    %34 = sbr.rel (0) target = $region33
  $region32: #{qabert_forward.5} parent=0 // pred_region
    _
  $region33: #{qabert_forward.5} parent=0 // pred_fallthru
    _
  // Predicated region
  $region34: #{qabert_forward.5} parent=0 // pred_check
    _
  $region35: #{qabert_forward.5} parent=0 // pred_check_branch
    %36 = sbr.rel (0) target = $region37
  $region36: #{qabert_forward.5} parent=0 // pred_region
    _
  $region37: #{qabert_forward.5} parent=0 // pred_fallthru
    _
  // Predicated region
  $region38: #{qabert_forward.5} parent=0 // pred_check
    _
  $region39: #{qabert_forward.5} parent=0 // pred_check_branch
    %38 = sbr.rel (0) target = $region41
  $region40: #{qabert_forward.5} parent=0 // pred_region
    _
  $region41: #{qabert_forward.5} parent=0 // pred_fallthru
    _
  // Predicated region
  $region42: #{qabert_forward.5} parent=0 // pred_check
    _
  $region43: #{qabert_forward.5} parent=0 // pred_check_branch
    %40 = sbr.rel (0) target = $region45
  $region44: #{qabert_forward.5} parent=0 // pred_region
    _
  $region45: #{qabert_forward.5} parent=0 // pred_fallthru
    _
  // Predicated region
  $region46: #{qabert_forward.5} parent=0 // pred_check
    _
  $region47: #{qabert_forward.5} parent=0 // pred_check_branch
    %42 = sbr.rel (0) target = $region49
  $region48: #{qabert_forward.5} parent=0 // pred_region
    _
  $region49: #{qabert_forward.5} parent=0 // pred_fallthru
    _
  // Predicated region
  $region50: #{qabert_forward.5} parent=0 // pred_check
    _
  $region51: #{qabert_forward.5} parent=0 // pred_check_branch
    %44 = sbr.rel (0) target = $region53
  $region52: #{qabert_forward.5} parent=0 // pred_region
    _
  $region53: #{qabert_forward.5} parent=0 // pred_fallthru
    _
  // Predicated region
  $region54: #{qabert_forward.5} parent=0 // pred_check
    _
  $region55: #{qabert_forward.5} parent=0 // pred_check_branch
    %46 = sbr.rel (0) target = $region57
  $region56: #{qabert_forward.5} parent=0 // pred_region
    _
  $region57: #{qabert_forward.5} parent=0 // pred_fallthru
    _
  %v48 = vld [vmem:[%s0] sm:$0xff]
  %v49 = vld [vmem:[%s0 + $0x8] sm:$0xff]
  %v50 = vpack.c.bf16 %v49, %v48
  %v51 = vld [vmem:[%s2] sm:$0xf]
  %v52 = vld [vmem:[%s2 + $0x4] sm:$0xf]
  %v53 = vld [vmem:[%s2 + $0x8] sm:$0xf]
  %v54 = vld [vmem:[%s2 + $0xc] sm:$0xf]
  %v55 = vld [vmem:[%s3] sm:$0x1]
  %v57 = vperm.slane %v55, 0
  %v63 = vunpack.c.l.b16 %v51
  %v64 = vunpack.c.l.b16 %v52
  %v65 = vunpack.c.l.b16 %v53
  %v66 = vunpack.c.l.b16 %v54
  %v67 = vpack.c.b16 %v64, %v63
  %v68 = vpack.c.b16 %v66, %v65
  %vm71 = vcmask 261120
  %v73 = vsel %vm71, %v50, 0
  %75 = vmatpush.bf16.msra.mxu0 0
  %76 = vmatpush.bf16.msra.mxu0 0
  %77 = vmatpush.bf16.msra.mxu0 0
  %78 = vmatpush.bf16.msra.mxu0 0
  %79 = vmatpush.bf16.msra.mxu0 0
  %80 = vmatpush.bf16.msra.mxu0 0
  %81 = vmatpush.bf16.msra.mxu0 %v68
  %82 = vmatpush.bf16.msra.mxu0 %v67
  %83 = vmatmul.bf16.gmra.mxu0 %v73
  %v84 = vpop.f32.mrf.mxu0
  %v85 = vadd.f32 %v57, %v84
  %v86 = vpop.f32.mrf.mxu0
  %v87 = vadd.f32 %v57, %v86
  %88 = vdwg.mxu0
  %v89 = vld [vmem:[%s1] sm:$0x1]
  %v90 = vld [vmem:[%s1 + $0x1] sm:$0x1]
  %92 = vrot.lane.b32.xlu0 %v85, 96
  %v93 = vpop.permute.xlu0 %92
  %vm94 = vcmask 64512
  %v95 = vsel %vm94, %v85, 0
  %v97 = vsel %vm94, %v93, 0
  %99 = vmatpush.xpose.msra.mxu0 0.0
  %100 = vmatpush.xpose.msra.mxu0 0.0
  %101 = vmatpush.xpose.msra.mxu0 0.0
  %102 = vmatpush.xpose.msra.mxu0 0.0
  %103 = vmatpush.xpose.msra.mxu0 0.0
  %104 = vmatpush.xpose.msra.mxu0 0.0
  %105 = vmatpush.xpose.msra.mxu0 0.0
  %106 = vmatpush.xpose.msra.mxu0 0.0
  %107 = vmatpush.xpose.msra.mxu0 0.0
  %108 = vmatpush.xpose.msra.mxu0 0.0
  %109 = vmatpush.xpose.msra.mxu0 0.0
  %110 = vmatpush.xpose.msra.mxu0 0.0
  %111 = vmatpush.xpose.msra.mxu0 0.0
  %112 = vmatpush.xpose.msra.mxu0 0.0
  %113 = vmatpush.xpose.msra.mxu0 0.0
  %114 = vmatpush.xpose.msra.mxu0 %v97
  %115 = vmatmul.f32.gmra.mxu0 %v95
  %v116 = vpop.f32.mrf.mxu0
  %v117 = vadd.f32 0.0, %v116
  %118 = vdwg.mxu0
  %120 = vrot.lane.b32.xlu0 %v87, 96
  %v121 = vpop.permute.xlu0 %120
  %v122 = vsel %vm94, %v87, 0
  %v124 = vsel %vm94, %v121, 0
  %126 = vmatpush.xpose.msra.mxu0 0.0
  %127 = vmatpush.xpose.msra.mxu0 0.0
  %128 = vmatpush.xpose.msra.mxu0 0.0
  %129 = vmatpush.xpose.msra.mxu0 0.0
  %130 = vmatpush.xpose.msra.mxu0 0.0
  %131 = vmatpush.xpose.msra.mxu0 0.0
  %132 = vmatpush.xpose.msra.mxu0 0.0
  %133 = vmatpush.xpose.msra.mxu0 0.0
  %134 = vmatpush.xpose.msra.mxu0 0.0
  %135 = vmatpush.xpose.msra.mxu0 0.0
  %136 = vmatpush.xpose.msra.mxu0 0.0
  %137 = vmatpush.xpose.msra.mxu0 0.0
  %138 = vmatpush.xpose.msra.mxu0 0.0
  %139 = vmatpush.xpose.msra.mxu0 0.0
  %140 = vmatpush.xpose.msra.mxu0 0.0
  %141 = vmatpush.xpose.msra.mxu0 %v124
  %142 = vmatmul.f32.gmra.mxu0 %v122
  %v143 = vpop.f32.mrf.mxu0
  %v144 = vadd.f32 0.0, %v143
  %145 = vdwg.mxu0
  %v146 = vmul.f32 %v117, 0.35355338
  %v147 = vmul.f32 %v144, 0.35355338
  %v150 = vperm.slane %v89, 0
  %v151 = vperm.slane %v90, 0
  %v154 = vadd.f32 %v146, %v150
  %v155 = vadd.f32 %v147, %v151
  %v156 = vsel %vm94, %v154, -inf
  %157 = vmax.xlane.f32.xlu0 %v156
  %v158 = vpop.xlane.xlu0 %157
  %v159 = vsel %vm94, %v155, -inf
  %160 = vmax.xlane.f32.xlu0 %v159
  %v161 = vpop.xlane.xlu0 %160
  %v162 = vsub.f32 %v154, %v158
  %v163 = vsub.f32 %v155, %v161
  %v164 = vmul.f32 %v162, 1.442695
  %v165 = vpow.pop %v164
  %v166 = vmul.f32 %v163, 1.442695
  %v167 = vpow.pop %v166
  %v168 = vsel %vm94, %v165, 0.0
  %169 = vadd.xlane.f32.xlu0 %v168
  %v170 = vpop.xlane.xlu0 %169
  %v171 = vsel %vm94, %v167, 0.0
  %172 = vadd.xlane.f32.xlu0 %v171
  %v173 = vpop.xlane.xlu0 %172
  %v174 = vrcp.pop %v170
  %v175 = vrcp.pop %v173
  %v176 = vmul.f32 %v165, %v174
  %v177 = vmul.f32 %v167, %v175
  %178 = vrot.lane.b32.xlu0 %v85, 64
  %v179 = vpop.permute.xlu0 %178
  %v182 = vsel %vm94, %v176, 0
  %184 = vmatpush.msra.mxu0 0.0
  %185 = vmatpush.msra.mxu0 0.0
  %186 = vmatpush.msra.mxu0 0.0
  %187 = vmatpush.msra.mxu0 0.0
  %188 = vmatpush.msra.mxu0 0.0
  %189 = vmatpush.msra.mxu0 0.0
  %190 = vmatpush.msra.mxu0 0.0
  %191 = vmatpush.msra.mxu0 0.0
  %192 = vmatpush.msra.mxu0 0.0
  %193 = vmatpush.msra.mxu0 0.0
  %194 = vmatpush.msra.mxu0 0.0
  %195 = vmatpush.msra.mxu0 0.0
  %196 = vmatpush.msra.mxu0 0.0
  %197 = vmatpush.msra.mxu0 0.0
  %198 = vmatpush.msra.mxu0 0.0
  %199 = vmatpush.msra.mxu0 %v179
  %200 = vmatmul.f32.gmra.mxu0 %v182
  %v201 = vpop.f32.mrf.mxu0
  %v202 = vadd.f32 0.0, %v201
  %203 = vdwg.mxu0
  %204 = vrot.lane.b32.xlu0 %v87, 64
  %v205 = vpop.permute.xlu0 %204
  %v208 = vsel %vm94, %v177, 0
  %210 = vmatpush.msra.mxu0 0.0
  %211 = vmatpush.msra.mxu0 0.0
  %212 = vmatpush.msra.mxu0 0.0
  %213 = vmatpush.msra.mxu0 0.0
  %214 = vmatpush.msra.mxu0 0.0
  %215 = vmatpush.msra.mxu0 0.0
  %216 = vmatpush.msra.mxu0 0.0
  %217 = vmatpush.msra.mxu0 0.0
  %218 = vmatpush.msra.mxu0 0.0
  %219 = vmatpush.msra.mxu0 0.0
  %220 = vmatpush.msra.mxu0 0.0
  %221 = vmatpush.msra.mxu0 0.0
  %222 = vmatpush.msra.mxu0 0.0
  %223 = vmatpush.msra.mxu0 0.0
  %224 = vmatpush.msra.mxu0 0.0
  %225 = vmatpush.msra.mxu0 %v205
  %226 = vmatmul.f32.gmra.mxu0 %v208
  %v227 = vpop.f32.mrf.mxu0
  %v228 = vadd.f32 0.0, %v227
  %229 = vdwg.mxu0
  %230 = vrot.lane.b32.xlu0 %v85, 120
  %v231 = vpop.permute.xlu0 %230
  %232 = vrot.lane.b32.xlu0 %v85, 88
  %v233 = vpop.permute.xlu0 %232
  %v234 = vsel %vm94, %v231, 0
  %v236 = vsel %vm94, %v233, 0
  %238 = vmatpush.xpose.msra.mxu0 0.0
  %239 = vmatpush.xpose.msra.mxu0 0.0
  %240 = vmatpush.xpose.msra.mxu0 0.0
  %241 = vmatpush.xpose.msra.mxu0 0.0
  %242 = vmatpush.xpose.msra.mxu0 0.0
  %243 = vmatpush.xpose.msra.mxu0 0.0
  %244 = vmatpush.xpose.msra.mxu0 0.0
  %245 = vmatpush.xpose.msra.mxu0 0.0
  %246 = vmatpush.xpose.msra.mxu0 0.0
  %247 = vmatpush.xpose.msra.mxu0 0.0
  %248 = vmatpush.xpose.msra.mxu0 0.0
  %249 = vmatpush.xpose.msra.mxu0 0.0
  %250 = vmatpush.xpose.msra.mxu0 0.0
  %251 = vmatpush.xpose.msra.mxu0 0.0
  %252 = vmatpush.xpose.msra.mxu0 0.0
  %253 = vmatpush.xpose.msra.mxu0 %v236
  %254 = vmatmul.f32.gmra.mxu0 %v234
  %v255 = vpop.f32.mrf.mxu0
  %v256 = vadd.f32 0.0, %v255
  %257 = vdwg.mxu0
  %258 = vrot.lane.b32.xlu0 %v87, 120
  %v259 = vpop.permute.xlu0 %258
  %260 = vrot.lane.b32.xlu0 %v87, 88
  %v261 = vpop.permute.xlu0 %260
  %v262 = vsel %vm94, %v259, 0
  %v264 = vsel %vm94, %v261, 0
  %266 = vmatpush.xpose.msra.mxu0 0.0
  %267 = vmatpush.xpose.msra.mxu0 0.0
  %268 = vmatpush.xpose.msra.mxu0 0.0
  %269 = vmatpush.xpose.msra.mxu0 0.0
  %270 = vmatpush.xpose.msra.mxu0 0.0
  %271 = vmatpush.xpose.msra.mxu0 0.0
  %272 = vmatpush.xpose.msra.mxu0 0.0
  %273 = vmatpush.xpose.msra.mxu0 0.0
  %274 = vmatpush.xpose.msra.mxu0 0.0
  %275 = vmatpush.xpose.msra.mxu0 0.0
  %276 = vmatpush.xpose.msra.mxu0 0.0
  %277 = vmatpush.xpose.msra.mxu0 0.0
  %278 = vmatpush.xpose.msra.mxu0 0.0
  %279 = vmatpush.xpose.msra.mxu0 0.0
  %280 = vmatpush.xpose.msra.mxu0 0.0
  %281 = vmatpush.xpose.msra.mxu0 %v264
  %282 = vmatmul.f32.gmra.mxu0 %v262
  %v283 = vpop.f32.mrf.mxu0
  %v284 = vadd.f32 0.0, %v283
  %285 = vdwg.mxu0
  %v286 = vmul.f32 %v256, 0.35355338
  %v287 = vmul.f32 %v284, 0.35355338
  %v288 = vadd.f32 %v286, %v150
  %v289 = vadd.f32 %v287, %v151
  %v290 = vsel %vm94, %v288, -inf
  %291 = vmax.xlane.f32.xlu0 %v290
  %v292 = vpop.xlane.xlu0 %291
  %v293 = vsel %vm94, %v289, -inf
  %294 = vmax.xlane.f32.xlu0 %v293
  %v295 = vpop.xlane.xlu0 %294
  %v296 = vsub.f32 %v288, %v292
  %v297 = vsub.f32 %v289, %v295
  %v298 = vmul.f32 %v296, 1.442695
  %v299 = vpow.pop %v298
  %v300 = vmul.f32 %v297, 1.442695
  %v301 = vpow.pop %v300
  %v302 = vsel %vm94, %v299, 0.0
  %303 = vadd.xlane.f32.xlu0 %v302
  %v304 = vpop.xlane.xlu0 %303
  %v305 = vsel %vm94, %v301, 0.0
  %306 = vadd.xlane.f32.xlu0 %v305
  %v307 = vpop.xlane.xlu0 %306
  %v308 = vrcp.pop %v304
  %v309 = vrcp.pop %v307
  %v310 = vmul.f32 %v299, %v308
  %v311 = vmul.f32 %v301, %v309
  %312 = vrot.lane.b32.xlu0 %v85, 56
  %v313 = vpop.permute.xlu0 %312
  %v316 = vsel %vm94, %v310, 0
  %318 = vmatpush.msra.mxu0 0.0
  %319 = vmatpush.msra.mxu0 0.0
  %320 = vmatpush.msra.mxu0 0.0
  %321 = vmatpush.msra.mxu0 0.0
  %322 = vmatpush.msra.mxu0 0.0
  %323 = vmatpush.msra.mxu0 0.0
  %324 = vmatpush.msra.mxu0 0.0
  %325 = vmatpush.msra.mxu0 0.0
  %326 = vmatpush.msra.mxu0 0.0
  %327 = vmatpush.msra.mxu0 0.0
  %328 = vmatpush.msra.mxu0 0.0
  %329 = vmatpush.msra.mxu0 0.0
  %330 = vmatpush.msra.mxu0 0.0
  %331 = vmatpush.msra.mxu0 0.0
  %332 = vmatpush.msra.mxu0 0.0
  %333 = vmatpush.msra.mxu0 %v313
  %334 = vmatmul.f32.gmra.mxu0 %v316
  %v335 = vpop.f32.mrf.mxu0
  %v336 = vadd.f32 0.0, %v335
  %337 = vdwg.mxu0
  %338 = vrot.lane.b32.xlu0 %v87, 56
  %v339 = vpop.permute.xlu0 %338
  %v342 = vsel %vm94, %v311, 0
  %344 = vmatpush.msra.mxu0 0.0
  %345 = vmatpush.msra.mxu0 0.0
  %346 = vmatpush.msra.mxu0 0.0
  %347 = vmatpush.msra.mxu0 0.0
  %348 = vmatpush.msra.mxu0 0.0
  %349 = vmatpush.msra.mxu0 0.0
  %350 = vmatpush.msra.mxu0 0.0
  %351 = vmatpush.msra.mxu0 0.0
  %352 = vmatpush.msra.mxu0 0.0
  %353 = vmatpush.msra.mxu0 0.0
  %354 = vmatpush.msra.mxu0 0.0
  %355 = vmatpush.msra.mxu0 0.0
  %356 = vmatpush.msra.mxu0 0.0
  %357 = vmatpush.msra.mxu0 0.0
  %358 = vmatpush.msra.mxu0 0.0
  %359 = vmatpush.msra.mxu0 %v339
  %360 = vmatmul.f32.gmra.mxu0 %v342
  %v361 = vpop.f32.mrf.mxu0
  %v362 = vadd.f32 0.0, %v361
  %363 = vdwg.mxu0
  %364 = vrot.lane.b32.xlu0 %v85, 112
  %v365 = vpop.permute.xlu0 %364
  %366 = vrot.lane.b32.xlu0 %v85, 80
  %v367 = vpop.permute.xlu0 %366
  %v368 = vsel %vm94, %v365, 0
  %v370 = vsel %vm94, %v367, 0
  %372 = vmatpush.xpose.msra.mxu0 0.0
  %373 = vmatpush.xpose.msra.mxu0 0.0
  %374 = vmatpush.xpose.msra.mxu0 0.0
  %375 = vmatpush.xpose.msra.mxu0 0.0
  %376 = vmatpush.xpose.msra.mxu0 0.0
  %377 = vmatpush.xpose.msra.mxu0 0.0
  %378 = vmatpush.xpose.msra.mxu0 0.0
  %379 = vmatpush.xpose.msra.mxu0 0.0
  %380 = vmatpush.xpose.msra.mxu0 0.0
  %381 = vmatpush.xpose.msra.mxu0 0.0
  %382 = vmatpush.xpose.msra.mxu0 0.0
  %383 = vmatpush.xpose.msra.mxu0 0.0
  %384 = vmatpush.xpose.msra.mxu0 0.0
  %385 = vmatpush.xpose.msra.mxu0 0.0
  %386 = vmatpush.xpose.msra.mxu0 0.0
  %387 = vmatpush.xpose.msra.mxu0 %v370
  %388 = vmatmul.f32.gmra.mxu0 %v368
  %v389 = vpop.f32.mrf.mxu0
  %v390 = vadd.f32 0.0, %v389
  %391 = vdwg.mxu0
  %392 = vrot.lane.b32.xlu0 %v87, 112
  %v393 = vpop.permute.xlu0 %392
  %394 = vrot.lane.b32.xlu0 %v87, 80
  %v395 = vpop.permute.xlu0 %394
  %v396 = vsel %vm94, %v393, 0
  %v398 = vsel %vm94, %v395, 0
  %400 = vmatpush.xpose.msra.mxu0 0.0
  %401 = vmatpush.xpose.msra.mxu0 0.0
  %402 = vmatpush.xpose.msra.mxu0 0.0
  %403 = vmatpush.xpose.msra.mxu0 0.0
  %404 = vmatpush.xpose.msra.mxu0 0.0
  %405 = vmatpush.xpose.msra.mxu0 0.0
  %406 = vmatpush.xpose.msra.mxu0 0.0
  %407 = vmatpush.xpose.msra.mxu0 0.0
  %408 = vmatpush.xpose.msra.mxu0 0.0
  %409 = vmatpush.xpose.msra.mxu0 0.0
  %410 = vmatpush.xpose.msra.mxu0 0.0
  %411 = vmatpush.xpose.msra.mxu0 0.0
  %412 = vmatpush.xpose.msra.mxu0 0.0
  %413 = vmatpush.xpose.msra.mxu0 0.0
  %414 = vmatpush.xpose.msra.mxu0 0.0
  %415 = vmatpush.xpose.msra.mxu0 %v398
  %416 = vmatmul.f32.gmra.mxu0 %v396
  %v417 = vpop.f32.mrf.mxu0
  %v418 = vadd.f32 0.0, %v417
  %419 = vdwg.mxu0
  %v420 = vmul.f32 %v390, 0.35355338
  %v421 = vmul.f32 %v418, 0.35355338
  %v422 = vadd.f32 %v420, %v150
  %v423 = vadd.f32 %v421, %v151
  %v424 = vsel %vm94, %v422, -inf
  %425 = vmax.xlane.f32.xlu0 %v424
  %v426 = vpop.xlane.xlu0 %425
  %v427 = vsel %vm94, %v423, -inf
  %428 = vmax.xlane.f32.xlu0 %v427
  %v429 = vpop.xlane.xlu0 %428
  %v430 = vsub.f32 %v422, %v426
  %v431 = vsub.f32 %v423, %v429
  %v432 = vmul.f32 %v430, 1.442695
  %v433 = vpow.pop %v432
  %v434 = vmul.f32 %v431, 1.442695
  %v435 = vpow.pop %v434
  %v436 = vsel %vm94, %v433, 0.0
  %437 = vadd.xlane.f32.xlu0 %v436
  %v438 = vpop.xlane.xlu0 %437
  %v439 = vsel %vm94, %v435, 0.0
  %440 = vadd.xlane.f32.xlu0 %v439
  %v441 = vpop.xlane.xlu0 %440
  %v442 = vrcp.pop %v438
  %v443 = vrcp.pop %v441
  %v444 = vmul.f32 %v433, %v442
  %v445 = vmul.f32 %v435, %v443
  %446 = vrot.lane.b32.xlu0 %v85, 48
  %v447 = vpop.permute.xlu0 %446
  %v450 = vsel %vm94, %v444, 0
  %452 = vmatpush.msra.mxu0 0.0
  %453 = vmatpush.msra.mxu0 0.0
  %454 = vmatpush.msra.mxu0 0.0
  %455 = vmatpush.msra.mxu0 0.0
  %456 = vmatpush.msra.mxu0 0.0
  %457 = vmatpush.msra.mxu0 0.0
  %458 = vmatpush.msra.mxu0 0.0
  %459 = vmatpush.msra.mxu0 0.0
  %460 = vmatpush.msra.mxu0 0.0
  %461 = vmatpush.msra.mxu0 0.0
  %462 = vmatpush.msra.mxu0 0.0
  %463 = vmatpush.msra.mxu0 0.0
  %464 = vmatpush.msra.mxu0 0.0
  %465 = vmatpush.msra.mxu0 0.0
  %466 = vmatpush.msra.mxu0 0.0
  %467 = vmatpush.msra.mxu0 %v447
  %468 = vmatmul.f32.gmra.mxu0 %v450
  %v469 = vpop.f32.mrf.mxu0
  %v470 = vadd.f32 0.0, %v469
  %471 = vdwg.mxu0
  %472 = vrot.lane.b32.xlu0 %v87, 48
  %v473 = vpop.permute.xlu0 %472
  %v476 = vsel %vm94, %v445, 0
  %478 = vmatpush.msra.mxu0 0.0
  %479 = vmatpush.msra.mxu0 0.0
  %480 = vmatpush.msra.mxu0 0.0
  %481 = vmatpush.msra.mxu0 0.0
  %482 = vmatpush.msra.mxu0 0.0
  %483 = vmatpush.msra.mxu0 0.0
  %484 = vmatpush.msra.mxu0 0.0
  %485 = vmatpush.msra.mxu0 0.0
  %486 = vmatpush.msra.mxu0 0.0
  %487 = vmatpush.msra.mxu0 0.0
  %488 = vmatpush.msra.mxu0 0.0
  %489 = vmatpush.msra.mxu0 0.0
  %490 = vmatpush.msra.mxu0 0.0
  %491 = vmatpush.msra.mxu0 0.0
  %492 = vmatpush.msra.mxu0 0.0
  %493 = vmatpush.msra.mxu0 %v473
  %494 = vmatmul.f32.gmra.mxu0 %v476
  %v495 = vpop.f32.mrf.mxu0
  %v496 = vadd.f32 0.0, %v495
  %497 = vdwg.mxu0
  %498 = vrot.lane.b32.xlu0 %v85, 104
  %v499 = vpop.permute.xlu0 %498
  %500 = vrot.lane.b32.xlu0 %v85, 72
  %v501 = vpop.permute.xlu0 %500
  %v502 = vsel %vm94, %v499, 0
  %v504 = vsel %vm94, %v501, 0
  %506 = vmatpush.xpose.msra.mxu0 0.0
  %507 = vmatpush.xpose.msra.mxu0 0.0
  %508 = vmatpush.xpose.msra.mxu0 0.0
  %509 = vmatpush.xpose.msra.mxu0 0.0
  %510 = vmatpush.xpose.msra.mxu0 0.0
  %511 = vmatpush.xpose.msra.mxu0 0.0
  %512 = vmatpush.xpose.msra.mxu0 0.0
  %513 = vmatpush.xpose.msra.mxu0 0.0
  %514 = vmatpush.xpose.msra.mxu0 0.0
  %515 = vmatpush.xpose.msra.mxu0 0.0
  %516 = vmatpush.xpose.msra.mxu0 0.0
  %517 = vmatpush.xpose.msra.mxu0 0.0
  %518 = vmatpush.xpose.msra.mxu0 0.0
  %519 = vmatpush.xpose.msra.mxu0 0.0
  %520 = vmatpush.xpose.msra.mxu0 0.0
  %521 = vmatpush.xpose.msra.mxu0 %v504
  %522 = vmatmul.f32.gmra.mxu0 %v502
  %v523 = vpop.f32.mrf.mxu0
  %v524 = vadd.f32 0.0, %v523
  %525 = vdwg.mxu0
  %526 = vrot.lane.b32.xlu0 %v87, 104
  %v527 = vpop.permute.xlu0 %526
  %528 = vrot.lane.b32.xlu0 %v87, 72
  %v529 = vpop.permute.xlu0 %528
  %v530 = vsel %vm94, %v527, 0
  %v532 = vsel %vm94, %v529, 0
  %534 = vmatpush.xpose.msra.mxu0 0.0
  %535 = vmatpush.xpose.msra.mxu0 0.0
  %536 = vmatpush.xpose.msra.mxu0 0.0
  %537 = vmatpush.xpose.msra.mxu0 0.0
  %538 = vmatpush.xpose.msra.mxu0 0.0
  %539 = vmatpush.xpose.msra.mxu0 0.0
  %540 = vmatpush.xpose.msra.mxu0 0.0
  %541 = vmatpush.xpose.msra.mxu0 0.0
  %542 = vmatpush.xpose.msra.mxu0 0.0
  %543 = vmatpush.xpose.msra.mxu0 0.0
  %544 = vmatpush.xpose.msra.mxu0 0.0
  %545 = vmatpush.xpose.msra.mxu0 0.0
  %546 = vmatpush.xpose.msra.mxu0 0.0
  %547 = vmatpush.xpose.msra.mxu0 0.0
  %548 = vmatpush.xpose.msra.mxu0 0.0
  %549 = vmatpush.xpose.msra.mxu0 %v532
  %550 = vmatmul.f32.gmra.mxu0 %v530
  %v551 = vpop.f32.mrf.mxu0
  %v552 = vadd.f32 0.0, %v551
  %553 = vdwg.mxu0
  %v554 = vmul.f32 %v524, 0.35355338
  %v555 = vmul.f32 %v552, 0.35355338
  %v556 = vadd.f32 %v554, %v150
  %v557 = vadd.f32 %v555, %v151
  %v558 = vsel %vm94, %v556, -inf
  %559 = vmax.xlane.f32.xlu0 %v558
  %v560 = vpop.xlane.xlu0 %559
  %v561 = vsel %vm94, %v557, -inf
  %562 = vmax.xlane.f32.xlu0 %v561
  %v563 = vpop.xlane.xlu0 %562
  %v564 = vsub.f32 %v556, %v560
  %v565 = vsub.f32 %v557, %v563
  %v566 = vmul.f32 %v564, 1.442695
  %v567 = vpow.pop %v566
  %v568 = vmul.f32 %v565, 1.442695
  %v569 = vpow.pop %v568
  %v570 = vsel %vm94, %v567, 0.0
  %571 = vadd.xlane.f32.xlu0 %v570
  %v572 = vpop.xlane.xlu0 %571
  %v573 = vsel %vm94, %v569, 0.0
  %574 = vadd.xlane.f32.xlu0 %v573
  %v575 = vpop.xlane.xlu0 %574
  %v576 = vrcp.pop %v572
  %v577 = vrcp.pop %v575
  %v578 = vmul.f32 %v567, %v576
  %v579 = vmul.f32 %v569, %v577
  %580 = vrot.lane.b32.xlu0 %v85, 40
  %v581 = vpop.permute.xlu0 %580
  %v584 = vsel %vm94, %v578, 0
  %586 = vmatpush.msra.mxu0 0.0
  %587 = vmatpush.msra.mxu0 0.0
  %588 = vmatpush.msra.mxu0 0.0
  %589 = vmatpush.msra.mxu0 0.0
  %590 = vmatpush.msra.mxu0 0.0
  %591 = vmatpush.msra.mxu0 0.0
  %592 = vmatpush.msra.mxu0 0.0
  %593 = vmatpush.msra.mxu0 0.0
  %594 = vmatpush.msra.mxu0 0.0
  %595 = vmatpush.msra.mxu0 0.0
  %596 = vmatpush.msra.mxu0 0.0
  %597 = vmatpush.msra.mxu0 0.0
  %598 = vmatpush.msra.mxu0 0.0
  %599 = vmatpush.msra.mxu0 0.0
  %600 = vmatpush.msra.mxu0 0.0
  %601 = vmatpush.msra.mxu0 %v581
  %602 = vmatmul.f32.gmra.mxu0 %v584
  %v603 = vpop.f32.mrf.mxu0
  %v604 = vadd.f32 0.0, %v603
  %605 = vdwg.mxu0
  %606 = vrot.lane.b32.xlu0 %v87, 40
  %v607 = vpop.permute.xlu0 %606
  %v610 = vsel %vm94, %v579, 0
  %612 = vmatpush.msra.mxu0 0.0
  %613 = vmatpush.msra.mxu0 0.0
  %614 = vmatpush.msra.mxu0 0.0
  %615 = vmatpush.msra.mxu0 0.0
  %616 = vmatpush.msra.mxu0 0.0
  %617 = vmatpush.msra.mxu0 0.0
  %618 = vmatpush.msra.mxu0 0.0
  %619 = vmatpush.msra.mxu0 0.0
  %620 = vmatpush.msra.mxu0 0.0
  %621 = vmatpush.msra.mxu0 0.0
  %622 = vmatpush.msra.mxu0 0.0
  %623 = vmatpush.msra.mxu0 0.0
  %624 = vmatpush.msra.mxu0 0.0
  %625 = vmatpush.msra.mxu0 0.0
  %626 = vmatpush.msra.mxu0 0.0
  %627 = vmatpush.msra.mxu0 %v607
  %628 = vmatmul.f32.gmra.mxu0 %v610
  %v629 = vpop.f32.mrf.mxu0
  %v630 = vadd.f32 0.0, %v629
  %631 = vdwg.mxu0
  %634 = vrot.lane.b32.xlu0 %v336, 8
  %v635 = vpop.permute.xlu0 %634
  %636 = vrot.lane.b32.xlu0 %v362, 8
  %v637 = vpop.permute.xlu0 %636
  %642 = vrot.lane.b32.xlu0 %v470, 16
  %v643 = vpop.permute.xlu0 %642
  %644 = vrot.lane.b32.xlu0 %v496, 16
  %v645 = vpop.permute.xlu0 %644
  %650 = vrot.lane.b32.xlu0 %v604, 24
  %v651 = vpop.permute.xlu0 %650
  %652 = vrot.lane.b32.xlu0 %v630, 24
  %v653 = vpop.permute.xlu0 %652
  %v656 = vsel %vm94, %v202, %v635
  %v657 = vsel %vm94, %v228, %v637
  %vm658 = vcmask 130048
  %v659 = vsel %vm658, %v656, %v643
  %v660 = vsel %vm658, %v657, %v645
  %vm661 = vcmask 195584
  %v662 = vsel %vm661, %v659, %v651
  %v663 = vsel %vm661, %v660, %v653
  %v664 = vpack.c.bf16 %v663, %v662
  %v665 = vld [vmem:[%s4] sm:$0xf]
  %v666 = vld [vmem:[%s4 + $0x4] sm:$0xf]
  %v667 = vld [vmem:[%s4 + $0x8] sm:$0xf]
  %v668 = vld [vmem:[%s4 + $0xc] sm:$0xf]
  %v669 = vld [vmem:[%s5] sm:$0x1]
  %v671 = vperm.slane %v669, 0
  %v677 = vunpack.c.l.b16 %v665
  %v678 = vunpack.c.l.b16 %v666
  %v679 = vunpack.c.l.b16 %v667
  %v680 = vunpack.c.l.b16 %v668
  %v681 = vpack.c.b16 %v678, %v677
  %v682 = vpack.c.b16 %v680, %v679
  %v686 = vsel %vm71, %v664, 0
  %688 = vmatpush.bf16.msra.mxu0 0
  %689 = vmatpush.bf16.msra.mxu0 0
  %690 = vmatpush.bf16.msra.mxu0 0
  %691 = vmatpush.bf16.msra.mxu0 0
  %692 = vmatpush.bf16.msra.mxu0 0
  %693 = vmatpush.bf16.msra.mxu0 0
  %694 = vmatpush.bf16.msra.mxu0 %v682
  %695 = vmatpush.bf16.msra.mxu0 %v681
  %696 = vmatmul.bf16.gmra.mxu0 %v686
  %v697 = vpop.f32.mrf.mxu0
  %v698 = vadd.f32 %v671, %v697
  %v699 = vpop.f32.mrf.mxu0
  %v700 = vadd.f32 %v671, %v699
  %701 = vdwg.mxu0
  %v702 = vadd.f32 %v698, %v48
  %v703 = vadd.f32 %v700, %v49
  %v704 = vld [vmem:[%s6] sm:$0x1]
  %v705 = vld [vmem:[%s7] sm:$0x1]
  %v706 = vsel %vm71, %v702, 0.0
  %707 = vadd.xlane.f32.xlu0 %v706
  %v708 = vpop.xlane.xlu0 %707
  %v709 = vsel %vm71, %v703, 0.0
  %710 = vadd.xlane.f32.xlu0 %v709
  %v711 = vpop.xlane.xlu0 %710
  %v712 = vrcp.pop 32.0
  %v713 = vmul.f32 32.0, %v712
  %v714 = vsub.f32 1.0, %v713
  %v715 = vmul.f32 %v712, %v714
  %v716 = vadd.f32 %v712, %v715
  %vm717 = vweird.f32 %v712
  %v718 = vsel %vm717, %v712, %v716
  %v719 = vmul.f32 %v708, %v718
  %v720 = vmul.f32 %v711, %v718
  %v721 = vsub.f32 %v702, %v719
  %v722 = vsub.f32 %v703, %v720
  %v723 = vmul.f32 %v721, %v721
  %v724 = vmul.f32 %v722, %v722
  %v725 = vsel %vm71, %v723, 0.0
  %726 = vadd.xlane.f32.xlu0 %v725
  %v727 = vpop.xlane.xlu0 %726
  %v728 = vsel %vm71, %v724, 0.0
  %729 = vadd.xlane.f32.xlu0 %v728
  %v730 = vpop.xlane.xlu0 %729
  %v731 = vmul.f32 %v727, %v718
  %v732 = vmul.f32 %v730, %v718
  %v733 = vadd.f32 %v731, 1e-12
  %v734 = vadd.f32 %v732, 1e-12
  %v735 = vrsqrt.pop %v733
  %v736 = vmul.f32 %v735, %v733
  %v737 = vmul.f32 %v736, %v735
  %v738 = vmul.f32 0.5, %v737
  %v739 = vsub.f32 1.5, %v738
  %v740 = vmul.f32 %v735, %v739
  %vm741 = vweird.f32 %v733
  %vm742 = vweird.f32 %v735
  %vm743 = vmor %vm741, %vm742
  %v744 = vsel %vm743, %v735, %v740
  %v745 = vrsqrt.pop %v734
  %v746 = vmul.f32 %v745, %v734
  %v747 = vmul.f32 %v746, %v745
  %v748 = vmul.f32 0.5, %v747
  %v749 = vsub.f32 1.5, %v748
  %v750 = vmul.f32 %v745, %v749
  %vm751 = vweird.f32 %v734
  %vm752 = vweird.f32 %v745
  %vm753 = vmor %vm751, %vm752
  %v754 = vsel %vm753, %v745, %v750
  %v755 = vmul.f32 %v721, %v744
  %v756 = vmul.f32 %v722, %v754
  %v758 = vperm.slane %v704, 0
  %v760 = vmul.f32 %v755, %v758
  %v761 = vmul.f32 %v756, %v758
  %v763 = vperm.slane %v705, 0
  %v765 = vadd.f32 %v760, %v763
  %v766 = vadd.f32 %v761, %v763
  %v767 = vpack.c.bf16 %v766, %v765
  %v768 = vld [vmem:[%s8] sm:$0xf]
  %v769 = vld [vmem:[%s8 + $0x4] sm:$0xf]
  %v770 = vld [vmem:[%s8 + $0x8] sm:$0xf]
  %v771 = vld [vmem:[%s8 + $0xc] sm:$0xf]
  %v772 = vld [vmem:[%s9] sm:$0x1]
  %v774 = vperm.slane %v772, 0
  %v780 = vunpack.c.l.b16 %v768
  %v781 = vunpack.c.l.b16 %v769
  %v782 = vunpack.c.l.b16 %v770
  %v783 = vunpack.c.l.b16 %v771
  %v784 = vpack.c.b16 %v781, %v780
  %v785 = vpack.c.b16 %v783, %v782
  %v789 = vsel %vm71, %v767, 0
  %791 = vmatpush.bf16.msra.mxu0 0
  %792 = vmatpush.bf16.msra.mxu0 0
  %793 = vmatpush.bf16.msra.mxu0 0
  %794 = vmatpush.bf16.msra.mxu0 0
  %795 = vmatpush.bf16.msra.mxu0 0
  %796 = vmatpush.bf16.msra.mxu0 0
  %797 = vmatpush.bf16.msra.mxu0 %v785
  %798 = vmatpush.bf16.msra.mxu0 %v784
  %799 = vmatmul.bf16.gmra.mxu0 %v789
  %v800 = vpop.f32.mrf.mxu0
  %v801 = vadd.f32 %v774, %v800
  %v802 = vpop.f32.mrf.mxu0
  %v803 = vadd.f32 %v774, %v802
  %804 = vdwg.mxu0
  %v805 = vmul.f32 %v801, %v801
  %v806 = vmul.f32 %v803, %v803
  %v807 = vmul.f32 %v801, %v805
  %v808 = vmul.f32 %v803, %v806
  %v809 = vmul.f32 %v807, 0.044715
  %v810 = vmul.f32 %v808, 0.044715
  %v811 = vadd.f32 %v801, %v809
  %v812 = vadd.f32 %v803, %v810
  %v813 = vmul.f32 %v811, 0.7978846
  %v814 = vmul.f32 %v812, 0.7978846
  %v815 = vtanh.pop %v813
  %v816 = vtanh.pop %v814
  %v817 = vadd.f32 %v815, 1.0
  %v818 = vadd.f32 %v816, 1.0
  %v819 = vmul.f32 %v817, 0.5
  %v820 = vmul.f32 %v818, 0.5
  %v821 = vmul.f32 %v801, %v819
  %v822 = vmul.f32 %v803, %v820
  %v823 = vpack.c.bf16 %v822, %v821
  %v824 = vld [vmem:[%s10] sm:$0xf]
  %v825 = vld [vmem:[%s10 + $0x4] sm:$0xf]
  %v826 = vld [vmem:[%s10 + $0x8] sm:$0xf]
  %v827 = vld [vmem:[%s10 + $0xc] sm:$0xf]
  %v828 = vld [vmem:[%s10 + $0x10] sm:$0xf]
  %v829 = vld [vmem:[%s10 + $0x14] sm:$0xf]
  %v830 = vld [vmem:[%s10 + $0x18] sm:$0xf]
  %v831 = vld [vmem:[%s10 + $0x1c] sm:$0xf]
  %v832 = vld [vmem:[%s11] sm:$0x1]
  %v834 = vperm.slane %v832, 0
  %v844 = vunpack.c.l.b16 %v824
  %v845 = vunpack.c.l.b16 %v825
  %v846 = vunpack.c.l.b16 %v826
  %v847 = vunpack.c.l.b16 %v827
  %v848 = vunpack.c.l.b16 %v828
  %v849 = vunpack.c.l.b16 %v829
  %v850 = vunpack.c.l.b16 %v830
  %v851 = vunpack.c.l.b16 %v831
  %v852 = vpack.c.b16 %v845, %v844
  %v853 = vpack.c.b16 %v847, %v846
  %v854 = vpack.c.b16 %v849, %v848
  %v855 = vpack.c.b16 %v851, %v850
  %vm860 = vcmask 523264
  %v862 = vsel %vm860, %v823, 0
  %864 = vmatpush.bf16.msra.mxu0 0
  %865 = vmatpush.bf16.msra.mxu0 0
  %866 = vmatpush.bf16.msra.mxu0 0
  %867 = vmatpush.bf16.msra.mxu0 0
  %868 = vmatpush.bf16.msra.mxu0 %v855
  %869 = vmatpush.bf16.msra.mxu0 %v854
  %870 = vmatpush.bf16.msra.mxu0 %v853
  %871 = vmatpush.bf16.msra.mxu0 %v852
  %872 = vmatmul.bf16.gmra.mxu0 %v862
  %v873 = vpop.f32.mrf.mxu0
  %v874 = vadd.f32 %v834, %v873
  %v875 = vpop.f32.mrf.mxu0
  %v876 = vadd.f32 %v834, %v875
  %877 = vdwg.mxu0
  %v878 = vadd.f32 %v874, %v765
  %v879 = vadd.f32 %v876, %v766
  %v880 = vld [vmem:[%s12] sm:$0x1]
  %v881 = vld [vmem:[%s13] sm:$0x1]
  %v882 = vsel %vm71, %v878, 0.0
  %883 = vadd.xlane.f32.xlu0 %v882
  %v884 = vpop.xlane.xlu0 %883
  %v885 = vsel %vm71, %v879, 0.0
  %886 = vadd.xlane.f32.xlu0 %v885
  %v887 = vpop.xlane.xlu0 %886
  %v888 = vmul.f32 %v884, %v718
  %v889 = vmul.f32 %v887, %v718
  %v890 = vsub.f32 %v878, %v888
  %v891 = vsub.f32 %v879, %v889
  %v892 = vmul.f32 %v890, %v890
  %v893 = vmul.f32 %v891, %v891
  %v894 = vsel %vm71, %v892, 0.0
  %895 = vadd.xlane.f32.xlu0 %v894
  %v896 = vpop.xlane.xlu0 %895
  %v897 = vsel %vm71, %v893, 0.0
  %898 = vadd.xlane.f32.xlu0 %v897
  %v899 = vpop.xlane.xlu0 %898
  %v900 = vmul.f32 %v896, %v718
  %v901 = vmul.f32 %v899, %v718
  %v902 = vadd.f32 %v900, 1e-12
  %v903 = vadd.f32 %v901, 1e-12
  %v904 = vrsqrt.pop %v902
  %v905 = vmul.f32 %v904, %v902
  %v906 = vmul.f32 %v905, %v904
  %v907 = vmul.f32 0.5, %v906
  %v908 = vsub.f32 1.5, %v907
  %v909 = vmul.f32 %v904, %v908
  %vm910 = vweird.f32 %v902
  %vm911 = vweird.f32 %v904
  %vm912 = vmor %vm910, %vm911
  %v913 = vsel %vm912, %v904, %v909
  %v914 = vrsqrt.pop %v903
  %v915 = vmul.f32 %v914, %v903
  %v916 = vmul.f32 %v915, %v914
  %v917 = vmul.f32 0.5, %v916
  %v918 = vsub.f32 1.5, %v917
  %v919 = vmul.f32 %v914, %v918
  %vm920 = vweird.f32 %v903
  %vm921 = vweird.f32 %v914
  %vm922 = vmor %vm920, %vm921
  %v923 = vsel %vm922, %v914, %v919
  %v924 = vmul.f32 %v890, %v913
  %v925 = vmul.f32 %v891, %v923
  %v927 = vperm.slane %v880, 0
  %v929 = vmul.f32 %v924, %v927
  %v930 = vmul.f32 %v925, %v927
  %v932 = vperm.slane %v881, 0
  %v934 = vadd.f32 %v929, %v932
  %v935 = vadd.f32 %v930, %v932
  %936 = vst.msk [vmem:[%s14] sm:$0xff] %vm71, %v934
  %937 = vst.msk [vmem:[%s14 + $0x8] sm:$0xff] %vm71, %v935
  // Predicated region
  $region58: #{qabert_forward.5} parent=0 // pred_check
    _
  $region59: #{qabert_forward.5} parent=0 // pred_check_branch
    %939 = sbr.rel (0) target = $region61
  $region60: #{qabert_forward.5} parent=0 // pred_region
    _
  $region61: #{qabert_forward.5} parent=0 // pred_fallthru
    _
  // Predicated region
  $region62: #{qabert_forward.5} parent=0 // pred_check
    _
  $region63: #{qabert_forward.5} parent=0 // pred_check_branch
    %941 = sbr.rel (0) target = $region65
  $region64: #{qabert_forward.5} parent=0 // pred_region
    _
  $region65: #{qabert_forward.5} parent=0 // pred_fallthru
    _

// kernel: qabert_forward.7
$region0: #{qabert_forward.7}
  #allocation0 [shape = 'u32[]', space=smem, size = 0x4, offset = 0x4, fixed_abs, tag = 'smem constant byte address 0x4 - core index']
  #allocation1 [shape = 'u32[72,128]{1,0:T(1,128)}', space=vmem, size = 0x9000, scoped, tag = 'internal scratch']
  #allocation2 [shape = 'f32[16,32]{1,0:T(8,128)}', space=vmem, size = 0x2000, scoped, tag = 'scratch operand']
  #allocation3 [shape = 'f32[16,32]{1,0:T(8,128)}', space=vmem, size = 0x2000, scoped, tag = 'scratch operand']
  #allocation4 [shape = 'f32[16,32]{1,0:T(8,128)}', space=vmem, size = 0x2000, scoped, tag = 'scratch operand']
  #allocation5 [shape = 'f32[16,32]{1,0:T(8,128)}', space=vmem, size = 0x2000, scoped, tag = 'scratch operand']
  #allocation6 [shape = 'f32[16,32]{1,0:T(8,128)}', space=vmem, size = 0x2000, scoped, tag = 'scratch operand']
  %s0 = inlined_call_operand.vmem [shape: f32[16,32], index: 0, kind: input, shape index: {}]
  %s1 = inlined_call_operand.vmem [shape: bf16[4,32,32], index: 1, kind: input, shape index: {}]
  %s2 = inlined_call_operand.vmem [shape: bf16[4,32,32], index: 2, kind: input, shape index: {}]
  %s3 = inlined_call_operand.vmem [shape: f32[4,1,32], index: 3, kind: input, shape index: {}]
  %s4 = inlined_call_operand.vmem [shape: bf16[32,1], index: 4, kind: input, shape index: {}]
  %s5 = inlined_call_operand.vmem [shape: bf16[32,1], index: 5, kind: input, shape index: {}]
  %s6 = inlined_call_operand.vmem [shape: f32[16,2], index: 6, kind: output, shape index: {}]
  %s7 = sld [smem:[#allocation0]]
  $region34: #{qabert_forward.7} parent=0
    _
  %s9 = ssub.s32 1, %s7
  %s10 = scalar_select 0, %s9, %s7
  // Predicated region
  $region2: #{qabert_forward.7} parent=0 // pred_check
    _
  $region3: #{qabert_forward.7} parent=0 // pred_check_branch
    %12 = sbr.rel (0) target = $region5
  $region4: #{qabert_forward.7} parent=0 // pred_region
    _
  $region5: #{qabert_forward.7} parent=0 // pred_fallthru
    _
  // Predicated region
  $region6: #{qabert_forward.7} parent=0 // pred_check
    _
  $region7: #{qabert_forward.7} parent=0 // pred_check_branch
    %14 = sbr.rel (0) target = $region9
  $region8: #{qabert_forward.7} parent=0 // pred_region
    _
  $region9: #{qabert_forward.7} parent=0 // pred_fallthru
    _
  // Predicated region
  $region10: #{qabert_forward.7} parent=0 // pred_check
    _
  $region11: #{qabert_forward.7} parent=0 // pred_check_branch
    %16 = sbr.rel (0) target = $region13
  $region12: #{qabert_forward.7} parent=0 // pred_region
    _
  $region13: #{qabert_forward.7} parent=0 // pred_fallthru
    _
  // Predicated region
  $region14: #{qabert_forward.7} parent=0 // pred_check
    _
  $region15: #{qabert_forward.7} parent=0 // pred_check_branch
    %18 = sbr.rel (0) target = $region17
  $region16: #{qabert_forward.7} parent=0 // pred_region
    _
  $region17: #{qabert_forward.7} parent=0 // pred_fallthru
    _
  // Predicated region
  $region18: #{qabert_forward.7} parent=0 // pred_check
    _
  $region19: #{qabert_forward.7} parent=0 // pred_check_branch
    %20 = sbr.rel (0) target = $region21
  $region20: #{qabert_forward.7} parent=0 // pred_region
    _
  $region21: #{qabert_forward.7} parent=0 // pred_fallthru
    _
  // Predicated region
  $region22: #{qabert_forward.7} parent=0 // pred_check
    _
  $region23: #{qabert_forward.7} parent=0 // pred_check_branch
    %22 = sbr.rel (0) target = $region25
  $region24: #{qabert_forward.7} parent=0 // pred_region
    _
  $region25: #{qabert_forward.7} parent=0 // pred_fallthru
    _
  %v24 = vld [vmem:[%s0] sm:$0xff]
  %v25 = vld [vmem:[%s0 + $0x8] sm:$0xff]
  %v26 = vpack.c.bf16 %v25, %v24
  %v27 = vld [vmem:[%s1] sm:$0xf]
  %v28 = vld [vmem:[%s1 + $0x4] sm:$0xf]
  %v29 = vld [vmem:[%s1 + $0x8] sm:$0xf]
  %v30 = vld [vmem:[%s1 + $0xc] sm:$0xf]
  %v31 = vld [vmem:[%s3] sm:$0x1]
  %v33 = vperm.slane %v31, 0
  %v39 = vunpack.c.l.b16 %v27
  %v40 = vunpack.c.l.b16 %v28
  %v41 = vunpack.c.l.b16 %v29
  %v42 = vunpack.c.l.b16 %v30
  %v43 = vpack.c.b16 %v40, %v39
  %v44 = vpack.c.b16 %v42, %v41
  %vm47 = vcmask 261120
  %v49 = vsel %vm47, %v26, 0
  %51 = vmatpush.bf16.msra.mxu0 0
  %52 = vmatpush.bf16.msra.mxu0 0
  %53 = vmatpush.bf16.msra.mxu0 0
  %54 = vmatpush.bf16.msra.mxu0 0
  %55 = vmatpush.bf16.msra.mxu0 0
  %56 = vmatpush.bf16.msra.mxu0 0
  %57 = vmatpush.bf16.msra.mxu0 %v44
  %58 = vmatpush.bf16.msra.mxu0 %v43
  %59 = vmatmul.bf16.gmra.mxu0 %v49
  %v60 = vpop.f32.mrf.mxu0
  %v61 = vadd.f32 %v33, %v60
  %v62 = vpop.f32.mrf.mxu0
  %v63 = vadd.f32 %v33, %v62
  %64 = vdwg.mxu0
  %65 = vst.msk [vmem:[#allocation2] sm:$0xff] %vm47, %v61
  %66 = vst.msk [vmem:[#allocation2 + $0x8] sm:$0xff] %vm47, %v63
  %s67 = scalar_lea.vmem %s1, 16
  %v68 = vld [vmem:[%s67] sm:$0xf]
  %v69 = vld [vmem:[%s67 + $0x4] sm:$0xf]
  %v70 = vld [vmem:[%s67 + $0x8] sm:$0xf]
  %v71 = vld [vmem:[%s67 + $0xc] sm:$0xf]
  %s72 = scalar_lea.vmem %s3, 1
  %v73 = vld [vmem:[%s72] sm:$0x1]
  %v75 = vperm.slane %v73, 0
  %v81 = vunpack.c.l.b16 %v68
  %v82 = vunpack.c.l.b16 %v69
  %v83 = vunpack.c.l.b16 %v70
  %v84 = vunpack.c.l.b16 %v71
  %v85 = vpack.c.b16 %v82, %v81
  %v86 = vpack.c.b16 %v84, %v83
  %89 = vmatpush.bf16.msra.mxu0 0
  %90 = vmatpush.bf16.msra.mxu0 0
  %91 = vmatpush.bf16.msra.mxu0 0
  %92 = vmatpush.bf16.msra.mxu0 0
  %93 = vmatpush.bf16.msra.mxu0 0
  %94 = vmatpush.bf16.msra.mxu0 0
  %95 = vmatpush.bf16.msra.mxu0 %v86
  %96 = vmatpush.bf16.msra.mxu0 %v85
  %97 = vmatmul.bf16.gmra.mxu0 %v49
  %v98 = vpop.f32.mrf.mxu0
  %v99 = vadd.f32 %v75, %v98
  %v100 = vpop.f32.mrf.mxu0
  %v101 = vadd.f32 %v75, %v100
  %102 = vdwg.mxu0
  %103 = vst.msk [vmem:[#allocation3] sm:$0xff] %vm47, %v99
  %104 = vst.msk [vmem:[#allocation3 + $0x8] sm:$0xff] %vm47, %v101
  %s105 = scalar_lea.vmem %s1, 32
  %v106 = vld [vmem:[%s105] sm:$0xf]
  %v107 = vld [vmem:[%s105 + $0x4] sm:$0xf]
  %v108 = vld [vmem:[%s105 + $0x8] sm:$0xf]
  %v109 = vld [vmem:[%s105 + $0xc] sm:$0xf]
  %s110 = scalar_lea.vmem %s3, 2
  %v111 = vld [vmem:[%s110] sm:$0x1]
  %v113 = vperm.slane %v111, 0
  %v119 = vunpack.c.l.b16 %v106
  %v120 = vunpack.c.l.b16 %v107
  %v121 = vunpack.c.l.b16 %v108
  %v122 = vunpack.c.l.b16 %v109
  %v123 = vpack.c.b16 %v120, %v119
  %v124 = vpack.c.b16 %v122, %v121
  %127 = vmatpush.bf16.msra.mxu0 0
  %128 = vmatpush.bf16.msra.mxu0 0
  %129 = vmatpush.bf16.msra.mxu0 0
  %130 = vmatpush.bf16.msra.mxu0 0
  %131 = vmatpush.bf16.msra.mxu0 0
  %132 = vmatpush.bf16.msra.mxu0 0
  %133 = vmatpush.bf16.msra.mxu0 %v124
  %134 = vmatpush.bf16.msra.mxu0 %v123
  %135 = vmatmul.bf16.gmra.mxu0 %v49
  %v136 = vpop.f32.mrf.mxu0
  %v137 = vadd.f32 %v113, %v136
  %v138 = vpop.f32.mrf.mxu0
  %v139 = vadd.f32 %v113, %v138
  %140 = vdwg.mxu0
  %141 = vst.msk [vmem:[#allocation4] sm:$0xff] %vm47, %v137
  %142 = vst.msk [vmem:[#allocation4 + $0x8] sm:$0xff] %vm47, %v139
  %s143 = scalar_lea.vmem %s1, 48
  %v144 = vld [vmem:[%s143] sm:$0xf]
  %v145 = vld [vmem:[%s143 + $0x4] sm:$0xf]
  %v146 = vld [vmem:[%s143 + $0x8] sm:$0xf]
  %v147 = vld [vmem:[%s143 + $0xc] sm:$0xf]
  %s148 = scalar_lea.vmem %s3, 3
  %v149 = vld [vmem:[%s148] sm:$0x1]
  %v151 = vperm.slane %v149, 0
  %v157 = vunpack.c.l.b16 %v144
  %v158 = vunpack.c.l.b16 %v145
  %v159 = vunpack.c.l.b16 %v146
  %v160 = vunpack.c.l.b16 %v147
  %v161 = vpack.c.b16 %v158, %v157
  %v162 = vpack.c.b16 %v160, %v159
  %165 = vmatpush.bf16.msra.mxu0 0
  %166 = vmatpush.bf16.msra.mxu0 0
  %167 = vmatpush.bf16.msra.mxu0 0
  %168 = vmatpush.bf16.msra.mxu0 0
  %169 = vmatpush.bf16.msra.mxu0 0
  %170 = vmatpush.bf16.msra.mxu0 0
  %171 = vmatpush.bf16.msra.mxu0 %v162
  %172 = vmatpush.bf16.msra.mxu0 %v161
  %173 = vmatmul.bf16.gmra.mxu0 %v49
  %v174 = vpop.f32.mrf.mxu0
  %v175 = vadd.f32 %v151, %v174
  %v176 = vpop.f32.mrf.mxu0
  %v177 = vadd.f32 %v151, %v176
  %178 = vdwg.mxu0
  %179 = vst.msk [vmem:[#allocation5] sm:$0xff] %vm47, %v175
  %180 = vst.msk [vmem:[#allocation5 + $0x8] sm:$0xff] %vm47, %v177
  %v181 = vld [vmem:[%s2] sm:$0xf]
  %v182 = vld [vmem:[%s2 + $0x4] sm:$0xf]
  %v183 = vld [vmem:[%s2 + $0x8] sm:$0xf]
  %v184 = vld [vmem:[%s2 + $0xc] sm:$0xf]
  %s185 = scalar_lea.vmem %s2, 16
  %v186 = vld [vmem:[%s185] sm:$0xf]
  %v187 = vld [vmem:[%s185 + $0x4] sm:$0xf]
  %v188 = vld [vmem:[%s185 + $0x8] sm:$0xf]
  %v189 = vld [vmem:[%s185 + $0xc] sm:$0xf]
  %s190 = scalar_lea.vmem %s2, 32
  %v191 = vld [vmem:[%s190] sm:$0xf]
  %v192 = vld [vmem:[%s190 + $0x4] sm:$0xf]
  %v193 = vld [vmem:[%s190 + $0x8] sm:$0xf]
  %v194 = vld [vmem:[%s190 + $0xc] sm:$0xf]
  %s195 = scalar_lea.vmem %s2, 48
  %v196 = vld [vmem:[%s195] sm:$0xf]
  %v197 = vld [vmem:[%s195 + $0x4] sm:$0xf]
  %v198 = vld [vmem:[%s195 + $0x8] sm:$0xf]
  %v199 = vld [vmem:[%s195 + $0xc] sm:$0xf]
  %v200 = vld [vmem:[#allocation2] sm:$0x1]
  %v201 = vld [vmem:[#allocation2 + $0x8] sm:$0x1]
  %v203 = vrot.slane %v201, 7
  %vm205 = vcmask 1040384
  %v206 = vsel %vm205, %v200, %v203
  %v211 = vunpack.c.l.b16 %v181
  %v212 = vunpack.c.l.b16 %v182
  %v213 = vunpack.c.l.b16 %v183
  %v214 = vunpack.c.l.b16 %v184
  %v215 = vpack.c.b16 %v212, %v211
  %v216 = vpack.c.b16 %v214, %v213
  %v220 = vsel %vm47, 0, 0
  %222 = vmatpush.bf16.msra.mxu0 0
  %223 = vmatpush.bf16.msra.mxu0 0
  %224 = vmatpush.bf16.msra.mxu0 0
  %225 = vmatpush.bf16.msra.mxu0 0
  %226 = vmatpush.bf16.msra.mxu0 0
  %227 = vmatpush.bf16.msra.mxu0 0
  %228 = vmatpush.bf16.msra.mxu0 %v216
  %229 = vmatpush.bf16.msra.mxu0 %v215
  %230 = vmatmul.bf16.gmra.mxu0 %v220
  %v231 = vpop.f32.mrf.mxu0
  %v232 = vadd.f32 0.0, %v231
  %v233 = vpop.f32.mrf.mxu0
  %234 = vdwg.mxu0
  %v235 = vadd.f32 %v206, %v232
  %v236 = vld [vmem:[#allocation3] sm:$0x1]
  %v237 = vld [vmem:[#allocation3 + $0x8] sm:$0x1]
  %v239 = vrot.slane %v237, 7
  %v241 = vsel %vm205, %v236, %v239
  %v246 = vunpack.c.l.b16 %v186
  %v247 = vunpack.c.l.b16 %v187
  %v248 = vunpack.c.l.b16 %v188
  %v249 = vunpack.c.l.b16 %v189
  %v250 = vpack.c.b16 %v247, %v246
  %v251 = vpack.c.b16 %v249, %v248
  %254 = vmatpush.bf16.msra.mxu0 0
  %255 = vmatpush.bf16.msra.mxu0 0
  %256 = vmatpush.bf16.msra.mxu0 0
  %257 = vmatpush.bf16.msra.mxu0 0
  %258 = vmatpush.bf16.msra.mxu0 0
  %259 = vmatpush.bf16.msra.mxu0 0
  %260 = vmatpush.bf16.msra.mxu0 %v251
  %261 = vmatpush.bf16.msra.mxu0 %v250
  %262 = vmatmul.bf16.gmra.mxu0 %v220
  %v263 = vpop.f32.mrf.mxu0
  %v264 = vadd.f32 0.0, %v263
  %v265 = vpop.f32.mrf.mxu0
  %266 = vdwg.mxu0
  %v267 = vadd.f32 %v241, %v264
  %v268 = vld [vmem:[#allocation4] sm:$0x1]
  %v269 = vld [vmem:[#allocation4 + $0x8] sm:$0x1]
  %v271 = vrot.slane %v269, 7
  %v273 = vsel %vm205, %v268, %v271
  %v278 = vunpack.c.l.b16 %v191
  %v279 = vunpack.c.l.b16 %v192
  %v280 = vunpack.c.l.b16 %v193
  %v281 = vunpack.c.l.b16 %v194
  %v282 = vpack.c.b16 %v279, %v278
  %v283 = vpack.c.b16 %v281, %v280
  %286 = vmatpush.bf16.msra.mxu0 0
  %287 = vmatpush.bf16.msra.mxu0 0
  %288 = vmatpush.bf16.msra.mxu0 0
  %289 = vmatpush.bf16.msra.mxu0 0
  %290 = vmatpush.bf16.msra.mxu0 0
  %291 = vmatpush.bf16.msra.mxu0 0
  %292 = vmatpush.bf16.msra.mxu0 %v283
  %293 = vmatpush.bf16.msra.mxu0 %v282
  %294 = vmatmul.bf16.gmra.mxu0 %v220
  %v295 = vpop.f32.mrf.mxu0
  %v296 = vadd.f32 0.0, %v295
  %v297 = vpop.f32.mrf.mxu0
  %298 = vdwg.mxu0
  %v299 = vadd.f32 %v273, %v296
  %v300 = vld [vmem:[#allocation5] sm:$0x1]
  %v301 = vld [vmem:[#allocation5 + $0x8] sm:$0x1]
  %v303 = vrot.slane %v301, 7
  %v305 = vsel %vm205, %v300, %v303
  %v310 = vunpack.c.l.b16 %v196
  %v311 = vunpack.c.l.b16 %v197
  %v312 = vunpack.c.l.b16 %v198
  %v313 = vunpack.c.l.b16 %v199
  %v314 = vpack.c.b16 %v311, %v310
  %v315 = vpack.c.b16 %v313, %v312
  %318 = vmatpush.bf16.msra.mxu0 0
  %319 = vmatpush.bf16.msra.mxu0 0
  %320 = vmatpush.bf16.msra.mxu0 0
  %321 = vmatpush.bf16.msra.mxu0 0
  %322 = vmatpush.bf16.msra.mxu0 0
  %323 = vmatpush.bf16.msra.mxu0 0
  %324 = vmatpush.bf16.msra.mxu0 %v315
  %325 = vmatpush.bf16.msra.mxu0 %v314
  %326 = vmatmul.bf16.gmra.mxu0 %v220
  %v327 = vpop.f32.mrf.mxu0
  %v328 = vadd.f32 0.0, %v327
  %v329 = vpop.f32.mrf.mxu0
  %330 = vdwg.mxu0
  %v331 = vadd.f32 %v305, %v328
  %v332 = vxor.u32 %v235, 2147483648
  %v333 = vmul.f32 %v332, 1.442695
  %v334 = vpow.pop %v333
  %v335 = vadd.f32 %v334, 1.0
  %v336 = vrcp.pop %v335
  %v337 = vmul.f32 %v335, %v336
  %v338 = vsub.f32 1.0, %v337
  %v339 = vmul.f32 %v336, %v338
  %v340 = vadd.f32 %v336, %v339
  %vm341 = vweird.f32 %v335
  %vm342 = vweird.f32 %v336
  %vm343 = vmor %vm341, %vm342
  %v344 = vsel %vm343, %v336, %v340
  %v345 = vand.u32 2147483647, %v335
  %vm346 = vcmp.eq.f32.partialorder %v345, 8.507059e+37
  %v347 = vand.u32 %v335, 2147483648
  %v348 = vor.u32 1.1754944e-38, %v347
  %v349 = vsel %vm346, %v348, %v344
  %v350 = vmul.f32 1.0, %v349
  %v351 = vxor.u32 %v267, 2147483648
  %v352 = vmul.f32 %v351, 1.442695
  %v353 = vpow.pop %v352
  %v354 = vadd.f32 %v353, 1.0
  %v355 = vrcp.pop %v354
  %v356 = vmul.f32 %v354, %v355
  %v357 = vsub.f32 1.0, %v356
  %v358 = vmul.f32 %v355, %v357
  %v359 = vadd.f32 %v355, %v358
  %vm360 = vweird.f32 %v354
  %vm361 = vweird.f32 %v355
  %vm362 = vmor %vm360, %vm361
  %v363 = vsel %vm362, %v355, %v359
  %v364 = vand.u32 2147483647, %v354
  %vm365 = vcmp.eq.f32.partialorder %v364, 8.507059e+37
  %v366 = vand.u32 %v354, 2147483648
  %v367 = vor.u32 1.1754944e-38, %v366
  %v368 = vsel %vm365, %v367, %v363
  %v369 = vmul.f32 1.0, %v368
  %v370 = vtanh.pop %v299
  %v371 = vxor.u32 %v331, 2147483648
  %v372 = vmul.f32 %v371, 1.442695
  %v373 = vpow.pop %v372
  %v374 = vadd.f32 %v373, 1.0
  %v375 = vrcp.pop %v374
  %v376 = vmul.f32 %v374, %v375
  %v377 = vsub.f32 1.0, %v376
  %v378 = vmul.f32 %v375, %v377
  %v379 = vadd.f32 %v375, %v378
  %vm380 = vweird.f32 %v374
  %vm381 = vweird.f32 %v375
  %vm382 = vmor %vm380, %vm381
  %v383 = vsel %vm382, %v375, %v379
  %v384 = vand.u32 2147483647, %v374
  %vm385 = vcmp.eq.f32.partialorder %v384, 8.507059e+37
  %v386 = vand.u32 %v374, 2147483648
  %v387 = vor.u32 1.1754944e-38, %v386
  %v388 = vsel %vm385, %v387, %v383
  %v389 = vmul.f32 1.0, %v388
  %v390 = vmul.f32 %v369, 0.0
  %v391 = vmul.f32 %v350, %v370
  %v392 = vadd.f32 %v390, %v391
  %v393 = vtanh.pop %v392
  %v394 = vmul.f32 %v389, %v393
  %vm395 = vcmask 253952
  %396 = vst.msk [vmem:[#allocation6] sm:$0x1] %vm395, %v394
  %vm397 = vcmask 254977
  %398 = vst.msk [vmem:[#allocation6 + $0x7] sm:$0x2] %vm397, %v394
  %v399 = vpack.c.bf16 %v394, %v394
  %v400 = vld [vmem:[#allocation2 + $0x1] sm:$0x1]
  %v401 = vld [vmem:[#allocation2 + $0x9] sm:$0x1]
  %v403 = vrot.slane %v401, 7
  %v405 = vsel %vm205, %v400, %v403
  %v407 = vsel %vm47, %v399, 0
  %409 = vmatpush.bf16.msra.mxu0 0
  %410 = vmatpush.bf16.msra.mxu0 0
  %411 = vmatpush.bf16.msra.mxu0 0
  %412 = vmatpush.bf16.msra.mxu0 0
  %413 = vmatpush.bf16.msra.mxu0 0
  %414 = vmatpush.bf16.msra.mxu0 0
  %415 = vmatpush.bf16.msra.mxu0 %v216
  %416 = vmatpush.bf16.msra.mxu0 %v215
  %417 = vmatmul.bf16.gmra.mxu0 %v407
  %v418 = vpop.f32.mrf.mxu0
  %v419 = vadd.f32 0.0, %v418
  %v420 = vpop.f32.mrf.mxu0
  %421 = vdwg.mxu0
  %v422 = vadd.f32 %v405, %v419
  %v423 = vld [vmem:[#allocation3 + $0x1] sm:$0x1]
  %v424 = vld [vmem:[#allocation3 + $0x9] sm:$0x1]
  %v426 = vrot.slane %v424, 7
  %v428 = vsel %vm205, %v423, %v426
  %429 = vmatpush.bf16.msra.mxu0 0
  %430 = vmatpush.bf16.msra.mxu0 0
  %431 = vmatpush.bf16.msra.mxu0 0
  %432 = vmatpush.bf16.msra.mxu0 0
  %433 = vmatpush.bf16.msra.mxu0 0
  %434 = vmatpush.bf16.msra.mxu0 0
  %435 = vmatpush.bf16.msra.mxu0 %v251
  %436 = vmatpush.bf16.msra.mxu0 %v250
  %437 = vmatmul.bf16.gmra.mxu0 %v407
  %v438 = vpop.f32.mrf.mxu0
  %v439 = vadd.f32 0.0, %v438
  %v440 = vpop.f32.mrf.mxu0
  %441 = vdwg.mxu0
  %v442 = vadd.f32 %v428, %v439
  %v443 = vld [vmem:[#allocation4 + $0x1] sm:$0x1]
  %v444 = vld [vmem:[#allocation4 + $0x9] sm:$0x1]
  %v446 = vrot.slane %v444, 7
  %v448 = vsel %vm205, %v443, %v446
  %449 = vmatpush.bf16.msra.mxu0 0
  %450 = vmatpush.bf16.msra.mxu0 0
  %451 = vmatpush.bf16.msra.mxu0 0
  %452 = vmatpush.bf16.msra.mxu0 0
  %453 = vmatpush.bf16.msra.mxu0 0
  %454 = vmatpush.bf16.msra.mxu0 0
  %455 = vmatpush.bf16.msra.mxu0 %v283
  %456 = vmatpush.bf16.msra.mxu0 %v282
  %457 = vmatmul.bf16.gmra.mxu0 %v407
  %v458 = vpop.f32.mrf.mxu0
  %v459 = vadd.f32 0.0, %v458
  %v460 = vpop.f32.mrf.mxu0
  %461 = vdwg.mxu0
  %v462 = vadd.f32 %v448, %v459
  %v463 = vld [vmem:[#allocation5 + $0x1] sm:$0x1]
  %v464 = vld [vmem:[#allocation5 + $0x9] sm:$0x1]
  %v466 = vrot.slane %v464, 7
  %v468 = vsel %vm205, %v463, %v466
  %469 = vmatpush.bf16.msra.mxu0 0
  %470 = vmatpush.bf16.msra.mxu0 0
  %471 = vmatpush.bf16.msra.mxu0 0
  %472 = vmatpush.bf16.msra.mxu0 0
  %473 = vmatpush.bf16.msra.mxu0 0
  %474 = vmatpush.bf16.msra.mxu0 0
  %475 = vmatpush.bf16.msra.mxu0 %v315
  %476 = vmatpush.bf16.msra.mxu0 %v314
  %477 = vmatmul.bf16.gmra.mxu0 %v407
  %v478 = vpop.f32.mrf.mxu0
  %v479 = vadd.f32 0.0, %v478
  %v480 = vpop.f32.mrf.mxu0
  %481 = vdwg.mxu0
  %v482 = vadd.f32 %v468, %v479
  %v483 = vxor.u32 %v422, 2147483648
  %v484 = vmul.f32 %v483, 1.442695
  %v485 = vpow.pop %v484
  %v486 = vadd.f32 %v485, 1.0
  %v487 = vrcp.pop %v486
  %v488 = vmul.f32 %v486, %v487
  %v489 = vsub.f32 1.0, %v488
  %v490 = vmul.f32 %v487, %v489
  %v491 = vadd.f32 %v487, %v490
  %vm492 = vweird.f32 %v486
  %vm493 = vweird.f32 %v487
  %vm494 = vmor %vm492, %vm493
  %v495 = vsel %vm494, %v487, %v491
  %v496 = vand.u32 2147483647, %v486
  %vm497 = vcmp.eq.f32.partialorder %v496, 8.507059e+37
  %v498 = vand.u32 %v486, 2147483648
  %v499 = vor.u32 1.1754944e-38, %v498
  %v500 = vsel %vm497, %v499, %v495
  %v501 = vmul.f32 1.0, %v500
  %v502 = vxor.u32 %v442, 2147483648
  %v503 = vmul.f32 %v502, 1.442695
  %v504 = vpow.pop %v503
  %v505 = vadd.f32 %v504, 1.0
  %v506 = vrcp.pop %v505
  %v507 = vmul.f32 %v505, %v506
  %v508 = vsub.f32 1.0, %v507
  %v509 = vmul.f32 %v506, %v508
  %v510 = vadd.f32 %v506, %v509
  %vm511 = vweird.f32 %v505
  %vm512 = vweird.f32 %v506
  %vm513 = vmor %vm511, %vm512
  %v514 = vsel %vm513, %v506, %v510
  %v515 = vand.u32 2147483647, %v505
  %vm516 = vcmp.eq.f32.partialorder %v515, 8.507059e+37
  %v517 = vand.u32 %v505, 2147483648
  %v518 = vor.u32 1.1754944e-38, %v517
  %v519 = vsel %vm516, %v518, %v514
  %v520 = vmul.f32 1.0, %v519
  %v521 = vtanh.pop %v462
  %v522 = vxor.u32 %v482, 2147483648
  %v523 = vmul.f32 %v522, 1.442695
  %v524 = vpow.pop %v523
  %v525 = vadd.f32 %v524, 1.0
  %v526 = vrcp.pop %v525
  %v527 = vmul.f32 %v525, %v526
  %v528 = vsub.f32 1.0, %v527
  %v529 = vmul.f32 %v526, %v528
  %v530 = vadd.f32 %v526, %v529
  %vm531 = vweird.f32 %v525
  %vm532 = vweird.f32 %v526
  %vm533 = vmor %vm531, %vm532
  %v534 = vsel %vm533, %v526, %v530
  %v535 = vand.u32 2147483647, %v525
  %vm536 = vcmp.eq.f32.partialorder %v535, 8.507059e+37
  %v537 = vand.u32 %v525, 2147483648
  %v538 = vor.u32 1.1754944e-38, %v537
  %v539 = vsel %vm536, %v538, %v534
  %v540 = vmul.f32 1.0, %v539
  %v541 = vmul.f32 %v520, %v392
  %v542 = vmul.f32 %v501, %v521
  %v543 = vadd.f32 %v541, %v542
  %v544 = vtanh.pop %v543
  %v545 = vmul.f32 %v540, %v544
  %546 = vst.msk [vmem:[#allocation6 + $0x1] sm:$0x1] %vm395, %v545
  %547 = vst.msk [vmem:[#allocation6 + $0x8] sm:$0x2] %vm397, %v545
  %v548 = vpack.c.bf16 %v545, %v545
  %v549 = vld [vmem:[#allocation2 + $0x2] sm:$0x1]
  %v550 = vld [vmem:[#allocation2 + $0xa] sm:$0x1]
  %v552 = vrot.slane %v550, 7
  %v554 = vsel %vm205, %v549, %v552
  %v556 = vsel %vm47, %v548, 0
  %558 = vmatpush.bf16.msra.mxu0 0
  %559 = vmatpush.bf16.msra.mxu0 0
  %560 = vmatpush.bf16.msra.mxu0 0
  %561 = vmatpush.bf16.msra.mxu0 0
  %562 = vmatpush.bf16.msra.mxu0 0
  %563 = vmatpush.bf16.msra.mxu0 0
  %564 = vmatpush.bf16.msra.mxu0 %v216
  %565 = vmatpush.bf16.msra.mxu0 %v215
  %566 = vmatmul.bf16.gmra.mxu0 %v556
  %v567 = vpop.f32.mrf.mxu0
  %v568 = vadd.f32 0.0, %v567
  %v569 = vpop.f32.mrf.mxu0
  %570 = vdwg.mxu0
  %v571 = vadd.f32 %v554, %v568
  %v572 = vld [vmem:[#allocation3 + $0x2] sm:$0x1]
  %v573 = vld [vmem:[#allocation3 + $0xa] sm:$0x1]
  %v575 = vrot.slane %v573, 7
  %v577 = vsel %vm205, %v572, %v575
  %578 = vmatpush.bf16.msra.mxu0 0
  %579 = vmatpush.bf16.msra.mxu0 0
  %580 = vmatpush.bf16.msra.mxu0 0
  %581 = vmatpush.bf16.msra.mxu0 0
  %582 = vmatpush.bf16.msra.mxu0 0
  %583 = vmatpush.bf16.msra.mxu0 0
  %584 = vmatpush.bf16.msra.mxu0 %v251
  %585 = vmatpush.bf16.msra.mxu0 %v250
  %586 = vmatmul.bf16.gmra.mxu0 %v556
  %v587 = vpop.f32.mrf.mxu0
  %v588 = vadd.f32 0.0, %v587
  %v589 = vpop.f32.mrf.mxu0
  %590 = vdwg.mxu0
  %v591 = vadd.f32 %v577, %v588
  %v592 = vld [vmem:[#allocation4 + $0x2] sm:$0x1]
  %v593 = vld [vmem:[#allocation4 + $0xa] sm:$0x1]
  %v595 = vrot.slane %v593, 7
  %v597 = vsel %vm205, %v592, %v595
  %598 = vmatpush.bf16.msra.mxu0 0
  %599 = vmatpush.bf16.msra.mxu0 0
  %600 = vmatpush.bf16.msra.mxu0 0
  %601 = vmatpush.bf16.msra.mxu0 0
  %602 = vmatpush.bf16.msra.mxu0 0
  %603 = vmatpush.bf16.msra.mxu0 0
  %604 = vmatpush.bf16.msra.mxu0 %v283
  %605 = vmatpush.bf16.msra.mxu0 %v282
  %606 = vmatmul.bf16.gmra.mxu0 %v556
  %v607 = vpop.f32.mrf.mxu0
  %v608 = vadd.f32 0.0, %v607
  %v609 = vpop.f32.mrf.mxu0
  %610 = vdwg.mxu0
  %v611 = vadd.f32 %v597, %v608
  %v612 = vld [vmem:[#allocation5 + $0x2] sm:$0x1]
  %v613 = vld [vmem:[#allocation5 + $0xa] sm:$0x1]
  %v615 = vrot.slane %v613, 7
  %v617 = vsel %vm205, %v612, %v615
  %618 = vmatpush.bf16.msra.mxu0 0
  %619 = vmatpush.bf16.msra.mxu0 0
  %620 = vmatpush.bf16.msra.mxu0 0
  %621 = vmatpush.bf16.msra.mxu0 0
  %622 = vmatpush.bf16.msra.mxu0 0
  %623 = vmatpush.bf16.msra.mxu0 0
  %624 = vmatpush.bf16.msra.mxu0 %v315
  %625 = vmatpush.bf16.msra.mxu0 %v314
  %626 = vmatmul.bf16.gmra.mxu0 %v556
  %v627 = vpop.f32.mrf.mxu0
  %v628 = vadd.f32 0.0, %v627
  %v629 = vpop.f32.mrf.mxu0
  %630 = vdwg.mxu0
  %v631 = vadd.f32 %v617, %v628
  %v632 = vxor.u32 %v571, 2147483648
  %v633 = vmul.f32 %v632, 1.442695
  %v634 = vpow.pop %v633
  %v635 = vadd.f32 %v634, 1.0
  %v636 = vrcp.pop %v635
  %v637 = vmul.f32 %v635, %v636
  %v638 = vsub.f32 1.0, %v637
  %v639 = vmul.f32 %v636, %v638
  %v640 = vadd.f32 %v636, %v639
  %vm641 = vweird.f32 %v635
  %vm642 = vweird.f32 %v636
  %vm643 = vmor %vm641, %vm642
  %v644 = vsel %vm643, %v636, %v640
  %v645 = vand.u32 2147483647, %v635
  %vm646 = vcmp.eq.f32.partialorder %v645, 8.507059e+37
  %v647 = vand.u32 %v635, 2147483648
  %v648 = vor.u32 1.1754944e-38, %v647
  %v649 = vsel %vm646, %v648, %v644
  %v650 = vmul.f32 1.0, %v649
  %v651 = vxor.u32 %v591, 2147483648
  %v652 = vmul.f32 %v651, 1.442695
  %v653 = vpow.pop %v652
  %v654 = vadd.f32 %v653, 1.0
  %v655 = vrcp.pop %v654
  %v656 = vmul.f32 %v654, %v655
  %v657 = vsub.f32 1.0, %v656
  %v658 = vmul.f32 %v655, %v657
  %v659 = vadd.f32 %v655, %v658
  %vm660 = vweird.f32 %v654
  %vm661 = vweird.f32 %v655
  %vm662 = vmor %vm660, %vm661
  %v663 = vsel %vm662, %v655, %v659
  %v664 = vand.u32 2147483647, %v654
  %vm665 = vcmp.eq.f32.partialorder %v664, 8.507059e+37
  %v666 = vand.u32 %v654, 2147483648
  %v667 = vor.u32 1.1754944e-38, %v666
  %v668 = vsel %vm665, %v667, %v663
  %v669 = vmul.f32 1.0, %v668
  %v670 = vtanh.pop %v611
  %v671 = vxor.u32 %v631, 2147483648
  %v672 = vmul.f32 %v671, 1.442695
  %v673 = vpow.pop %v672
  %v674 = vadd.f32 %v673, 1.0
  %v675 = vrcp.pop %v674
  %v676 = vmul.f32 %v674, %v675
  %v677 = vsub.f32 1.0, %v676
  %v678 = vmul.f32 %v675, %v677
  %v679 = vadd.f32 %v675, %v678
  %vm680 = vweird.f32 %v674
  %vm681 = vweird.f32 %v675
  %vm682 = vmor %vm680, %vm681
  %v683 = vsel %vm682, %v675, %v679
  %v684 = vand.u32 2147483647, %v674
  %vm685 = vcmp.eq.f32.partialorder %v684, 8.507059e+37
  %v686 = vand.u32 %v674, 2147483648
  %v687 = vor.u32 1.1754944e-38, %v686
  %v688 = vsel %vm685, %v687, %v683
  %v689 = vmul.f32 1.0, %v688
  %v690 = vmul.f32 %v669, %v543
  %v691 = vmul.f32 %v650, %v670
  %v692 = vadd.f32 %v690, %v691
  %v693 = vtanh.pop %v692
  %v694 = vmul.f32 %v689, %v693
  %695 = vst.msk [vmem:[#allocation6 + $0x2] sm:$0x1] %vm395, %v694
  %696 = vst.msk [vmem:[#allocation6 + $0x9] sm:$0x2] %vm397, %v694
  %v697 = vpack.c.bf16 %v694, %v694
  %v698 = vld [vmem:[#allocation2 + $0x3] sm:$0x1]
  %v699 = vld [vmem:[#allocation2 + $0xb] sm:$0x1]
  %v701 = vrot.slane %v699, 7
  %v703 = vsel %vm205, %v698, %v701
  %v705 = vsel %vm47, %v697, 0
  %707 = vmatpush.bf16.msra.mxu0 0
  %708 = vmatpush.bf16.msra.mxu0 0
  %709 = vmatpush.bf16.msra.mxu0 0
  %710 = vmatpush.bf16.msra.mxu0 0
  %711 = vmatpush.bf16.msra.mxu0 0
  %712 = vmatpush.bf16.msra.mxu0 0
  %713 = vmatpush.bf16.msra.mxu0 %v216
  %714 = vmatpush.bf16.msra.mxu0 %v215
  %715 = vmatmul.bf16.gmra.mxu0 %v705
  %v716 = vpop.f32.mrf.mxu0
  %v717 = vadd.f32 0.0, %v716
  %v718 = vpop.f32.mrf.mxu0
  %719 = vdwg.mxu0
  %v720 = vadd.f32 %v703, %v717
  %v721 = vld [vmem:[#allocation3 + $0x3] sm:$0x1]
  %v722 = vld [vmem:[#allocation3 + $0xb] sm:$0x1]
  %v724 = vrot.slane %v722, 7
  %v726 = vsel %vm205, %v721, %v724
  %727 = vmatpush.bf16.msra.mxu0 0
  %728 = vmatpush.bf16.msra.mxu0 0
  %729 = vmatpush.bf16.msra.mxu0 0
  %730 = vmatpush.bf16.msra.mxu0 0
  %731 = vmatpush.bf16.msra.mxu0 0
  %732 = vmatpush.bf16.msra.mxu0 0
  %733 = vmatpush.bf16.msra.mxu0 %v251
  %734 = vmatpush.bf16.msra.mxu0 %v250
  %735 = vmatmul.bf16.gmra.mxu0 %v705
  %v736 = vpop.f32.mrf.mxu0
  %v737 = vadd.f32 0.0, %v736
  %v738 = vpop.f32.mrf.mxu0
  %739 = vdwg.mxu0
  %v740 = vadd.f32 %v726, %v737
  %v741 = vld [vmem:[#allocation4 + $0x3] sm:$0x1]
  %v742 = vld [vmem:[#allocation4 + $0xb] sm:$0x1]
  %v744 = vrot.slane %v742, 7
  %v746 = vsel %vm205, %v741, %v744
  %747 = vmatpush.bf16.msra.mxu0 0
  %748 = vmatpush.bf16.msra.mxu0 0
  %749 = vmatpush.bf16.msra.mxu0 0
  %750 = vmatpush.bf16.msra.mxu0 0
  %751 = vmatpush.bf16.msra.mxu0 0
  %752 = vmatpush.bf16.msra.mxu0 0
  %753 = vmatpush.bf16.msra.mxu0 %v283
  %754 = vmatpush.bf16.msra.mxu0 %v282
  %755 = vmatmul.bf16.gmra.mxu0 %v705
  %v756 = vpop.f32.mrf.mxu0
  %v757 = vadd.f32 0.0, %v756
  %v758 = vpop.f32.mrf.mxu0
  %759 = vdwg.mxu0
  %v760 = vadd.f32 %v746, %v757
  %v761 = vld [vmem:[#allocation5 + $0x3] sm:$0x1]
  %v762 = vld [vmem:[#allocation5 + $0xb] sm:$0x1]
  %v764 = vrot.slane %v762, 7
  %v766 = vsel %vm205, %v761, %v764
  %767 = vmatpush.bf16.msra.mxu0 0
  %768 = vmatpush.bf16.msra.mxu0 0
  %769 = vmatpush.bf16.msra.mxu0 0
  %770 = vmatpush.bf16.msra.mxu0 0
  %771 = vmatpush.bf16.msra.mxu0 0
  %772 = vmatpush.bf16.msra.mxu0 0
  %773 = vmatpush.bf16.msra.mxu0 %v315
  %774 = vmatpush.bf16.msra.mxu0 %v314
  %775 = vmatmul.bf16.gmra.mxu0 %v705
  %v776 = vpop.f32.mrf.mxu0
  %v777 = vadd.f32 0.0, %v776
  %v778 = vpop.f32.mrf.mxu0
  %779 = vdwg.mxu0
  %v780 = vadd.f32 %v766, %v777
  %v781 = vxor.u32 %v720, 2147483648
  %v782 = vmul.f32 %v781, 1.442695
  %v783 = vpow.pop %v782
  %v784 = vadd.f32 %v783, 1.0
  %v785 = vrcp.pop %v784
  %v786 = vmul.f32 %v784, %v785
  %v787 = vsub.f32 1.0, %v786
  %v788 = vmul.f32 %v785, %v787
  %v789 = vadd.f32 %v785, %v788
  %vm790 = vweird.f32 %v784
  %vm791 = vweird.f32 %v785
  %vm792 = vmor %vm790, %vm791
  %v793 = vsel %vm792, %v785, %v789
  %v794 = vand.u32 2147483647, %v784
  %vm795 = vcmp.eq.f32.partialorder %v794, 8.507059e+37
  %v796 = vand.u32 %v784, 2147483648
  %v797 = vor.u32 1.1754944e-38, %v796
  %v798 = vsel %vm795, %v797, %v793
  %v799 = vmul.f32 1.0, %v798
  %v800 = vxor.u32 %v740, 2147483648
  %v801 = vmul.f32 %v800, 1.442695
  %v802 = vpow.pop %v801
  %v803 = vadd.f32 %v802, 1.0
  %v804 = vrcp.pop %v803
  %v805 = vmul.f32 %v803, %v804
  %v806 = vsub.f32 1.0, %v805
  %v807 = vmul.f32 %v804, %v806
  %v808 = vadd.f32 %v804, %v807
  %vm809 = vweird.f32 %v803
  %vm810 = vweird.f32 %v804
  %vm811 = vmor %vm809, %vm810
  %v812 = vsel %vm811, %v804, %v808
  %v813 = vand.u32 2147483647, %v803
  %vm814 = vcmp.eq.f32.partialorder %v813, 8.507059e+37
  %v815 = vand.u32 %v803, 2147483648
  %v816 = vor.u32 1.1754944e-38, %v815
  %v817 = vsel %vm814, %v816, %v812
  %v818 = vmul.f32 1.0, %v817
  %v819 = vtanh.pop %v760
  %v820 = vxor.u32 %v780, 2147483648
  %v821 = vmul.f32 %v820, 1.442695
  %v822 = vpow.pop %v821
  %v823 = vadd.f32 %v822, 1.0
  %v824 = vrcp.pop %v823
  %v825 = vmul.f32 %v823, %v824
  %v826 = vsub.f32 1.0, %v825
  %v827 = vmul.f32 %v824, %v826
  %v828 = vadd.f32 %v824, %v827
  %vm829 = vweird.f32 %v823
  %vm830 = vweird.f32 %v824
  %vm831 = vmor %vm829, %vm830
  %v832 = vsel %vm831, %v824, %v828
  %v833 = vand.u32 2147483647, %v823
  %vm834 = vcmp.eq.f32.partialorder %v833, 8.507059e+37
  %v835 = vand.u32 %v823, 2147483648
  %v836 = vor.u32 1.1754944e-38, %v835
  %v837 = vsel %vm834, %v836, %v832
  %v838 = vmul.f32 1.0, %v837
  %v839 = vmul.f32 %v818, %v692
  %v840 = vmul.f32 %v799, %v819
  %v841 = vadd.f32 %v839, %v840
  %v842 = vtanh.pop %v841
  %v843 = vmul.f32 %v838, %v842
  %844 = vst.msk [vmem:[#allocation6 + $0x3] sm:$0x1] %vm395, %v843
  %845 = vst.msk [vmem:[#allocation6 + $0xa] sm:$0x2] %vm397, %v843
  %v846 = vpack.c.bf16 %v843, %v843
  %v847 = vld [vmem:[#allocation2 + $0x4] sm:$0x1]
  %v848 = vld [vmem:[#allocation2 + $0xc] sm:$0x1]
  %v850 = vrot.slane %v848, 7
  %v852 = vsel %vm205, %v847, %v850
  %v854 = vsel %vm47, %v846, 0
  %856 = vmatpush.bf16.msra.mxu0 0
  %857 = vmatpush.bf16.msra.mxu0 0
  %858 = vmatpush.bf16.msra.mxu0 0
  %859 = vmatpush.bf16.msra.mxu0 0
  %860 = vmatpush.bf16.msra.mxu0 0
  %861 = vmatpush.bf16.msra.mxu0 0
  %862 = vmatpush.bf16.msra.mxu0 %v216
  %863 = vmatpush.bf16.msra.mxu0 %v215
  %864 = vmatmul.bf16.gmra.mxu0 %v854
  %v865 = vpop.f32.mrf.mxu0
  %v866 = vadd.f32 0.0, %v865
  %v867 = vpop.f32.mrf.mxu0
  %868 = vdwg.mxu0
  %v869 = vadd.f32 %v852, %v866
  %v870 = vld [vmem:[#allocation3 + $0x4] sm:$0x1]
  %v871 = vld [vmem:[#allocation3 + $0xc] sm:$0x1]
  %v873 = vrot.slane %v871, 7
  %v875 = vsel %vm205, %v870, %v873
  %876 = vmatpush.bf16.msra.mxu0 0
  %877 = vmatpush.bf16.msra.mxu0 0
  %878 = vmatpush.bf16.msra.mxu0 0
  %879 = vmatpush.bf16.msra.mxu0 0
  %880 = vmatpush.bf16.msra.mxu0 0
  %881 = vmatpush.bf16.msra.mxu0 0
  %882 = vmatpush.bf16.msra.mxu0 %v251
  %883 = vmatpush.bf16.msra.mxu0 %v250
  %884 = vmatmul.bf16.gmra.mxu0 %v854
  %v885 = vpop.f32.mrf.mxu0
  %v886 = vadd.f32 0.0, %v885
  %v887 = vpop.f32.mrf.mxu0
  %888 = vdwg.mxu0
  %v889 = vadd.f32 %v875, %v886
  %v890 = vld [vmem:[#allocation4 + $0x4] sm:$0x1]
  %v891 = vld [vmem:[#allocation4 + $0xc] sm:$0x1]
  %v893 = vrot.slane %v891, 7
  %v895 = vsel %vm205, %v890, %v893
  %896 = vmatpush.bf16.msra.mxu0 0
  %897 = vmatpush.bf16.msra.mxu0 0
  %898 = vmatpush.bf16.msra.mxu0 0
  %899 = vmatpush.bf16.msra.mxu0 0
  %900 = vmatpush.bf16.msra.mxu0 0
  %901 = vmatpush.bf16.msra.mxu0 0
  %902 = vmatpush.bf16.msra.mxu0 %v283
  %903 = vmatpush.bf16.msra.mxu0 %v282
  %904 = vmatmul.bf16.gmra.mxu0 %v854
  %v905 = vpop.f32.mrf.mxu0
  %v906 = vadd.f32 0.0, %v905
  %v907 = vpop.f32.mrf.mxu0
  %908 = vdwg.mxu0
  %v909 = vadd.f32 %v895, %v906
  %v910 = vld [vmem:[#allocation5 + $0x4] sm:$0x1]
  %v911 = vld [vmem:[#allocation5 + $0xc] sm:$0x1]
  %v913 = vrot.slane %v911, 7
  %v915 = vsel %vm205, %v910, %v913
  %916 = vmatpush.bf16.msra.mxu0 0
  %917 = vmatpush.bf16.msra.mxu0 0
  %918 = vmatpush.bf16.msra.mxu0 0
  %919 = vmatpush.bf16.msra.mxu0 0
  %920 = vmatpush.bf16.msra.mxu0 0
  %921 = vmatpush.bf16.msra.mxu0 0
  %922 = vmatpush.bf16.msra.mxu0 %v315
  %923 = vmatpush.bf16.msra.mxu0 %v314
  %924 = vmatmul.bf16.gmra.mxu0 %v854
  %v925 = vpop.f32.mrf.mxu0
  %v926 = vadd.f32 0.0, %v925
  %v927 = vpop.f32.mrf.mxu0
  %928 = vdwg.mxu0
  %v929 = vadd.f32 %v915, %v926
  %v930 = vxor.u32 %v869, 2147483648
  %v931 = vmul.f32 %v930, 1.442695
  %v932 = vpow.pop %v931
  %v933 = vadd.f32 %v932, 1.0
  %v934 = vrcp.pop %v933
  %v935 = vmul.f32 %v933, %v934
  %v936 = vsub.f32 1.0, %v935
  %v937 = vmul.f32 %v934, %v936
  %v938 = vadd.f32 %v934, %v937
  %vm939 = vweird.f32 %v933
  %vm940 = vweird.f32 %v934
  %vm941 = vmor %vm939, %vm940
  %v942 = vsel %vm941, %v934, %v938
  %v943 = vand.u32 2147483647, %v933
  %vm944 = vcmp.eq.f32.partialorder %v943, 8.507059e+37
  %v945 = vand.u32 %v933, 2147483648
  %v946 = vor.u32 1.1754944e-38, %v945
  %v947 = vsel %vm944, %v946, %v942
  %v948 = vmul.f32 1.0, %v947
  %v949 = vxor.u32 %v889, 2147483648
  %v950 = vmul.f32 %v949, 1.442695
  %v951 = vpow.pop %v950
  %v952 = vadd.f32 %v951, 1.0
  %v953 = vrcp.pop %v952
  %v954 = vmul.f32 %v952, %v953
  %v955 = vsub.f32 1.0, %v954
  %v956 = vmul.f32 %v953, %v955
  %v957 = vadd.f32 %v953, %v956
  %vm958 = vweird.f32 %v952
  %vm959 = vweird.f32 %v953
  %vm960 = vmor %vm958, %vm959
  %v961 = vsel %vm960, %v953, %v957
  %v962 = vand.u32 2147483647, %v952
  %vm963 = vcmp.eq.f32.partialorder %v962, 8.507059e+37
  %v964 = vand.u32 %v952, 2147483648
  %v965 = vor.u32 1.1754944e-38, %v964
  %v966 = vsel %vm963, %v965, %v961
  %v967 = vmul.f32 1.0, %v966
  %v968 = vtanh.pop %v909
  %v969 = vxor.u32 %v929, 2147483648
  %v970 = vmul.f32 %v969, 1.442695
  %v971 = vpow.pop %v970
  %v972 = vadd.f32 %v971, 1.0
  %v973 = vrcp.pop %v972
  %v974 = vmul.f32 %v972, %v973
  %v975 = vsub.f32 1.0, %v974
  %v976 = vmul.f32 %v973, %v975
  %v977 = vadd.f32 %v973, %v976
  %vm978 = vweird.f32 %v972
  %vm979 = vweird.f32 %v973
  %vm980 = vmor %vm978, %vm979
  %v981 = vsel %vm980, %v973, %v977
  %v982 = vand.u32 2147483647, %v972
  %vm983 = vcmp.eq.f32.partialorder %v982, 8.507059e+37
  %v984 = vand.u32 %v972, 2147483648
  %v985 = vor.u32 1.1754944e-38, %v984
  %v986 = vsel %vm983, %v985, %v981
  %v987 = vmul.f32 1.0, %v986
  %v988 = vmul.f32 %v967, %v841
  %v989 = vmul.f32 %v948, %v968
  %v990 = vadd.f32 %v988, %v989
  %v991 = vtanh.pop %v990
  %v992 = vmul.f32 %v987, %v991
  %993 = vst.msk [vmem:[#allocation6 + $0x4] sm:$0x1] %vm395, %v992
  %994 = vst.msk [vmem:[#allocation6 + $0xb] sm:$0x2] %vm397, %v992
  %v995 = vpack.c.bf16 %v992, %v992
  %v996 = vld [vmem:[#allocation2 + $0x5] sm:$0x1]
  %v997 = vld [vmem:[#allocation2 + $0xd] sm:$0x1]
  %v999 = vrot.slane %v997, 7
  %v1001 = vsel %vm205, %v996, %v999
  %v1003 = vsel %vm47, %v995, 0
  %1005 = vmatpush.bf16.msra.mxu0 0
  %1006 = vmatpush.bf16.msra.mxu0 0
  %1007 = vmatpush.bf16.msra.mxu0 0
  %1008 = vmatpush.bf16.msra.mxu0 0
  %1009 = vmatpush.bf16.msra.mxu0 0
  %1010 = vmatpush.bf16.msra.mxu0 0
  %1011 = vmatpush.bf16.msra.mxu0 %v216
  %1012 = vmatpush.bf16.msra.mxu0 %v215
  %1013 = vmatmul.bf16.gmra.mxu0 %v1003
  %v1014 = vpop.f32.mrf.mxu0
  %v1015 = vadd.f32 0.0, %v1014
  %v1016 = vpop.f32.mrf.mxu0
  %1017 = vdwg.mxu0
  %v1018 = vadd.f32 %v1001, %v1015
  %v1019 = vld [vmem:[#allocation3 + $0x5] sm:$0x1]
  %v1020 = vld [vmem:[#allocation3 + $0xd] sm:$0x1]
  %v1022 = vrot.slane %v1020, 7
  %v1024 = vsel %vm205, %v1019, %v1022
  %1025 = vmatpush.bf16.msra.mxu0 0
  %1026 = vmatpush.bf16.msra.mxu0 0
  %1027 = vmatpush.bf16.msra.mxu0 0
  %1028 = vmatpush.bf16.msra.mxu0 0
  %1029 = vmatpush.bf16.msra.mxu0 0
  %1030 = vmatpush.bf16.msra.mxu0 0
  %1031 = vmatpush.bf16.msra.mxu0 %v251
  %1032 = vmatpush.bf16.msra.mxu0 %v250
  %1033 = vmatmul.bf16.gmra.mxu0 %v1003
  %v1034 = vpop.f32.mrf.mxu0
  %v1035 = vadd.f32 0.0, %v1034
  %v1036 = vpop.f32.mrf.mxu0
  %1037 = vdwg.mxu0
  %v1038 = vadd.f32 %v1024, %v1035
  %v1039 = vld [vmem:[#allocation4 + $0x5] sm:$0x1]
  %v1040 = vld [vmem:[#allocation4 + $0xd] sm:$0x1]
  %v1042 = vrot.slane %v1040, 7
  %v1044 = vsel %vm205, %v1039, %v1042
  %1045 = vmatpush.bf16.msra.mxu0 0
  %1046 = vmatpush.bf16.msra.mxu0 0
  %1047 = vmatpush.bf16.msra.mxu0 0
  %1048 = vmatpush.bf16.msra.mxu0 0
  %1049 = vmatpush.bf16.msra.mxu0 0
  %1050 = vmatpush.bf16.msra.mxu0 0
  %1051 = vmatpush.bf16.msra.mxu0 %v283
  %1052 = vmatpush.bf16.msra.mxu0 %v282
  %1053 = vmatmul.bf16.gmra.mxu0 %v1003
  %v1054 = vpop.f32.mrf.mxu0
  %v1055 = vadd.f32 0.0, %v1054
  %v1056 = vpop.f32.mrf.mxu0
  %1057 = vdwg.mxu0
  %v1058 = vadd.f32 %v1044, %v1055
  %v1059 = vld [vmem:[#allocation5 + $0x5] sm:$0x1]
  %v1060 = vld [vmem:[#allocation5 + $0xd] sm:$0x1]
  %v1062 = vrot.slane %v1060, 7
  %v1064 = vsel %vm205, %v1059, %v1062
  %1065 = vmatpush.bf16.msra.mxu0 0
  %1066 = vmatpush.bf16.msra.mxu0 0
  %1067 = vmatpush.bf16.msra.mxu0 0
  %1068 = vmatpush.bf16.msra.mxu0 0
  %1069 = vmatpush.bf16.msra.mxu0 0
  %1070 = vmatpush.bf16.msra.mxu0 0
  %1071 = vmatpush.bf16.msra.mxu0 %v315
  %1072 = vmatpush.bf16.msra.mxu0 %v314
  %1073 = vmatmul.bf16.gmra.mxu0 %v1003
  %v1074 = vpop.f32.mrf.mxu0
  %v1075 = vadd.f32 0.0, %v1074
  %v1076 = vpop.f32.mrf.mxu0
  %1077 = vdwg.mxu0
  %v1078 = vadd.f32 %v1064, %v1075
  %v1079 = vxor.u32 %v1018, 2147483648
  %v1080 = vmul.f32 %v1079, 1.442695
  %v1081 = vpow.pop %v1080
  %v1082 = vadd.f32 %v1081, 1.0
  %v1083 = vrcp.pop %v1082
  %v1084 = vmul.f32 %v1082, %v1083
  %v1085 = vsub.f32 1.0, %v1084
  %v1086 = vmul.f32 %v1083, %v1085
  %v1087 = vadd.f32 %v1083, %v1086
  %vm1088 = vweird.f32 %v1082
  %vm1089 = vweird.f32 %v1083
  %vm1090 = vmor %vm1088, %vm1089
  %v1091 = vsel %vm1090, %v1083, %v1087
  %v1092 = vand.u32 2147483647, %v1082
  %vm1093 = vcmp.eq.f32.partialorder %v1092, 8.507059e+37
  %v1094 = vand.u32 %v1082, 2147483648
  %v1095 = vor.u32 1.1754944e-38, %v1094
  %v1096 = vsel %vm1093, %v1095, %v1091
  %v1097 = vmul.f32 1.0, %v1096
  %v1098 = vxor.u32 %v1038, 2147483648
  %v1099 = vmul.f32 %v1098, 1.442695
  %v1100 = vpow.pop %v1099
  %v1101 = vadd.f32 %v1100, 1.0
  %v1102 = vrcp.pop %v1101
  %v1103 = vmul.f32 %v1101, %v1102
  %v1104 = vsub.f32 1.0, %v1103
  %v1105 = vmul.f32 %v1102, %v1104
  %v1106 = vadd.f32 %v1102, %v1105
  %vm1107 = vweird.f32 %v1101
  %vm1108 = vweird.f32 %v1102
  %vm1109 = vmor %vm1107, %vm1108
  %v1110 = vsel %vm1109, %v1102, %v1106
  %v1111 = vand.u32 2147483647, %v1101
  %vm1112 = vcmp.eq.f32.partialorder %v1111, 8.507059e+37
  %v1113 = vand.u32 %v1101, 2147483648
  %v1114 = vor.u32 1.1754944e-38, %v1113
  %v1115 = vsel %vm1112, %v1114, %v1110
  %v1116 = vmul.f32 1.0, %v1115
  %v1117 = vtanh.pop %v1058
  %v1118 = vxor.u32 %v1078, 2147483648
  %v1119 = vmul.f32 %v1118, 1.442695
  %v1120 = vpow.pop %v1119
  %v1121 = vadd.f32 %v1120, 1.0
  %v1122 = vrcp.pop %v1121
  %v1123 = vmul.f32 %v1121, %v1122
  %v1124 = vsub.f32 1.0, %v1123
  %v1125 = vmul.f32 %v1122, %v1124
  %v1126 = vadd.f32 %v1122, %v1125
  %vm1127 = vweird.f32 %v1121
  %vm1128 = vweird.f32 %v1122
  %vm1129 = vmor %vm1127, %vm1128
  %v1130 = vsel %vm1129, %v1122, %v1126
  %v1131 = vand.u32 2147483647, %v1121
  %vm1132 = vcmp.eq.f32.partialorder %v1131, 8.507059e+37
  %v1133 = vand.u32 %v1121, 2147483648
  %v1134 = vor.u32 1.1754944e-38, %v1133
  %v1135 = vsel %vm1132, %v1134, %v1130
  %v1136 = vmul.f32 1.0, %v1135
  %v1137 = vmul.f32 %v1116, %v990
  %v1138 = vmul.f32 %v1097, %v1117
  %v1139 = vadd.f32 %v1137, %v1138
  %v1140 = vtanh.pop %v1139
  %v1141 = vmul.f32 %v1136, %v1140
  %1142 = vst.msk [vmem:[#allocation6 + $0x5] sm:$0x1] %vm395, %v1141
  %1143 = vst.msk [vmem:[#allocation6 + $0xc] sm:$0x2] %vm397, %v1141
  %v1144 = vpack.c.bf16 %v1141, %v1141
  %v1145 = vld [vmem:[#allocation2 + $0x6] sm:$0x1]
  %v1146 = vld [vmem:[#allocation2 + $0xe] sm:$0x1]
  %v1148 = vrot.slane %v1146, 7
  %v1150 = vsel %vm205, %v1145, %v1148
  %v1152 = vsel %vm47, %v1144, 0
  %1154 = vmatpush.bf16.msra.mxu0 0
  %1155 = vmatpush.bf16.msra.mxu0 0
  %1156 = vmatpush.bf16.msra.mxu0 0
  %1157 = vmatpush.bf16.msra.mxu0 0
  %1158 = vmatpush.bf16.msra.mxu0 0
  %1159 = vmatpush.bf16.msra.mxu0 0
  %1160 = vmatpush.bf16.msra.mxu0 %v216
  %1161 = vmatpush.bf16.msra.mxu0 %v215
  %1162 = vmatmul.bf16.gmra.mxu0 %v1152
  %v1163 = vpop.f32.mrf.mxu0
  %v1164 = vadd.f32 0.0, %v1163
  %v1165 = vpop.f32.mrf.mxu0
  %1166 = vdwg.mxu0
  %v1167 = vadd.f32 %v1150, %v1164
  %v1168 = vld [vmem:[#allocation3 + $0x6] sm:$0x1]
  %v1169 = vld [vmem:[#allocation3 + $0xe] sm:$0x1]
  %v1171 = vrot.slane %v1169, 7
  %v1173 = vsel %vm205, %v1168, %v1171
  %1174 = vmatpush.bf16.msra.mxu0 0
  %1175 = vmatpush.bf16.msra.mxu0 0
  %1176 = vmatpush.bf16.msra.mxu0 0
  %1177 = vmatpush.bf16.msra.mxu0 0
  %1178 = vmatpush.bf16.msra.mxu0 0
  %1179 = vmatpush.bf16.msra.mxu0 0
  %1180 = vmatpush.bf16.msra.mxu0 %v251
  %1181 = vmatpush.bf16.msra.mxu0 %v250
  %1182 = vmatmul.bf16.gmra.mxu0 %v1152
  %v1183 = vpop.f32.mrf.mxu0
  %v1184 = vadd.f32 0.0, %v1183
  %v1185 = vpop.f32.mrf.mxu0
  %1186 = vdwg.mxu0
  %v1187 = vadd.f32 %v1173, %v1184
  %v1188 = vld [vmem:[#allocation4 + $0x6] sm:$0x1]
  %v1189 = vld [vmem:[#allocation4 + $0xe] sm:$0x1]
  %v1191 = vrot.slane %v1189, 7
  %v1193 = vsel %vm205, %v1188, %v1191
  %1194 = vmatpush.bf16.msra.mxu0 0
  %1195 = vmatpush.bf16.msra.mxu0 0
  %1196 = vmatpush.bf16.msra.mxu0 0
  %1197 = vmatpush.bf16.msra.mxu0 0
  %1198 = vmatpush.bf16.msra.mxu0 0
  %1199 = vmatpush.bf16.msra.mxu0 0
  %1200 = vmatpush.bf16.msra.mxu0 %v283
  %1201 = vmatpush.bf16.msra.mxu0 %v282
  %1202 = vmatmul.bf16.gmra.mxu0 %v1152
  %v1203 = vpop.f32.mrf.mxu0
  %v1204 = vadd.f32 0.0, %v1203
  %v1205 = vpop.f32.mrf.mxu0
  %1206 = vdwg.mxu0
  %v1207 = vadd.f32 %v1193, %v1204
  %v1208 = vld [vmem:[#allocation5 + $0x6] sm:$0x1]
  %v1209 = vld [vmem:[#allocation5 + $0xe] sm:$0x1]
  %v1211 = vrot.slane %v1209, 7
  %v1213 = vsel %vm205, %v1208, %v1211
  %1214 = vmatpush.bf16.msra.mxu0 0
  %1215 = vmatpush.bf16.msra.mxu0 0
  %1216 = vmatpush.bf16.msra.mxu0 0
  %1217 = vmatpush.bf16.msra.mxu0 0
  %1218 = vmatpush.bf16.msra.mxu0 0
  %1219 = vmatpush.bf16.msra.mxu0 0
  %1220 = vmatpush.bf16.msra.mxu0 %v315
  %1221 = vmatpush.bf16.msra.mxu0 %v314
  %1222 = vmatmul.bf16.gmra.mxu0 %v1152
  %v1223 = vpop.f32.mrf.mxu0
  %v1224 = vadd.f32 0.0, %v1223
  %v1225 = vpop.f32.mrf.mxu0
  %1226 = vdwg.mxu0
  %v1227 = vadd.f32 %v1213, %v1224
  %v1228 = vxor.u32 %v1167, 2147483648
  %v1229 = vmul.f32 %v1228, 1.442695
  %v1230 = vpow.pop %v1229
  %v1231 = vadd.f32 %v1230, 1.0
  %v1232 = vrcp.pop %v1231
  %v1233 = vmul.f32 %v1231, %v1232
  %v1234 = vsub.f32 1.0, %v1233
  %v1235 = vmul.f32 %v1232, %v1234
  %v1236 = vadd.f32 %v1232, %v1235
  %vm1237 = vweird.f32 %v1231
  %vm1238 = vweird.f32 %v1232
  %vm1239 = vmor %vm1237, %vm1238
  %v1240 = vsel %vm1239, %v1232, %v1236
  %v1241 = vand.u32 2147483647, %v1231
  %vm1242 = vcmp.eq.f32.partialorder %v1241, 8.507059e+37
  %v1243 = vand.u32 %v1231, 2147483648
  %v1244 = vor.u32 1.1754944e-38, %v1243
  %v1245 = vsel %vm1242, %v1244, %v1240
  %v1246 = vmul.f32 1.0, %v1245
  %v1247 = vxor.u32 %v1187, 2147483648
  %v1248 = vmul.f32 %v1247, 1.442695
  %v1249 = vpow.pop %v1248
  %v1250 = vadd.f32 %v1249, 1.0
  %v1251 = vrcp.pop %v1250
  %v1252 = vmul.f32 %v1250, %v1251
  %v1253 = vsub.f32 1.0, %v1252
  %v1254 = vmul.f32 %v1251, %v1253
  %v1255 = vadd.f32 %v1251, %v1254
  %vm1256 = vweird.f32 %v1250
  %vm1257 = vweird.f32 %v1251
  %vm1258 = vmor %vm1256, %vm1257
  %v1259 = vsel %vm1258, %v1251, %v1255
  %v1260 = vand.u32 2147483647, %v1250
  %vm1261 = vcmp.eq.f32.partialorder %v1260, 8.507059e+37
  %v1262 = vand.u32 %v1250, 2147483648
  %v1263 = vor.u32 1.1754944e-38, %v1262
  %v1264 = vsel %vm1261, %v1263, %v1259
  %v1265 = vmul.f32 1.0, %v1264
  %v1266 = vtanh.pop %v1207
  %v1267 = vxor.u32 %v1227, 2147483648
  %v1268 = vmul.f32 %v1267, 1.442695
  %v1269 = vpow.pop %v1268
  %v1270 = vadd.f32 %v1269, 1.0
  %v1271 = vrcp.pop %v1270
  %v1272 = vmul.f32 %v1270, %v1271
  %v1273 = vsub.f32 1.0, %v1272
  %v1274 = vmul.f32 %v1271, %v1273
  %v1275 = vadd.f32 %v1271, %v1274
  %vm1276 = vweird.f32 %v1270
  %vm1277 = vweird.f32 %v1271
  %vm1278 = vmor %vm1276, %vm1277
  %v1279 = vsel %vm1278, %v1271, %v1275
  %v1280 = vand.u32 2147483647, %v1270
  %vm1281 = vcmp.eq.f32.partialorder %v1280, 8.507059e+37
  %v1282 = vand.u32 %v1270, 2147483648
  %v1283 = vor.u32 1.1754944e-38, %v1282
  %v1284 = vsel %vm1281, %v1283, %v1279
  %v1285 = vmul.f32 1.0, %v1284
  %v1286 = vmul.f32 %v1265, %v1139
  %v1287 = vmul.f32 %v1246, %v1266
  %v1288 = vadd.f32 %v1286, %v1287
  %v1289 = vtanh.pop %v1288
  %v1290 = vmul.f32 %v1285, %v1289
  %1291 = vst.msk [vmem:[#allocation6 + $0x6] sm:$0x1] %vm395, %v1290
  %1292 = vst.msk [vmem:[#allocation6 + $0xd] sm:$0x2] %vm397, %v1290
  %v1293 = vpack.c.bf16 %v1290, %v1290
  %v1294 = vld [vmem:[#allocation2 + $0x7] sm:$0x1]
  %v1295 = vld [vmem:[#allocation2 + $0xf] sm:$0x1]
  %v1297 = vrot.slane %v1295, 7
  %v1299 = vsel %vm205, %v1294, %v1297
  %v1301 = vsel %vm47, %v1293, 0
  %1303 = vmatpush.bf16.msra.mxu0 0
  %1304 = vmatpush.bf16.msra.mxu0 0
  %1305 = vmatpush.bf16.msra.mxu0 0
  %1306 = vmatpush.bf16.msra.mxu0 0
  %1307 = vmatpush.bf16.msra.mxu0 0
  %1308 = vmatpush.bf16.msra.mxu0 0
  %1309 = vmatpush.bf16.msra.mxu0 %v216
  %1310 = vmatpush.bf16.msra.mxu0 %v215
  %1311 = vmatmul.bf16.gmra.mxu0 %v1301
  %v1312 = vpop.f32.mrf.mxu0
  %v1313 = vadd.f32 0.0, %v1312
  %v1314 = vpop.f32.mrf.mxu0
  %1315 = vdwg.mxu0
  %v1316 = vadd.f32 %v1299, %v1313
  %v1317 = vld [vmem:[#allocation3 + $0x7] sm:$0x1]
  %v1318 = vld [vmem:[#allocation3 + $0xf] sm:$0x1]
  %v1320 = vrot.slane %v1318, 7
  %v1322 = vsel %vm205, %v1317, %v1320
  %1323 = vmatpush.bf16.msra.mxu0 0
  %1324 = vmatpush.bf16.msra.mxu0 0
  %1325 = vmatpush.bf16.msra.mxu0 0
  %1326 = vmatpush.bf16.msra.mxu0 0
  %1327 = vmatpush.bf16.msra.mxu0 0
  %1328 = vmatpush.bf16.msra.mxu0 0
  %1329 = vmatpush.bf16.msra.mxu0 %v251
  %1330 = vmatpush.bf16.msra.mxu0 %v250
  %1331 = vmatmul.bf16.gmra.mxu0 %v1301
  %v1332 = vpop.f32.mrf.mxu0
  %v1333 = vadd.f32 0.0, %v1332
  %v1334 = vpop.f32.mrf.mxu0
  %1335 = vdwg.mxu0
  %v1336 = vadd.f32 %v1322, %v1333
  %v1337 = vld [vmem:[#allocation4 + $0x7] sm:$0x1]
  %v1338 = vld [vmem:[#allocation4 + $0xf] sm:$0x1]
  %v1340 = vrot.slane %v1338, 7
  %v1342 = vsel %vm205, %v1337, %v1340
  %1343 = vmatpush.bf16.msra.mxu0 0
  %1344 = vmatpush.bf16.msra.mxu0 0
  %1345 = vmatpush.bf16.msra.mxu0 0
  %1346 = vmatpush.bf16.msra.mxu0 0
  %1347 = vmatpush.bf16.msra.mxu0 0
  %1348 = vmatpush.bf16.msra.mxu0 0
  %1349 = vmatpush.bf16.msra.mxu0 %v283
  %1350 = vmatpush.bf16.msra.mxu0 %v282
  %1351 = vmatmul.bf16.gmra.mxu0 %v1301
  %v1352 = vpop.f32.mrf.mxu0
  %v1353 = vadd.f32 0.0, %v1352
  %v1354 = vpop.f32.mrf.mxu0
  %1355 = vdwg.mxu0
  %v1356 = vadd.f32 %v1342, %v1353
  %v1357 = vld [vmem:[#allocation5 + $0x7] sm:$0x1]
  %v1358 = vld [vmem:[#allocation5 + $0xf] sm:$0x1]
  %v1360 = vrot.slane %v1358, 7
  %v1362 = vsel %vm205, %v1357, %v1360
  %1363 = vmatpush.bf16.msra.mxu0 0
  %1364 = vmatpush.bf16.msra.mxu0 0
  %1365 = vmatpush.bf16.msra.mxu0 0
  %1366 = vmatpush.bf16.msra.mxu0 0
  %1367 = vmatpush.bf16.msra.mxu0 0
  %1368 = vmatpush.bf16.msra.mxu0 0
  %1369 = vmatpush.bf16.msra.mxu0 %v315
  %1370 = vmatpush.bf16.msra.mxu0 %v314
  %1371 = vmatmul.bf16.gmra.mxu0 %v1301
  %v1372 = vpop.f32.mrf.mxu0
  %v1373 = vadd.f32 0.0, %v1372
  %v1374 = vpop.f32.mrf.mxu0
  %1375 = vdwg.mxu0
  %v1376 = vadd.f32 %v1362, %v1373
  %v1377 = vxor.u32 %v1316, 2147483648
  %v1378 = vmul.f32 %v1377, 1.442695
  %v1379 = vpow.pop %v1378
  %v1380 = vadd.f32 %v1379, 1.0
  %v1381 = vrcp.pop %v1380
  %v1382 = vmul.f32 %v1380, %v1381
  %v1383 = vsub.f32 1.0, %v1382
  %v1384 = vmul.f32 %v1381, %v1383
  %v1385 = vadd.f32 %v1381, %v1384
  %vm1386 = vweird.f32 %v1380
  %vm1387 = vweird.f32 %v1381
  %vm1388 = vmor %vm1386, %vm1387
  %v1389 = vsel %vm1388, %v1381, %v1385
  %v1390 = vand.u32 2147483647, %v1380
  %vm1391 = vcmp.eq.f32.partialorder %v1390, 8.507059e+37
  %v1392 = vand.u32 %v1380, 2147483648
  %v1393 = vor.u32 1.1754944e-38, %v1392
  %v1394 = vsel %vm1391, %v1393, %v1389
  %v1395 = vmul.f32 1.0, %v1394
  %v1396 = vxor.u32 %v1336, 2147483648
  %v1397 = vmul.f32 %v1396, 1.442695
  %v1398 = vpow.pop %v1397
  %v1399 = vadd.f32 %v1398, 1.0
  %v1400 = vrcp.pop %v1399
  %v1401 = vmul.f32 %v1399, %v1400
  %v1402 = vsub.f32 1.0, %v1401
  %v1403 = vmul.f32 %v1400, %v1402
  %v1404 = vadd.f32 %v1400, %v1403
  %vm1405 = vweird.f32 %v1399
  %vm1406 = vweird.f32 %v1400
  %vm1407 = vmor %vm1405, %vm1406
  %v1408 = vsel %vm1407, %v1400, %v1404
  %v1409 = vand.u32 2147483647, %v1399
  %vm1410 = vcmp.eq.f32.partialorder %v1409, 8.507059e+37
  %v1411 = vand.u32 %v1399, 2147483648
  %v1412 = vor.u32 1.1754944e-38, %v1411
  %v1413 = vsel %vm1410, %v1412, %v1408
  %v1414 = vmul.f32 1.0, %v1413
  %v1415 = vtanh.pop %v1356
  %v1416 = vxor.u32 %v1376, 2147483648
  %v1417 = vmul.f32 %v1416, 1.442695
  %v1418 = vpow.pop %v1417
  %v1419 = vadd.f32 %v1418, 1.0
  %v1420 = vrcp.pop %v1419
  %v1421 = vmul.f32 %v1419, %v1420
  %v1422 = vsub.f32 1.0, %v1421
  %v1423 = vmul.f32 %v1420, %v1422
  %v1424 = vadd.f32 %v1420, %v1423
  %vm1425 = vweird.f32 %v1419
  %vm1426 = vweird.f32 %v1420
  %vm1427 = vmor %vm1425, %vm1426
  %v1428 = vsel %vm1427, %v1420, %v1424
  %v1429 = vand.u32 2147483647, %v1419
  %vm1430 = vcmp.eq.f32.partialorder %v1429, 8.507059e+37
  %v1431 = vand.u32 %v1419, 2147483648
  %v1432 = vor.u32 1.1754944e-38, %v1431
  %v1433 = vsel %vm1430, %v1432, %v1428
  %v1434 = vmul.f32 1.0, %v1433
  %v1435 = vmul.f32 %v1414, %v1288
  %v1436 = vmul.f32 %v1395, %v1415
  %v1437 = vadd.f32 %v1435, %v1436
  %v1438 = vtanh.pop %v1437
  %v1439 = vmul.f32 %v1434, %v1438
  %1440 = vst.msk [vmem:[#allocation6 + $0x7] sm:$0x1] %vm395, %v1439
  %1441 = vst.msk [vmem:[#allocation6 + $0xe] sm:$0x2] %vm397, %v1439
  %v1442 = vld [vmem:[%s4] sm:$0xf]
  %v1443 = vld [vmem:[%s4 + $0x4] sm:$0xf]
  %v1444 = vld [vmem:[%s4 + $0x8] sm:$0xf]
  %v1445 = vld [vmem:[%s4 + $0xc] sm:$0xf]
  %v1450 = vunpack.c.l.b16 %v1442
  %v1451 = vunpack.c.l.b16 %v1443
  %v1452 = vunpack.c.l.b16 %v1444
  %v1453 = vunpack.c.l.b16 %v1445
  %v1454 = vpack.c.b16 %v1451, %v1450
  %v1455 = vpack.c.b16 %v1453, %v1452
  %1458 = vmatpush.bf16.msra.mxu0 0
  %1459 = vmatpush.bf16.msra.mxu0 0
  %1460 = vmatpush.bf16.msra.mxu0 0
  %1461 = vmatpush.bf16.msra.mxu0 0
  %1462 = vmatpush.bf16.msra.mxu0 0
  %1463 = vmatpush.bf16.msra.mxu0 0
  %1464 = vmatpush.bf16.msra.mxu0 %v1455
  %1465 = vmatpush.bf16.msra.mxu0 %v1454
  %1466 = vmatmul.bf16.gmra.mxu0 %v49
  %v1467 = vpop.f32.mrf.mxu0
  %v1468 = vadd.f32 0.0, %v1467
  %v1469 = vpop.f32.mrf.mxu0
  %v1470 = vadd.f32 0.0, %v1469
  %1471 = vdwg.mxu0
  %v1472 = vld [vmem:[#allocation6] sm:$0xff]
  %v1473 = vld [vmem:[#allocation6 + $0x8] sm:$0xff]
  %v1474 = vpack.c.bf16 %v1473, %v1472
  %v1475 = vld [vmem:[%s5] sm:$0xf]
  %v1476 = vld [vmem:[%s5 + $0x4] sm:$0xf]
  %v1477 = vld [vmem:[%s5 + $0x8] sm:$0xf]
  %v1478 = vld [vmem:[%s5 + $0xc] sm:$0xf]
  %v1483 = vunpack.c.l.b16 %v1475
  %v1484 = vunpack.c.l.b16 %v1476
  %v1485 = vunpack.c.l.b16 %v1477
  %v1486 = vunpack.c.l.b16 %v1478
  %v1487 = vpack.c.b16 %v1484, %v1483
  %v1488 = vpack.c.b16 %v1486, %v1485
  %v1492 = vsel %vm47, %v1474, 0
  %1494 = vmatpush.bf16.msra.mxu0 0
  %1495 = vmatpush.bf16.msra.mxu0 0
  %1496 = vmatpush.bf16.msra.mxu0 0
  %1497 = vmatpush.bf16.msra.mxu0 0
  %1498 = vmatpush.bf16.msra.mxu0 0
  %1499 = vmatpush.bf16.msra.mxu0 0
  %1500 = vmatpush.bf16.msra.mxu0 %v1488
  %1501 = vmatpush.bf16.msra.mxu0 %v1487
  %1502 = vmatmul.bf16.gmra.mxu0 %v1492
  %v1503 = vpop.f32.mrf.mxu0
  %v1504 = vadd.f32 0.0, %v1503
  %v1505 = vpop.f32.mrf.mxu0
  %v1506 = vadd.f32 0.0, %v1505
  %1507 = vdwg.mxu0
  %1510 = vrot.lane.b32.xlu0 %v1504, 1
  %v1511 = vpop.permute.xlu0 %1510
  %1512 = vrot.lane.b32.xlu0 %v1506, 1
  %v1513 = vpop.permute.xlu0 %1512
  %vm1516 = vcmask 7168
  %v1517 = vsel %vm1516, %v1468, %v1511
  %v1518 = vsel %vm1516, %v1470, %v1513
  %vm1519 = vcmask 15360
  %1520 = vst.msk [vmem:[%s6] sm:$0xff] %vm1519, %v1517
  %1521 = vst.msk [vmem:[%s6 + $0x8] sm:$0xff] %vm1519, %v1518
  // Predicated region
  $region26: #{qabert_forward.7} parent=0 // pred_check
    _
  $region27: #{qabert_forward.7} parent=0 // pred_check_branch
    %1523 = sbr.rel (0) target = $region29
  $region28: #{qabert_forward.7} parent=0 // pred_region
    _
  $region29: #{qabert_forward.7} parent=0 // pred_fallthru
    _
  // Predicated region
  $region30: #{qabert_forward.7} parent=0 // pred_check
    _
  $region31: #{qabert_forward.7} parent=0 // pred_check_branch
    %1525 = sbr.rel (0) target = $region33
  $region32: #{qabert_forward.7} parent=0 // pred_region
    _
  $region33: #{qabert_forward.7} parent=0 // pred_fallthru
    _

</llo_original>
